<compile_context>
chip_gen: v7x
topology: tpu7x:2x2x1
jax: 0.10.0
libtpu: 0.0.40
codegen_flags: <defaults>
</compile_context>

<pallas_src>
import functools

import jax
import jax.numpy as jnp
from jax.experimental import pallas as pl
from jax.experimental.pallas import tpu as pltpu

EPS = 1e-5  # GlobalLayerNorm eps


def _gln(c, gamma, beta, inv_n):
    # one-pass global layer norm over (time, channels) of one sample,
    # per-channel affine; matches torch gLN (biased variance).
    s = jnp.sum(c)
    ssq = jnp.sum(c * c)
    mean = s * inv_n
    var = ssq * inv_n - mean * mean
    scale = jax.lax.rsqrt(var + EPS)          # EUP
    return (c - mean) * (gamma * scale) + beta


def separation_kernel(x_ref, wa_ref, wb_ref, skip_ref, *, dilations, ksize):
    """One batch sample: runs all R*X Conv1DBlocks with x/skip resident on-chip."""
    L = x_ref.shape[1]
    Bc = x_ref.shape[2]
    H = wa_ref.shape[2]
    inv_n = 1.0 / float(L * H)

    x = x_ref[0]                                   # [L, Bc] residual path
    skip = jnp.zeros((L, Bc), jnp.float32)         # accumulated skip connection

    for blk, dilation in enumerate(dilations):     # static unroll (dilation is static)
        # ---- unpack packed per-block parameter slab A ----
        w1 = wa_ref[blk, 0:Bc, :]                  # [Bc, H]   1x1 bottleneck (B->H)
        r0 = Bc + ksize
        b1  = wa_ref[blk, r0 + 0:r0 + 1, :]        # [1, H]
        g1  = wa_ref[blk, r0 + 1:r0 + 2, :]
        be1 = wa_ref[blk, r0 + 2:r0 + 3, :]
        a1  = wa_ref[blk, r0 + 3:r0 + 4, :]        # PReLU alpha (broadcast row)
        bd  = wa_ref[blk, r0 + 4:r0 + 5, :]
        g2  = wa_ref[blk, r0 + 5:r0 + 6, :]
        be2 = wa_ref[blk, r0 + 6:r0 + 7, :]
        a2  = wa_ref[blk, r0 + 7:r0 + 8, :]
        # slab B: skip + residual 1x1 convs concatenated along output channels
        w_so = wb_ref[blk, 0:H, :]                 # [H, 2*Bc]
        b_so = wb_ref[blk, H:H + 1, :]             # [1, 2*Bc]

        # ---- 1x1 bottleneck conv (B -> H) -> PReLU -> gLN ----
        c = jnp.dot(x, w1, preferred_element_type=jnp.float32) + b1
        c = jnp.where(c > 0, c, a1 * c)
        c = _gln(c, g1, be1, inv_n)

        # ---- dilated depthwise conv, 'same' (non-causal) padding ----
        pad = dilation * (ksize - 1) // 2
        acc = jnp.zeros((L, H), jnp.float32)
        for k in range(ksize):                     # static taps
            wk = wa_ref[blk, Bc + k:Bc + k + 1, :]  # [1, H]
            off = k * dilation - pad
            if off == 0:
                tap = c
            elif off > 0:
                tap = jnp.concatenate(
                    [c[off:, :], jnp.zeros((off, H), jnp.float32)], axis=0)
            else:
                tap = jnp.concatenate(
                    [jnp.zeros((-off, H), jnp.float32), c[:L + off, :]], axis=0)
            acc = acc + tap * wk
        c = acc + bd
        c = jnp.where(c > 0, c, a2 * c)
        c = _gln(c, g2, be2, inv_n)

        # ---- fused skip + residual 1x1 convs (H -> 2*B): one matmul, split columns ----
        so = jnp.dot(c, w_so, preferred_element_type=jnp.float32) + b_so
        skip = skip + so[:, :Bc]                   # skip_connection += skip
        x = x + so[:, Bc:]                         # residual: x = x + out

    skip_ref[0] = skip


def separation_forward(x, wa, wb, dilations, ksize):
    """Separation.forward with skip_con=True: returns the summed skip connections."""
    batch, L, Bc = x.shape
    nblk, rows_a, H = wa.shape
    kernel = functools.partial(separation_kernel,
                               dilations=tuple(dilations), ksize=ksize)
    return pl.pallas_call(
        kernel,
        grid=(batch,),
        in_specs=[
            pl.BlockSpec((1, L, Bc), lambda b: (b, 0, 0)),            # x (one sample)
            pl.BlockSpec((nblk, rows_a, H), lambda b: (0, 0, 0)),     # packed slab A
            pl.BlockSpec((nblk, H + 1, 2 * Bc), lambda b: (0, 0, 0)), # packed slab B
        ],
        out_specs=pl.BlockSpec((1, L, Bc), lambda b: (b, 0, 0)),
        out_shape=jax.ShapeDtypeStruct((batch, L, Bc), jnp.float32),
        compiler_params=pltpu.CompilerParams(
            dimension_semantics=("parallel",)),
    )(x, wa, wb)
    # TODO(synk): at real Conv-TasNet sizes (H=512, L in the thousands) tile the time axis and
    # use a two-pass gLN to respect v7x's 64 MiB VMEM; at these toy sizes everything fits.


# ---------------- parameter init / packing ----------------
def init_block_params(key, Bc, H, P):
    ks = jax.random.split(key, 8)
    s = 0.1
    return dict(
        w1=jax.random.normal(ks[0], (Bc, H), jnp.float32) * s,    # conv1x1 (B->H)
        b1=jax.random.normal(ks[1], (1, H), jnp.float32) * s,
        g1=jnp.ones((1, H), jnp.float32),                         # gLN_1 gamma
        be1=jnp.zeros((1, H), jnp.float32),                       # gLN_1 beta
        a1=jnp.full((1, H), 0.25, jnp.float32),                   # PReLU_1 alpha (default init)
        wd=jax.random.normal(ks[2], (P, H), jnp.float32) * s,     # depthwise conv
        bd=jax.random.normal(ks[3], (1, H), jnp.float32) * s,
        g2=jnp.ones((1, H), jnp.float32),
        be2=jnp.zeros((1, H), jnp.float32),
        a2=jnp.full((1, H), 0.25, jnp.float32),                   # PReLU_2 alpha
        wsc=jax.random.normal(ks[4], (H, Bc), jnp.float32) * s,   # Sc_conv (H->B)
        bsc=jax.random.normal(ks[5], (1, Bc), jnp.float32) * s,
        wout=jax.random.normal(ks[6], (H, Bc), jnp.float32) * s,  # Output (H->B)
        bout=jax.random.normal(ks[7], (1, Bc), jnp.float32) * s,
    )


def pack_params(params_list):
    """Pack per-block params into two contiguous slabs (one DMA each)."""
    slab_a, slab_b = [], []
    for p in params_list:
        a = jnp.concatenate([
            p["w1"], p["wd"],
            p["b1"], p["g1"], p["be1"], p["a1"],
            p["bd"], p["g2"], p["be2"], p["a2"],
        ], axis=0)                                   # [Bc + P + 8, H]
        b = jnp.concatenate([
            jnp.concatenate([p["wsc"], p["wout"]], axis=1),   # [H, 2*Bc]
            jnp.concatenate([p["bsc"], p["bout"]], axis=1),   # [1, 2*Bc]
        ], axis=0)                                   # [H + 1, 2*Bc]
        slab_a.append(a)
        slab_b.append(b)
    return jnp.stack(slab_a), jnp.stack(slab_b)


# ---------------- pure-JAX reference (same channels-last layout) ----------------
def _block_ref(x, skip, p, dilation, ksize):
    c = jnp.einsum('blc,ch->blh', x, p["w1"]) + p["b1"][None]
    c = jnp.where(c > 0, c, p["a1"][None] * c)
    mean = jnp.mean(c, axis=(1, 2), keepdims=True)
    var = jnp.mean((c - mean) ** 2, axis=(1, 2), keepdims=True)
    c = p["g1"][None] * (c - mean) / jnp.sqrt(var + EPS) + p["be1"][None]

    pad = dilation * (ksize - 1) // 2
    cp = jnp.pad(c, ((0, 0), (pad, pad), (0, 0)))
    L = x.shape[1]
    acc = sum(cp[:, k * dilation:k * dilation + L, :] * p["wd"][k][None, None, :]
              for k in range(ksize))
    c = acc + p["bd"][None]
    c = jnp.where(c > 0, c, p["a2"][None] * c)
    mean = jnp.mean(c, axis=(1, 2), keepdims=True)
    var = jnp.mean((c - mean) ** 2, axis=(1, 2), keepdims=True)
    c = p["g2"][None] * (c - mean) / jnp.sqrt(var + EPS) + p["be2"][None]

    sc = jnp.einsum('blh,hc->blc', c, p["wsc"]) + p["bsc"][None]
    out = jnp.einsum('blh,hc->blc', c, p["wout"]) + p["bout"][None]
    return skip + sc, x + out


def separation_ref(x, params_list, dilations, ksize):
    skip = jnp.zeros_like(x)
    for p, d in zip(params_list, dilations):
        skip, x = _block_ref(x, skip, p, d, ksize)
    return skip


if __name__ == "__main__":
    # Separation(R=2, X=3, B=16, H=32, P=3, norm='gLN', causal=False, skip_con=True)
    R, X, B_ch, H, P = 2, 3, 16, 32, 3
    batch, L = 2, 64

    key = jax.random.PRNGKey(0)
    kx, kp = jax.random.split(key)
    x = jax.random.normal(kx, (batch, L, B_ch), jnp.float32)   # channels-last [B, L, N]

    dilations = [2 ** xx for _ in range(R) for xx in range(X)]
    pkeys = jax.random.split(kp, len(dilations))
    params_list = [init_block_params(k, B_ch, H, P) for k in pkeys]
    wa, wb = pack_params(params_list)

    fwd = jax.jit(functools.partial(separation_forward,
                                    dilations=tuple(dilations), ksize=P))
    out = jax.block_until_ready(fwd(x, wa, wb))

    ref = separation_ref(x, params_list, dilations, P)
    assert out.shape == (batch, L, B_ch)
    assert jnp.allclose(out, ref, atol=1e-2, rtol=1e-2), "mismatch vs JAX reference"

    print("KERNEL_OK")
</pallas_src>

<mosaic_0001>
module attributes {stable_mosaic.version = 11 : i64} {
  func.func @separation_kernel(%arg0: i32, %arg1: memref<1x64x16xf32, #tpu.memory_space<vmem>>, %arg2: memref<6x27x32xf32, #tpu.memory_space<vmem>>, %arg3: memref<6x33x32xf32, #tpu.memory_space<vmem>>, %arg4: memref<1x64x16xf32, #tpu.memory_space<vmem>>) attributes {dimension_semantics = [#tpu.dimension_semantics<parallel>], iteration_bounds = array<i64: 2>, scalar_prefetch = 0 : i64, scratch_operands = 0 : i64, tpu.core_type = #tpu.core_type<tc>, window_params = [{transform_indices = @transform_0, window_bounds = array<i64: 1, 64, 16>}, {pipeline_mode = #tpu.pipeline_mode<synchronous>, transform_indices = @transform_1, window_bounds = array<i64: 6, 27, 32>}, {pipeline_mode = #tpu.pipeline_mode<synchronous>, transform_indices = @transform_2, window_bounds = array<i64: 6, 33, 32>}, {transform_indices = @transform_3, window_bounds = array<i64: 1, 64, 16>}]} {
    %c0 = arith.constant 0 : index
    %c0_0 = arith.constant 0 : index
    %c0_1 = arith.constant 0 : index
    %0 = vector.load %arg1[%c0, %c0_0, %c0_1] : memref<1x64x16xf32, #tpu.memory_space<vmem>>, vector<1x64x16xf32>
    %1 = vector.shape_cast %0 : vector<1x64x16xf32> to vector<64x16xf32>
    %cst = arith.constant 0.000000e+00 : f32
    %2 = vector.broadcast %cst : f32 to vector<64x16xf32>
    %c0_2 = arith.constant 0 : index
    %c0_3 = arith.constant 0 : index
    %c0_4 = arith.constant 0 : index
    %3 = vector.load %arg2[%c0_2, %c0_3, %c0_4] : memref<6x27x32xf32, #tpu.memory_space<vmem>>, vector<1x16x32xf32>
    %4 = vector.shape_cast %3 : vector<1x16x32xf32> to vector<16x32xf32>
    %c0_5 = arith.constant 0 : index
    %c19 = arith.constant 19 : index
    %c0_6 = arith.constant 0 : index
    %5 = vector.load %arg2[%c0_5, %c19, %c0_6] : memref<6x27x32xf32, #tpu.memory_space<vmem>>, vector<1x1x32xf32>
    %6 = vector.shape_cast %5 : vector<1x1x32xf32> to vector<1x32xf32>
    %c0_7 = arith.constant 0 : index
    %c20 = arith.constant 20 : index
    %c0_8 = arith.constant 0 : index
    %7 = vector.load %arg2[%c0_7, %c20, %c0_8] : memref<6x27x32xf32, #tpu.memory_space<vmem>>, vector<1x1x32xf32>
    %8 = vector.shape_cast %7 : vector<1x1x32xf32> to vector<1x32xf32>
    %c0_9 = arith.constant 0 : index
    %c21 = arith.constant 21 : index
    %c0_10 = arith.constant 0 : index
    %9 = vector.load %arg2[%c0_9, %c21, %c0_10] : memref<6x27x32xf32, #tpu.memory_space<vmem>>, vector<1x1x32xf32>
    %10 = vector.shape_cast %9 : vector<1x1x32xf32> to vector<1x32xf32>
    %c0_11 = arith.constant 0 : index
    %c22 = arith.constant 22 : index
    %c0_12 = arith.constant 0 : index
    %11 = vector.load %arg2[%c0_11, %c22, %c0_12] : memref<6x27x32xf32, #tpu.memory_space<vmem>>, vector<1x1x32xf32>
    %12 = vector.shape_cast %11 : vector<1x1x32xf32> to vector<1x32xf32>
    %c0_13 = arith.constant 0 : index
    %c23 = arith.constant 23 : index
    %c0_14 = arith.constant 0 : index
    %13 = vector.load %arg2[%c0_13, %c23, %c0_14] : memref<6x27x32xf32, #tpu.memory_space<vmem>>, vector<1x1x32xf32>
    %14 = vector.shape_cast %13 : vector<1x1x32xf32> to vector<1x32xf32>
    %c0_15 = arith.constant 0 : index
    %c24 = arith.constant 24 : index
    %c0_16 = arith.constant 0 : index
    %15 = vector.load %arg2[%c0_15, %c24, %c0_16] : memref<6x27x32xf32, #tpu.memory_space<vmem>>, vector<1x1x32xf32>
    %16 = vector.shape_cast %15 : vector<1x1x32xf32> to vector<1x32xf32>
    %c0_17 = arith.constant 0 : index
    %c25 = arith.constant 25 : index
    %c0_18 = arith.constant 0 : index
    %17 = vector.load %arg2[%c0_17, %c25, %c0_18] : memref<6x27x32xf32, #tpu.memory_space<vmem>>, vector<1x1x32xf32>
    %18 = vector.shape_cast %17 : vector<1x1x32xf32> to vector<1x32xf32>
    %c0_19 = arith.constant 0 : index
    %c26 = arith.constant 26 : index
    %c0_20 = arith.constant 0 : index
    %19 = vector.load %arg2[%c0_19, %c26, %c0_20] : memref<6x27x32xf32, #tpu.memory_space<vmem>>, vector<1x1x32xf32>
    %20 = vector.shape_cast %19 : vector<1x1x32xf32> to vector<1x32xf32>
    %c0_21 = arith.constant 0 : index
    %c0_22 = arith.constant 0 : index
    %c0_23 = arith.constant 0 : index
    %21 = vector.load %arg3[%c0_21, %c0_22, %c0_23] : memref<6x33x32xf32, #tpu.memory_space<vmem>>, vector<1x32x32xf32>
    %22 = vector.shape_cast %21 : vector<1x32x32xf32> to vector<32x32xf32>
    %c0_24 = arith.constant 0 : index
    %c32 = arith.constant 32 : index
    %c0_25 = arith.constant 0 : index
    %23 = vector.load %arg3[%c0_24, %c32, %c0_25] : memref<6x33x32xf32, #tpu.memory_space<vmem>>, vector<1x1x32xf32>
    %24 = vector.shape_cast %23 : vector<1x1x32xf32> to vector<1x32xf32>
    %cst_26 = arith.constant dense<0.000000e+00> : vector<64x32xf32>
    %25 = tpu.matmul %1, %4, %cst_26 {dimension_numbers = #tpu.dot_dimension_numbers<[1], [0], [0], [1], [0, 0, 1, 1], [], []>} : vector<64x16xf32>, vector<16x32xf32>, vector<64x32xf32> -> vector<64x32xf32>
    %26 = vector.broadcast %6 : vector<1x32xf32> to vector<64x32xf32>
    %27 = arith.addf %25, %26 : vector<64x32xf32>
    %cst_27 = arith.constant 0.000000e+00 : f32
    %28 = vector.broadcast %cst_27 : f32 to vector<64x32xf32>
    %29 = arith.cmpf ogt, %27, %28 : vector<64x32xf32>
    %30 = vector.broadcast %12 : vector<1x32xf32> to vector<64x32xf32>
    %31 = arith.mulf %30, %27 : vector<64x32xf32>
    %32 = arith.select %29, %27, %31 : vector<64x32xi1>, vector<64x32xf32>
    %33 = vector.shape_cast %32 : vector<64x32xf32> to vector<1x64x32xf32>
    %cst_28 = arith.constant dense<0.000000e+00> : vector<1xf32>
    %34 = vector.multi_reduction <add>, %33, %cst_28 [1, 2] : vector<1x64x32xf32> to vector<1xf32>
    %35 = vector.shape_cast %34 : vector<1xf32> to vector<1x1x1xf32>
    %36 = vector.extract %35[0, 0, 0] : f32 from vector<1x1x1xf32>
    %37 = arith.mulf %32, %32 : vector<64x32xf32>
    %38 = vector.shape_cast %37 : vector<64x32xf32> to vector<1x64x32xf32>
    %cst_29 = arith.constant dense<0.000000e+00> : vector<1xf32>
    %39 = vector.multi_reduction <add>, %38, %cst_29 [1, 2] : vector<1x64x32xf32> to vector<1xf32>
    %40 = vector.shape_cast %39 : vector<1xf32> to vector<1x1x1xf32>
    %41 = vector.extract %40[0, 0, 0] : f32 from vector<1x1x1xf32>
    %cst_30 = arith.constant 4.8828125E-4 : f32
    %42 = arith.mulf %36, %cst_30 : f32
    %cst_31 = arith.constant 4.8828125E-4 : f32
    %43 = arith.mulf %41, %cst_31 : f32
    %44 = arith.mulf %42, %42 : f32
    %45 = arith.subf %43, %44 : f32
    %cst_32 = arith.constant 9.99999974E-6 : f32
    %46 = arith.addf %45, %cst_32 : f32
    %47 = math.rsqrt %46 : f32
    %48 = vector.broadcast %42 : f32 to vector<64x32xf32>
    %49 = arith.subf %32, %48 : vector<64x32xf32>
    %50 = vector.broadcast %47 : f32 to vector<1x32xf32>
    %51 = arith.mulf %8, %50 : vector<1x32xf32>
    %52 = vector.broadcast %51 : vector<1x32xf32> to vector<64x32xf32>
    %53 = arith.mulf %49, %52 : vector<64x32xf32>
    %54 = vector.broadcast %10 : vector<1x32xf32> to vector<64x32xf32>
    %55 = arith.addf %53, %54 : vector<64x32xf32>
    %cst_33 = arith.constant 0.000000e+00 : f32
    %56 = vector.broadcast %cst_33 : f32 to vector<64x32xf32>
    %c0_34 = arith.constant 0 : index
    %c16 = arith.constant 16 : index
    %c0_35 = arith.constant 0 : index
    %57 = vector.load %arg2[%c0_34, %c16, %c0_35] : memref<6x27x32xf32, #tpu.memory_space<vmem>>, vector<1x1x32xf32>
    %58 = vector.shape_cast %57 : vector<1x1x32xf32> to vector<1x32xf32>
    %cst_36 = arith.constant 0.000000e+00 : f32
    %59 = vector.broadcast %cst_36 : f32 to vector<1x32xf32>
    %60 = vector.extract_strided_slice %55 {offsets = [0, 0], sizes = [63, 32], strides = [1, 1]} : vector<64x32xf32> to vector<63x32xf32>
    %61 = tpu.concatenate %59, %60 in 0 : vector<1x32xf32>, vector<63x32xf32> -> vector<64x32xf32>
    %62 = vector.broadcast %58 : vector<1x32xf32> to vector<64x32xf32>
    %63 = arith.mulf %61, %62 : vector<64x32xf32>
    %64 = arith.addf %56, %63 : vector<64x32xf32>
    %c0_37 = arith.constant 0 : index
    %c17 = arith.constant 17 : index
    %c0_38 = arith.constant 0 : index
    %65 = vector.load %arg2[%c0_37, %c17, %c0_38] : memref<6x27x32xf32, #tpu.memory_space<vmem>>, vector<1x1x32xf32>
    %66 = vector.shape_cast %65 : vector<1x1x32xf32> to vector<1x32xf32>
    %67 = vector.broadcast %66 : vector<1x32xf32> to vector<64x32xf32>
    %68 = arith.mulf %55, %67 : vector<64x32xf32>
    %69 = arith.addf %64, %68 : vector<64x32xf32>
    %c0_39 = arith.constant 0 : index
    %c18 = arith.constant 18 : index
    %c0_40 = arith.constant 0 : index
    %70 = vector.load %arg2[%c0_39, %c18, %c0_40] : memref<6x27x32xf32, #tpu.memory_space<vmem>>, vector<1x1x32xf32>
    %71 = vector.shape_cast %70 : vector<1x1x32xf32> to vector<1x32xf32>
    %72 = vector.extract_strided_slice %55 {offsets = [1, 0], sizes = [63, 32], strides = [1, 1]} : vector<64x32xf32> to vector<63x32xf32>
    %cst_41 = arith.constant 0.000000e+00 : f32
    %73 = vector.broadcast %cst_41 : f32 to vector<1x32xf32>
    %74 = tpu.concatenate %72, %73 in 0 : vector<63x32xf32>, vector<1x32xf32> -> vector<64x32xf32>
    %75 = vector.broadcast %71 : vector<1x32xf32> to vector<64x32xf32>
    %76 = arith.mulf %74, %75 : vector<64x32xf32>
    %77 = arith.addf %69, %76 : vector<64x32xf32>
    %78 = vector.broadcast %14 : vector<1x32xf32> to vector<64x32xf32>
    %79 = arith.addf %77, %78 : vector<64x32xf32>
    %cst_42 = arith.constant 0.000000e+00 : f32
    %80 = vector.broadcast %cst_42 : f32 to vector<64x32xf32>
    %81 = arith.cmpf ogt, %79, %80 : vector<64x32xf32>
    %82 = vector.broadcast %20 : vector<1x32xf32> to vector<64x32xf32>
    %83 = arith.mulf %82, %79 : vector<64x32xf32>
    %84 = arith.select %81, %79, %83 : vector<64x32xi1>, vector<64x32xf32>
    %85 = vector.shape_cast %84 : vector<64x32xf32> to vector<1x64x32xf32>
    %cst_43 = arith.constant dense<0.000000e+00> : vector<1xf32>
    %86 = vector.multi_reduction <add>, %85, %cst_43 [1, 2] : vector<1x64x32xf32> to vector<1xf32>
    %87 = vector.shape_cast %86 : vector<1xf32> to vector<1x1x1xf32>
    %88 = vector.extract %87[0, 0, 0] : f32 from vector<1x1x1xf32>
    %89 = arith.mulf %84, %84 : vector<64x32xf32>
    %90 = vector.shape_cast %89 : vector<64x32xf32> to vector<1x64x32xf32>
    %cst_44 = arith.constant dense<0.000000e+00> : vector<1xf32>
    %91 = vector.multi_reduction <add>, %90, %cst_44 [1, 2] : vector<1x64x32xf32> to vector<1xf32>
    %92 = vector.shape_cast %91 : vector<1xf32> to vector<1x1x1xf32>
    %93 = vector.extract %92[0, 0, 0] : f32 from vector<1x1x1xf32>
    %cst_45 = arith.constant 4.8828125E-4 : f32
    %94 = arith.mulf %88, %cst_45 : f32
    %cst_46 = arith.constant 4.8828125E-4 : f32
    %95 = arith.mulf %93, %cst_46 : f32
    %96 = arith.mulf %94, %94 : f32
    %97 = arith.subf %95, %96 : f32
    %cst_47 = arith.constant 9.99999974E-6 : f32
    %98 = arith.addf %97, %cst_47 : f32
    %99 = math.rsqrt %98 : f32
    %100 = vector.broadcast %94 : f32 to vector<64x32xf32>
    %101 = arith.subf %84, %100 : vector<64x32xf32>
    %102 = vector.broadcast %99 : f32 to vector<1x32xf32>
    %103 = arith.mulf %16, %102 : vector<1x32xf32>
    %104 = vector.broadcast %103 : vector<1x32xf32> to vector<64x32xf32>
    %105 = arith.mulf %101, %104 : vector<64x32xf32>
    %106 = vector.broadcast %18 : vector<1x32xf32> to vector<64x32xf32>
    %107 = arith.addf %105, %106 : vector<64x32xf32>
    %cst_48 = arith.constant dense<0.000000e+00> : vector<64x32xf32>
    %108 = tpu.matmul %107, %22, %cst_48 {dimension_numbers = #tpu.dot_dimension_numbers<[1], [0], [0], [1], [0, 0, 1, 1], [], []>} : vector<64x32xf32>, vector<32x32xf32>, vector<64x32xf32> -> vector<64x32xf32>
    %109 = vector.broadcast %24 : vector<1x32xf32> to vector<64x32xf32>
    %110 = arith.addf %108, %109 : vector<64x32xf32>
    %111 = vector.extract_strided_slice %110 {offsets = [0, 0], sizes = [64, 16], strides = [1, 1]} : vector<64x32xf32> to vector<64x16xf32>
    %112 = arith.addf %2, %111 : vector<64x16xf32>
    %113 = vector.extract_strided_slice %110 {offsets = [0, 16], sizes = [64, 16], strides = [1, 1]} : vector<64x32xf32> to vector<64x16xf32>
    %114 = arith.addf %1, %113 : vector<64x16xf32>
    %c1 = arith.constant 1 : index
    %c0_49 = arith.constant 0 : index
    %c0_50 = arith.constant 0 : index
    %115 = vector.load %arg2[%c1, %c0_49, %c0_50] : memref<6x27x32xf32, #tpu.memory_space<vmem>>, vector<1x16x32xf32>
    %116 = vector.shape_cast %115 : vector<1x16x32xf32> to vector<16x32xf32>
    %c1_51 = arith.constant 1 : index
    %c19_52 = arith.constant 19 : index
    %c0_53 = arith.constant 0 : index
    %117 = vector.load %arg2[%c1_51, %c19_52, %c0_53] : memref<6x27x32xf32, #tpu.memory_space<vmem>>, vector<1x1x32xf32>
    %118 = vector.shape_cast %117 : vector<1x1x32xf32> to vector<1x32xf32>
    %c1_54 = arith.constant 1 : index
    %c20_55 = arith.constant 20 : index
    %c0_56 = arith.constant 0 : index
    %119 = vector.load %arg2[%c1_54, %c20_55, %c0_56] : memref<6x27x32xf32, #tpu.memory_space<vmem>>, vector<1x1x32xf32>
    %120 = vector.shape_cast %119 : vector<1x1x32xf32> to vector<1x32xf32>
    %c1_57 = arith.constant 1 : index
    %c21_58 = arith.constant 21 : index
    %c0_59 = arith.constant 0 : index
    %121 = vector.load %arg2[%c1_57, %c21_58, %c0_59] : memref<6x27x32xf32, #tpu.memory_space<vmem>>, vector<1x1x32xf32>
    %122 = vector.shape_cast %121 : vector<1x1x32xf32> to vector<1x32xf32>
    %c1_60 = arith.constant 1 : index
    %c22_61 = arith.constant 22 : index
    %c0_62 = arith.constant 0 : index
    %123 = vector.load %arg2[%c1_60, %c22_61, %c0_62] : memref<6x27x32xf32, #tpu.memory_space<vmem>>, vector<1x1x32xf32>
    %124 = vector.shape_cast %123 : vector<1x1x32xf32> to vector<1x32xf32>
    %c1_63 = arith.constant 1 : index
    %c23_64 = arith.constant 23 : index
    %c0_65 = arith.constant 0 : index
    %125 = vector.load %arg2[%c1_63, %c23_64, %c0_65] : memref<6x27x32xf32, #tpu.memory_space<vmem>>, vector<1x1x32xf32>
    %126 = vector.shape_cast %125 : vector<1x1x32xf32> to vector<1x32xf32>
    %c1_66 = arith.constant 1 : index
    %c24_67 = arith.constant 24 : index
    %c0_68 = arith.constant 0 : index
    %127 = vector.load %arg2[%c1_66, %c24_67, %c0_68] : memref<6x27x32xf32, #tpu.memory_space<vmem>>, vector<1x1x32xf32>
    %128 = vector.shape_cast %127 : vector<1x1x32xf32> to vector<1x32xf32>
    %c1_69 = arith.constant 1 : index
    %c25_70 = arith.constant 25 : index
    %c0_71 = arith.constant 0 : index
    %129 = vector.load %arg2[%c1_69, %c25_70, %c0_71] : memref<6x27x32xf32, #tpu.memory_space<vmem>>, vector<1x1x32xf32>
    %130 = vector.shape_cast %129 : vector<1x1x32xf32> to vector<1x32xf32>
    %c1_72 = arith.constant 1 : index
    %c26_73 = arith.constant 26 : index
    %c0_74 = arith.constant 0 : index
    %131 = vector.load %arg2[%c1_72, %c26_73, %c0_74] : memref<6x27x32xf32, #tpu.memory_space<vmem>>, vector<1x1x32xf32>
    %132 = vector.shape_cast %131 : vector<1x1x32xf32> to vector<1x32xf32>
    %c1_75 = arith.constant 1 : index
    %c0_76 = arith.constant 0 : index
    %c0_77 = arith.constant 0 : index
    %133 = vector.load %arg3[%c1_75, %c0_76, %c0_77] : memref<6x33x32xf32, #tpu.memory_space<vmem>>, vector<1x32x32xf32>
    %134 = vector.shape_cast %133 : vector<1x32x32xf32> to vector<32x32xf32>
    %c1_78 = arith.constant 1 : index
    %c32_79 = arith.constant 32 : index
    %c0_80 = arith.constant 0 : index
    %135 = vector.load %arg3[%c1_78, %c32_79, %c0_80] : memref<6x33x32xf32, #tpu.memory_space<vmem>>, vector<1x1x32xf32>
    %136 = vector.shape_cast %135 : vector<1x1x32xf32> to vector<1x32xf32>
    %cst_81 = arith.constant dense<0.000000e+00> : vector<64x32xf32>
    %137 = tpu.matmul %114, %116, %cst_81 {dimension_numbers = #tpu.dot_dimension_numbers<[1], [0], [0], [1], [0, 0, 1, 1], [], []>} : vector<64x16xf32>, vector<16x32xf32>, vector<64x32xf32> -> vector<64x32xf32>
    %138 = vector.broadcast %118 : vector<1x32xf32> to vector<64x32xf32>
    %139 = arith.addf %137, %138 : vector<64x32xf32>
    %cst_82 = arith.constant 0.000000e+00 : f32
    %140 = vector.broadcast %cst_82 : f32 to vector<64x32xf32>
    %141 = arith.cmpf ogt, %139, %140 : vector<64x32xf32>
    %142 = vector.broadcast %124 : vector<1x32xf32> to vector<64x32xf32>
    %143 = arith.mulf %142, %139 : vector<64x32xf32>
    %144 = arith.select %141, %139, %143 : vector<64x32xi1>, vector<64x32xf32>
    %145 = vector.shape_cast %144 : vector<64x32xf32> to vector<1x64x32xf32>
    %cst_83 = arith.constant dense<0.000000e+00> : vector<1xf32>
    %146 = vector.multi_reduction <add>, %145, %cst_83 [1, 2] : vector<1x64x32xf32> to vector<1xf32>
    %147 = vector.shape_cast %146 : vector<1xf32> to vector<1x1x1xf32>
    %148 = vector.extract %147[0, 0, 0] : f32 from vector<1x1x1xf32>
    %149 = arith.mulf %144, %144 : vector<64x32xf32>
    %150 = vector.shape_cast %149 : vector<64x32xf32> to vector<1x64x32xf32>
    %cst_84 = arith.constant dense<0.000000e+00> : vector<1xf32>
    %151 = vector.multi_reduction <add>, %150, %cst_84 [1, 2] : vector<1x64x32xf32> to vector<1xf32>
    %152 = vector.shape_cast %151 : vector<1xf32> to vector<1x1x1xf32>
    %153 = vector.extract %152[0, 0, 0] : f32 from vector<1x1x1xf32>
    %cst_85 = arith.constant 4.8828125E-4 : f32
    %154 = arith.mulf %148, %cst_85 : f32
    %cst_86 = arith.constant 4.8828125E-4 : f32
    %155 = arith.mulf %153, %cst_86 : f32
    %156 = arith.mulf %154, %154 : f32
    %157 = arith.subf %155, %156 : f32
    %cst_87 = arith.constant 9.99999974E-6 : f32
    %158 = arith.addf %157, %cst_87 : f32
    %159 = math.rsqrt %158 : f32
    %160 = vector.broadcast %154 : f32 to vector<64x32xf32>
    %161 = arith.subf %144, %160 : vector<64x32xf32>
    %162 = vector.broadcast %159 : f32 to vector<1x32xf32>
    %163 = arith.mulf %120, %162 : vector<1x32xf32>
    %164 = vector.broadcast %163 : vector<1x32xf32> to vector<64x32xf32>
    %165 = arith.mulf %161, %164 : vector<64x32xf32>
    %166 = vector.broadcast %122 : vector<1x32xf32> to vector<64x32xf32>
    %167 = arith.addf %165, %166 : vector<64x32xf32>
    %cst_88 = arith.constant 0.000000e+00 : f32
    %168 = vector.broadcast %cst_88 : f32 to vector<64x32xf32>
    %c1_89 = arith.constant 1 : index
    %c16_90 = arith.constant 16 : index
    %c0_91 = arith.constant 0 : index
    %169 = vector.load %arg2[%c1_89, %c16_90, %c0_91] : memref<6x27x32xf32, #tpu.memory_space<vmem>>, vector<1x1x32xf32>
    %170 = vector.shape_cast %169 : vector<1x1x32xf32> to vector<1x32xf32>
    %cst_92 = arith.constant 0.000000e+00 : f32
    %171 = vector.broadcast %cst_92 : f32 to vector<2x32xf32>
    %172 = vector.extract_strided_slice %167 {offsets = [0, 0], sizes = [62, 32], strides = [1, 1]} : vector<64x32xf32> to vector<62x32xf32>
    %173 = tpu.concatenate %171, %172 in 0 : vector<2x32xf32>, vector<62x32xf32> -> vector<64x32xf32>
    %174 = vector.broadcast %170 : vector<1x32xf32> to vector<64x32xf32>
    %175 = arith.mulf %173, %174 : vector<64x32xf32>
    %176 = arith.addf %168, %175 : vector<64x32xf32>
    %c1_93 = arith.constant 1 : index
    %c17_94 = arith.constant 17 : index
    %c0_95 = arith.constant 0 : index
    %177 = vector.load %arg2[%c1_93, %c17_94, %c0_95] : memref<6x27x32xf32, #tpu.memory_space<vmem>>, vector<1x1x32xf32>
    %178 = vector.shape_cast %177 : vector<1x1x32xf32> to vector<1x32xf32>
    %179 = vector.broadcast %178 : vector<1x32xf32> to vector<64x32xf32>
    %180 = arith.mulf %167, %179 : vector<64x32xf32>
    %181 = arith.addf %176, %180 : vector<64x32xf32>
    %c1_96 = arith.constant 1 : index
    %c18_97 = arith.constant 18 : index
    %c0_98 = arith.constant 0 : index
    %182 = vector.load %arg2[%c1_96, %c18_97, %c0_98] : memref<6x27x32xf32, #tpu.memory_space<vmem>>, vector<1x1x32xf32>
    %183 = vector.shape_cast %182 : vector<1x1x32xf32> to vector<1x32xf32>
    %184 = vector.extract_strided_slice %167 {offsets = [2, 0], sizes = [62, 32], strides = [1, 1]} : vector<64x32xf32> to vector<62x32xf32>
    %cst_99 = arith.constant 0.000000e+00 : f32
    %185 = vector.broadcast %cst_99 : f32 to vector<2x32xf32>
    %186 = tpu.concatenate %184, %185 in 0 : vector<62x32xf32>, vector<2x32xf32> -> vector<64x32xf32>
    %187 = vector.broadcast %183 : vector<1x32xf32> to vector<64x32xf32>
    %188 = arith.mulf %186, %187 : vector<64x32xf32>
    %189 = arith.addf %181, %188 : vector<64x32xf32>
    %190 = vector.broadcast %126 : vector<1x32xf32> to vector<64x32xf32>
    %191 = arith.addf %189, %190 : vector<64x32xf32>
    %cst_100 = arith.constant 0.000000e+00 : f32
    %192 = vector.broadcast %cst_100 : f32 to vector<64x32xf32>
    %193 = arith.cmpf ogt, %191, %192 : vector<64x32xf32>
    %194 = vector.broadcast %132 : vector<1x32xf32> to vector<64x32xf32>
    %195 = arith.mulf %194, %191 : vector<64x32xf32>
    %196 = arith.select %193, %191, %195 : vector<64x32xi1>, vector<64x32xf32>
    %197 = vector.shape_cast %196 : vector<64x32xf32> to vector<1x64x32xf32>
    %cst_101 = arith.constant dense<0.000000e+00> : vector<1xf32>
    %198 = vector.multi_reduction <add>, %197, %cst_101 [1, 2] : vector<1x64x32xf32> to vector<1xf32>
    %199 = vector.shape_cast %198 : vector<1xf32> to vector<1x1x1xf32>
    %200 = vector.extract %199[0, 0, 0] : f32 from vector<1x1x1xf32>
    %201 = arith.mulf %196, %196 : vector<64x32xf32>
    %202 = vector.shape_cast %201 : vector<64x32xf32> to vector<1x64x32xf32>
    %cst_102 = arith.constant dense<0.000000e+00> : vector<1xf32>
    %203 = vector.multi_reduction <add>, %202, %cst_102 [1, 2] : vector<1x64x32xf32> to vector<1xf32>
    %204 = vector.shape_cast %203 : vector<1xf32> to vector<1x1x1xf32>
    %205 = vector.extract %204[0, 0, 0] : f32 from vector<1x1x1xf32>
    %cst_103 = arith.constant 4.8828125E-4 : f32
    %206 = arith.mulf %200, %cst_103 : f32
    %cst_104 = arith.constant 4.8828125E-4 : f32
    %207 = arith.mulf %205, %cst_104 : f32
    %208 = arith.mulf %206, %206 : f32
    %209 = arith.subf %207, %208 : f32
    %cst_105 = arith.constant 9.99999974E-6 : f32
    %210 = arith.addf %209, %cst_105 : f32
    %211 = math.rsqrt %210 : f32
    %212 = vector.broadcast %206 : f32 to vector<64x32xf32>
    %213 = arith.subf %196, %212 : vector<64x32xf32>
    %214 = vector.broadcast %211 : f32 to vector<1x32xf32>
    %215 = arith.mulf %128, %214 : vector<1x32xf32>
    %216 = vector.broadcast %215 : vector<1x32xf32> to vector<64x32xf32>
    %217 = arith.mulf %213, %216 : vector<64x32xf32>
    %218 = vector.broadcast %130 : vector<1x32xf32> to vector<64x32xf32>
    %219 = arith.addf %217, %218 : vector<64x32xf32>
    %cst_106 = arith.constant dense<0.000000e+00> : vector<64x32xf32>
    %220 = tpu.matmul %219, %134, %cst_106 {dimension_numbers = #tpu.dot_dimension_numbers<[1], [0], [0], [1], [0, 0, 1, 1], [], []>} : vector<64x32xf32>, vector<32x32xf32>, vector<64x32xf32> -> vector<64x32xf32>
    %221 = vector.broadcast %136 : vector<1x32xf32> to vector<64x32xf32>
    %222 = arith.addf %220, %221 : vector<64x32xf32>
    %223 = vector.extract_strided_slice %222 {offsets = [0, 0], sizes = [64, 16], strides = [1, 1]} : vector<64x32xf32> to vector<64x16xf32>
    %224 = arith.addf %112, %223 : vector<64x16xf32>
    %225 = vector.extract_strided_slice %222 {offsets = [0, 16], sizes = [64, 16], strides = [1, 1]} : vector<64x32xf32> to vector<64x16xf32>
    %226 = arith.addf %114, %225 : vector<64x16xf32>
    %c2 = arith.constant 2 : index
    %c0_107 = arith.constant 0 : index
    %c0_108 = arith.constant 0 : index
    %227 = vector.load %arg2[%c2, %c0_107, %c0_108] : memref<6x27x32xf32, #tpu.memory_space<vmem>>, vector<1x16x32xf32>
    %228 = vector.shape_cast %227 : vector<1x16x32xf32> to vector<16x32xf32>
    %c2_109 = arith.constant 2 : index
    %c19_110 = arith.constant 19 : index
    %c0_111 = arith.constant 0 : index
    %229 = vector.load %arg2[%c2_109, %c19_110, %c0_111] : memref<6x27x32xf32, #tpu.memory_space<vmem>>, vector<1x1x32xf32>
    %230 = vector.shape_cast %229 : vector<1x1x32xf32> to vector<1x32xf32>
    %c2_112 = arith.constant 2 : index
    %c20_113 = arith.constant 20 : index
    %c0_114 = arith.constant 0 : index
    %231 = vector.load %arg2[%c2_112, %c20_113, %c0_114] : memref<6x27x32xf32, #tpu.memory_space<vmem>>, vector<1x1x32xf32>
    %232 = vector.shape_cast %231 : vector<1x1x32xf32> to vector<1x32xf32>
    %c2_115 = arith.constant 2 : index
    %c21_116 = arith.constant 21 : index
    %c0_117 = arith.constant 0 : index
    %233 = vector.load %arg2[%c2_115, %c21_116, %c0_117] : memref<6x27x32xf32, #tpu.memory_space<vmem>>, vector<1x1x32xf32>
    %234 = vector.shape_cast %233 : vector<1x1x32xf32> to vector<1x32xf32>
    %c2_118 = arith.constant 2 : index
    %c22_119 = arith.constant 22 : index
    %c0_120 = arith.constant 0 : index
    %235 = vector.load %arg2[%c2_118, %c22_119, %c0_120] : memref<6x27x32xf32, #tpu.memory_space<vmem>>, vector<1x1x32xf32>
    %236 = vector.shape_cast %235 : vector<1x1x32xf32> to vector<1x32xf32>
    %c2_121 = arith.constant 2 : index
    %c23_122 = arith.constant 23 : index
    %c0_123 = arith.constant 0 : index
    %237 = vector.load %arg2[%c2_121, %c23_122, %c0_123] : memref<6x27x32xf32, #tpu.memory_space<vmem>>, vector<1x1x32xf32>
    %238 = vector.shape_cast %237 : vector<1x1x32xf32> to vector<1x32xf32>
    %c2_124 = arith.constant 2 : index
    %c24_125 = arith.constant 24 : index
    %c0_126 = arith.constant 0 : index
    %239 = vector.load %arg2[%c2_124, %c24_125, %c0_126] : memref<6x27x32xf32, #tpu.memory_space<vmem>>, vector<1x1x32xf32>
    %240 = vector.shape_cast %239 : vector<1x1x32xf32> to vector<1x32xf32>
    %c2_127 = arith.constant 2 : index
    %c25_128 = arith.constant 25 : index
    %c0_129 = arith.constant 0 : index
    %241 = vector.load %arg2[%c2_127, %c25_128, %c0_129] : memref<6x27x32xf32, #tpu.memory_space<vmem>>, vector<1x1x32xf32>
    %242 = vector.shape_cast %241 : vector<1x1x32xf32> to vector<1x32xf32>
    %c2_130 = arith.constant 2 : index
    %c26_131 = arith.constant 26 : index
    %c0_132 = arith.constant 0 : index
    %243 = vector.load %arg2[%c2_130, %c26_131, %c0_132] : memref<6x27x32xf32, #tpu.memory_space<vmem>>, vector<1x1x32xf32>
    %244 = vector.shape_cast %243 : vector<1x1x32xf32> to vector<1x32xf32>
    %c2_133 = arith.constant 2 : index
    %c0_134 = arith.constant 0 : index
    %c0_135 = arith.constant 0 : index
    %245 = vector.load %arg3[%c2_133, %c0_134, %c0_135] : memref<6x33x32xf32, #tpu.memory_space<vmem>>, vector<1x32x32xf32>
    %246 = vector.shape_cast %245 : vector<1x32x32xf32> to vector<32x32xf32>
    %c2_136 = arith.constant 2 : index
    %c32_137 = arith.constant 32 : index
    %c0_138 = arith.constant 0 : index
    %247 = vector.load %arg3[%c2_136, %c32_137, %c0_138] : memref<6x33x32xf32, #tpu.memory_space<vmem>>, vector<1x1x32xf32>
    %248 = vector.shape_cast %247 : vector<1x1x32xf32> to vector<1x32xf32>
    %cst_139 = arith.constant dense<0.000000e+00> : vector<64x32xf32>
    %249 = tpu.matmul %226, %228, %cst_139 {dimension_numbers = #tpu.dot_dimension_numbers<[1], [0], [0], [1], [0, 0, 1, 1], [], []>} : vector<64x16xf32>, vector<16x32xf32>, vector<64x32xf32> -> vector<64x32xf32>
    %250 = vector.broadcast %230 : vector<1x32xf32> to vector<64x32xf32>
    %251 = arith.addf %249, %250 : vector<64x32xf32>
    %cst_140 = arith.constant 0.000000e+00 : f32
    %252 = vector.broadcast %cst_140 : f32 to vector<64x32xf32>
    %253 = arith.cmpf ogt, %251, %252 : vector<64x32xf32>
    %254 = vector.broadcast %236 : vector<1x32xf32> to vector<64x32xf32>
    %255 = arith.mulf %254, %251 : vector<64x32xf32>
    %256 = arith.select %253, %251, %255 : vector<64x32xi1>, vector<64x32xf32>
    %257 = vector.shape_cast %256 : vector<64x32xf32> to vector<1x64x32xf32>
    %cst_141 = arith.constant dense<0.000000e+00> : vector<1xf32>
    %258 = vector.multi_reduction <add>, %257, %cst_141 [1, 2] : vector<1x64x32xf32> to vector<1xf32>
    %259 = vector.shape_cast %258 : vector<1xf32> to vector<1x1x1xf32>
    %260 = vector.extract %259[0, 0, 0] : f32 from vector<1x1x1xf32>
    %261 = arith.mulf %256, %256 : vector<64x32xf32>
    %262 = vector.shape_cast %261 : vector<64x32xf32> to vector<1x64x32xf32>
    %cst_142 = arith.constant dense<0.000000e+00> : vector<1xf32>
    %263 = vector.multi_reduction <add>, %262, %cst_142 [1, 2] : vector<1x64x32xf32> to vector<1xf32>
    %264 = vector.shape_cast %263 : vector<1xf32> to vector<1x1x1xf32>
    %265 = vector.extract %264[0, 0, 0] : f32 from vector<1x1x1xf32>
    %cst_143 = arith.constant 4.8828125E-4 : f32
    %266 = arith.mulf %260, %cst_143 : f32
    %cst_144 = arith.constant 4.8828125E-4 : f32
    %267 = arith.mulf %265, %cst_144 : f32
    %268 = arith.mulf %266, %266 : f32
    %269 = arith.subf %267, %268 : f32
    %cst_145 = arith.constant 9.99999974E-6 : f32
    %270 = arith.addf %269, %cst_145 : f32
    %271 = math.rsqrt %270 : f32
    %272 = vector.broadcast %266 : f32 to vector<64x32xf32>
    %273 = arith.subf %256, %272 : vector<64x32xf32>
    %274 = vector.broadcast %271 : f32 to vector<1x32xf32>
    %275 = arith.mulf %232, %274 : vector<1x32xf32>
    %276 = vector.broadcast %275 : vector<1x32xf32> to vector<64x32xf32>
    %277 = arith.mulf %273, %276 : vector<64x32xf32>
    %278 = vector.broadcast %234 : vector<1x32xf32> to vector<64x32xf32>
    %279 = arith.addf %277, %278 : vector<64x32xf32>
    %cst_146 = arith.constant 0.000000e+00 : f32
    %280 = vector.broadcast %cst_146 : f32 to vector<64x32xf32>
    %c2_147 = arith.constant 2 : index
    %c16_148 = arith.constant 16 : index
    %c0_149 = arith.constant 0 : index
    %281 = vector.load %arg2[%c2_147, %c16_148, %c0_149] : memref<6x27x32xf32, #tpu.memory_space<vmem>>, vector<1x1x32xf32>
    %282 = vector.shape_cast %281 : vector<1x1x32xf32> to vector<1x32xf32>
    %cst_150 = arith.constant 0.000000e+00 : f32
    %283 = vector.broadcast %cst_150 : f32 to vector<4x32xf32>
    %284 = vector.extract_strided_slice %279 {offsets = [0, 0], sizes = [60, 32], strides = [1, 1]} : vector<64x32xf32> to vector<60x32xf32>
    %285 = tpu.concatenate %283, %284 in 0 : vector<4x32xf32>, vector<60x32xf32> -> vector<64x32xf32>
    %286 = vector.broadcast %282 : vector<1x32xf32> to vector<64x32xf32>
    %287 = arith.mulf %285, %286 : vector<64x32xf32>
    %288 = arith.addf %280, %287 : vector<64x32xf32>
    %c2_151 = arith.constant 2 : index
    %c17_152 = arith.constant 17 : index
    %c0_153 = arith.constant 0 : index
    %289 = vector.load %arg2[%c2_151, %c17_152, %c0_153] : memref<6x27x32xf32, #tpu.memory_space<vmem>>, vector<1x1x32xf32>
    %290 = vector.shape_cast %289 : vector<1x1x32xf32> to vector<1x32xf32>
    %291 = vector.broadcast %290 : vector<1x32xf32> to vector<64x32xf32>
    %292 = arith.mulf %279, %291 : vector<64x32xf32>
    %293 = arith.addf %288, %292 : vector<64x32xf32>
    %c2_154 = arith.constant 2 : index
    %c18_155 = arith.constant 18 : index
    %c0_156 = arith.constant 0 : index
    %294 = vector.load %arg2[%c2_154, %c18_155, %c0_156] : memref<6x27x32xf32, #tpu.memory_space<vmem>>, vector<1x1x32xf32>
    %295 = vector.shape_cast %294 : vector<1x1x32xf32> to vector<1x32xf32>
    %296 = vector.extract_strided_slice %279 {offsets = [4, 0], sizes = [60, 32], strides = [1, 1]} : vector<64x32xf32> to vector<60x32xf32>
    %cst_157 = arith.constant 0.000000e+00 : f32
    %297 = vector.broadcast %cst_157 : f32 to vector<4x32xf32>
    %298 = tpu.concatenate %296, %297 in 0 : vector<60x32xf32>, vector<4x32xf32> -> vector<64x32xf32>
    %299 = vector.broadcast %295 : vector<1x32xf32> to vector<64x32xf32>
    %300 = arith.mulf %298, %299 : vector<64x32xf32>
    %301 = arith.addf %293, %300 : vector<64x32xf32>
    %302 = vector.broadcast %238 : vector<1x32xf32> to vector<64x32xf32>
    %303 = arith.addf %301, %302 : vector<64x32xf32>
    %cst_158 = arith.constant 0.000000e+00 : f32
    %304 = vector.broadcast %cst_158 : f32 to vector<64x32xf32>
    %305 = arith.cmpf ogt, %303, %304 : vector<64x32xf32>
    %306 = vector.broadcast %244 : vector<1x32xf32> to vector<64x32xf32>
    %307 = arith.mulf %306, %303 : vector<64x32xf32>
    %308 = arith.select %305, %303, %307 : vector<64x32xi1>, vector<64x32xf32>
    %309 = vector.shape_cast %308 : vector<64x32xf32> to vector<1x64x32xf32>
    %cst_159 = arith.constant dense<0.000000e+00> : vector<1xf32>
    %310 = vector.multi_reduction <add>, %309, %cst_159 [1, 2] : vector<1x64x32xf32> to vector<1xf32>
    %311 = vector.shape_cast %310 : vector<1xf32> to vector<1x1x1xf32>
    %312 = vector.extract %311[0, 0, 0] : f32 from vector<1x1x1xf32>
    %313 = arith.mulf %308, %308 : vector<64x32xf32>
    %314 = vector.shape_cast %313 : vector<64x32xf32> to vector<1x64x32xf32>
    %cst_160 = arith.constant dense<0.000000e+00> : vector<1xf32>
    %315 = vector.multi_reduction <add>, %314, %cst_160 [1, 2] : vector<1x64x32xf32> to vector<1xf32>
    %316 = vector.shape_cast %315 : vector<1xf32> to vector<1x1x1xf32>
    %317 = vector.extract %316[0, 0, 0] : f32 from vector<1x1x1xf32>
    %cst_161 = arith.constant 4.8828125E-4 : f32
    %318 = arith.mulf %312, %cst_161 : f32
    %cst_162 = arith.constant 4.8828125E-4 : f32
    %319 = arith.mulf %317, %cst_162 : f32
    %320 = arith.mulf %318, %318 : f32
    %321 = arith.subf %319, %320 : f32
    %cst_163 = arith.constant 9.99999974E-6 : f32
    %322 = arith.addf %321, %cst_163 : f32
    %323 = math.rsqrt %322 : f32
    %324 = vector.broadcast %318 : f32 to vector<64x32xf32>
    %325 = arith.subf %308, %324 : vector<64x32xf32>
    %326 = vector.broadcast %323 : f32 to vector<1x32xf32>
    %327 = arith.mulf %240, %326 : vector<1x32xf32>
    %328 = vector.broadcast %327 : vector<1x32xf32> to vector<64x32xf32>
    %329 = arith.mulf %325, %328 : vector<64x32xf32>
    %330 = vector.broadcast %242 : vector<1x32xf32> to vector<64x32xf32>
    %331 = arith.addf %329, %330 : vector<64x32xf32>
    %cst_164 = arith.constant dense<0.000000e+00> : vector<64x32xf32>
    %332 = tpu.matmul %331, %246, %cst_164 {dimension_numbers = #tpu.dot_dimension_numbers<[1], [0], [0], [1], [0, 0, 1, 1], [], []>} : vector<64x32xf32>, vector<32x32xf32>, vector<64x32xf32> -> vector<64x32xf32>
    %333 = vector.broadcast %248 : vector<1x32xf32> to vector<64x32xf32>
    %334 = arith.addf %332, %333 : vector<64x32xf32>
    %335 = vector.extract_strided_slice %334 {offsets = [0, 0], sizes = [64, 16], strides = [1, 1]} : vector<64x32xf32> to vector<64x16xf32>
    %336 = arith.addf %224, %335 : vector<64x16xf32>
    %337 = vector.extract_strided_slice %334 {offsets = [0, 16], sizes = [64, 16], strides = [1, 1]} : vector<64x32xf32> to vector<64x16xf32>
    %338 = arith.addf %226, %337 : vector<64x16xf32>
    %c3 = arith.constant 3 : index
    %c0_165 = arith.constant 0 : index
    %c0_166 = arith.constant 0 : index
    %339 = vector.load %arg2[%c3, %c0_165, %c0_166] : memref<6x27x32xf32, #tpu.memory_space<vmem>>, vector<1x16x32xf32>
    %340 = vector.shape_cast %339 : vector<1x16x32xf32> to vector<16x32xf32>
    %c3_167 = arith.constant 3 : index
    %c19_168 = arith.constant 19 : index
    %c0_169 = arith.constant 0 : index
    %341 = vector.load %arg2[%c3_167, %c19_168, %c0_169] : memref<6x27x32xf32, #tpu.memory_space<vmem>>, vector<1x1x32xf32>
    %342 = vector.shape_cast %341 : vector<1x1x32xf32> to vector<1x32xf32>
    %c3_170 = arith.constant 3 : index
    %c20_171 = arith.constant 20 : index
    %c0_172 = arith.constant 0 : index
    %343 = vector.load %arg2[%c3_170, %c20_171, %c0_172] : memref<6x27x32xf32, #tpu.memory_space<vmem>>, vector<1x1x32xf32>
    %344 = vector.shape_cast %343 : vector<1x1x32xf32> to vector<1x32xf32>
    %c3_173 = arith.constant 3 : index
    %c21_174 = arith.constant 21 : index
    %c0_175 = arith.constant 0 : index
    %345 = vector.load %arg2[%c3_173, %c21_174, %c0_175] : memref<6x27x32xf32, #tpu.memory_space<vmem>>, vector<1x1x32xf32>
    %346 = vector.shape_cast %345 : vector<1x1x32xf32> to vector<1x32xf32>
    %c3_176 = arith.constant 3 : index
    %c22_177 = arith.constant 22 : index
    %c0_178 = arith.constant 0 : index
    %347 = vector.load %arg2[%c3_176, %c22_177, %c0_178] : memref<6x27x32xf32, #tpu.memory_space<vmem>>, vector<1x1x32xf32>
    %348 = vector.shape_cast %347 : vector<1x1x32xf32> to vector<1x32xf32>
    %c3_179 = arith.constant 3 : index
    %c23_180 = arith.constant 23 : index
    %c0_181 = arith.constant 0 : index
    %349 = vector.load %arg2[%c3_179, %c23_180, %c0_181] : memref<6x27x32xf32, #tpu.memory_space<vmem>>, vector<1x1x32xf32>
    %350 = vector.shape_cast %349 : vector<1x1x32xf32> to vector<1x32xf32>
    %c3_182 = arith.constant 3 : index
    %c24_183 = arith.constant 24 : index
    %c0_184 = arith.constant 0 : index
    %351 = vector.load %arg2[%c3_182, %c24_183, %c0_184] : memref<6x27x32xf32, #tpu.memory_space<vmem>>, vector<1x1x32xf32>
    %352 = vector.shape_cast %351 : vector<1x1x32xf32> to vector<1x32xf32>
    %c3_185 = arith.constant 3 : index
    %c25_186 = arith.constant 25 : index
    %c0_187 = arith.constant 0 : index
    %353 = vector.load %arg2[%c3_185, %c25_186, %c0_187] : memref<6x27x32xf32, #tpu.memory_space<vmem>>, vector<1x1x32xf32>
    %354 = vector.shape_cast %353 : vector<1x1x32xf32> to vector<1x32xf32>
    %c3_188 = arith.constant 3 : index
    %c26_189 = arith.constant 26 : index
    %c0_190 = arith.constant 0 : index
    %355 = vector.load %arg2[%c3_188, %c26_189, %c0_190] : memref<6x27x32xf32, #tpu.memory_space<vmem>>, vector<1x1x32xf32>
    %356 = vector.shape_cast %355 : vector<1x1x32xf32> to vector<1x32xf32>
    %c3_191 = arith.constant 3 : index
    %c0_192 = arith.constant 0 : index
    %c0_193 = arith.constant 0 : index
    %357 = vector.load %arg3[%c3_191, %c0_192, %c0_193] : memref<6x33x32xf32, #tpu.memory_space<vmem>>, vector<1x32x32xf32>
    %358 = vector.shape_cast %357 : vector<1x32x32xf32> to vector<32x32xf32>
    %c3_194 = arith.constant 3 : index
    %c32_195 = arith.constant 32 : index
    %c0_196 = arith.constant 0 : index
    %359 = vector.load %arg3[%c3_194, %c32_195, %c0_196] : memref<6x33x32xf32, #tpu.memory_space<vmem>>, vector<1x1x32xf32>
    %360 = vector.shape_cast %359 : vector<1x1x32xf32> to vector<1x32xf32>
    %cst_197 = arith.constant dense<0.000000e+00> : vector<64x32xf32>
    %361 = tpu.matmul %338, %340, %cst_197 {dimension_numbers = #tpu.dot_dimension_numbers<[1], [0], [0], [1], [0, 0, 1, 1], [], []>} : vector<64x16xf32>, vector<16x32xf32>, vector<64x32xf32> -> vector<64x32xf32>
    %362 = vector.broadcast %342 : vector<1x32xf32> to vector<64x32xf32>
    %363 = arith.addf %361, %362 : vector<64x32xf32>
    %cst_198 = arith.constant 0.000000e+00 : f32
    %364 = vector.broadcast %cst_198 : f32 to vector<64x32xf32>
    %365 = arith.cmpf ogt, %363, %364 : vector<64x32xf32>
    %366 = vector.broadcast %348 : vector<1x32xf32> to vector<64x32xf32>
    %367 = arith.mulf %366, %363 : vector<64x32xf32>
    %368 = arith.select %365, %363, %367 : vector<64x32xi1>, vector<64x32xf32>
    %369 = vector.shape_cast %368 : vector<64x32xf32> to vector<1x64x32xf32>
    %cst_199 = arith.constant dense<0.000000e+00> : vector<1xf32>
    %370 = vector.multi_reduction <add>, %369, %cst_199 [1, 2] : vector<1x64x32xf32> to vector<1xf32>
    %371 = vector.shape_cast %370 : vector<1xf32> to vector<1x1x1xf32>
    %372 = vector.extract %371[0, 0, 0] : f32 from vector<1x1x1xf32>
    %373 = arith.mulf %368, %368 : vector<64x32xf32>
    %374 = vector.shape_cast %373 : vector<64x32xf32> to vector<1x64x32xf32>
    %cst_200 = arith.constant dense<0.000000e+00> : vector<1xf32>
    %375 = vector.multi_reduction <add>, %374, %cst_200 [1, 2] : vector<1x64x32xf32> to vector<1xf32>
    %376 = vector.shape_cast %375 : vector<1xf32> to vector<1x1x1xf32>
    %377 = vector.extract %376[0, 0, 0] : f32 from vector<1x1x1xf32>
    %cst_201 = arith.constant 4.8828125E-4 : f32
    %378 = arith.mulf %372, %cst_201 : f32
    %cst_202 = arith.constant 4.8828125E-4 : f32
    %379 = arith.mulf %377, %cst_202 : f32
    %380 = arith.mulf %378, %378 : f32
    %381 = arith.subf %379, %380 : f32
    %cst_203 = arith.constant 9.99999974E-6 : f32
    %382 = arith.addf %381, %cst_203 : f32
    %383 = math.rsqrt %382 : f32
    %384 = vector.broadcast %378 : f32 to vector<64x32xf32>
    %385 = arith.subf %368, %384 : vector<64x32xf32>
    %386 = vector.broadcast %383 : f32 to vector<1x32xf32>
    %387 = arith.mulf %344, %386 : vector<1x32xf32>
    %388 = vector.broadcast %387 : vector<1x32xf32> to vector<64x32xf32>
    %389 = arith.mulf %385, %388 : vector<64x32xf32>
    %390 = vector.broadcast %346 : vector<1x32xf32> to vector<64x32xf32>
    %391 = arith.addf %389, %390 : vector<64x32xf32>
    %cst_204 = arith.constant 0.000000e+00 : f32
    %392 = vector.broadcast %cst_204 : f32 to vector<64x32xf32>
    %c3_205 = arith.constant 3 : index
    %c16_206 = arith.constant 16 : index
    %c0_207 = arith.constant 0 : index
    %393 = vector.load %arg2[%c3_205, %c16_206, %c0_207] : memref<6x27x32xf32, #tpu.memory_space<vmem>>, vector<1x1x32xf32>
    %394 = vector.shape_cast %393 : vector<1x1x32xf32> to vector<1x32xf32>
    %cst_208 = arith.constant 0.000000e+00 : f32
    %395 = vector.broadcast %cst_208 : f32 to vector<1x32xf32>
    %396 = vector.extract_strided_slice %391 {offsets = [0, 0], sizes = [63, 32], strides = [1, 1]} : vector<64x32xf32> to vector<63x32xf32>
    %397 = tpu.concatenate %395, %396 in 0 : vector<1x32xf32>, vector<63x32xf32> -> vector<64x32xf32>
    %398 = vector.broadcast %394 : vector<1x32xf32> to vector<64x32xf32>
    %399 = arith.mulf %397, %398 : vector<64x32xf32>
    %400 = arith.addf %392, %399 : vector<64x32xf32>
    %c3_209 = arith.constant 3 : index
    %c17_210 = arith.constant 17 : index
    %c0_211 = arith.constant 0 : index
    %401 = vector.load %arg2[%c3_209, %c17_210, %c0_211] : memref<6x27x32xf32, #tpu.memory_space<vmem>>, vector<1x1x32xf32>
    %402 = vector.shape_cast %401 : vector<1x1x32xf32> to vector<1x32xf32>
    %403 = vector.broadcast %402 : vector<1x32xf32> to vector<64x32xf32>
    %404 = arith.mulf %391, %403 : vector<64x32xf32>
    %405 = arith.addf %400, %404 : vector<64x32xf32>
    %c3_212 = arith.constant 3 : index
    %c18_213 = arith.constant 18 : index
    %c0_214 = arith.constant 0 : index
    %406 = vector.load %arg2[%c3_212, %c18_213, %c0_214] : memref<6x27x32xf32, #tpu.memory_space<vmem>>, vector<1x1x32xf32>
    %407 = vector.shape_cast %406 : vector<1x1x32xf32> to vector<1x32xf32>
    %408 = vector.extract_strided_slice %391 {offsets = [1, 0], sizes = [63, 32], strides = [1, 1]} : vector<64x32xf32> to vector<63x32xf32>
    %cst_215 = arith.constant 0.000000e+00 : f32
    %409 = vector.broadcast %cst_215 : f32 to vector<1x32xf32>
    %410 = tpu.concatenate %408, %409 in 0 : vector<63x32xf32>, vector<1x32xf32> -> vector<64x32xf32>
    %411 = vector.broadcast %407 : vector<1x32xf32> to vector<64x32xf32>
    %412 = arith.mulf %410, %411 : vector<64x32xf32>
    %413 = arith.addf %405, %412 : vector<64x32xf32>
    %414 = vector.broadcast %350 : vector<1x32xf32> to vector<64x32xf32>
    %415 = arith.addf %413, %414 : vector<64x32xf32>
    %cst_216 = arith.constant 0.000000e+00 : f32
    %416 = vector.broadcast %cst_216 : f32 to vector<64x32xf32>
    %417 = arith.cmpf ogt, %415, %416 : vector<64x32xf32>
    %418 = vector.broadcast %356 : vector<1x32xf32> to vector<64x32xf32>
    %419 = arith.mulf %418, %415 : vector<64x32xf32>
    %420 = arith.select %417, %415, %419 : vector<64x32xi1>, vector<64x32xf32>
    %421 = vector.shape_cast %420 : vector<64x32xf32> to vector<1x64x32xf32>
    %cst_217 = arith.constant dense<0.000000e+00> : vector<1xf32>
    %422 = vector.multi_reduction <add>, %421, %cst_217 [1, 2] : vector<1x64x32xf32> to vector<1xf32>
    %423 = vector.shape_cast %422 : vector<1xf32> to vector<1x1x1xf32>
    %424 = vector.extract %423[0, 0, 0] : f32 from vector<1x1x1xf32>
    %425 = arith.mulf %420, %420 : vector<64x32xf32>
    %426 = vector.shape_cast %425 : vector<64x32xf32> to vector<1x64x32xf32>
    %cst_218 = arith.constant dense<0.000000e+00> : vector<1xf32>
    %427 = vector.multi_reduction <add>, %426, %cst_218 [1, 2] : vector<1x64x32xf32> to vector<1xf32>
    %428 = vector.shape_cast %427 : vector<1xf32> to vector<1x1x1xf32>
    %429 = vector.extract %428[0, 0, 0] : f32 from vector<1x1x1xf32>
    %cst_219 = arith.constant 4.8828125E-4 : f32
    %430 = arith.mulf %424, %cst_219 : f32
    %cst_220 = arith.constant 4.8828125E-4 : f32
    %431 = arith.mulf %429, %cst_220 : f32
    %432 = arith.mulf %430, %430 : f32
    %433 = arith.subf %431, %432 : f32
    %cst_221 = arith.constant 9.99999974E-6 : f32
    %434 = arith.addf %433, %cst_221 : f32
    %435 = math.rsqrt %434 : f32
    %436 = vector.broadcast %430 : f32 to vector<64x32xf32>
    %437 = arith.subf %420, %436 : vector<64x32xf32>
    %438 = vector.broadcast %435 : f32 to vector<1x32xf32>
    %439 = arith.mulf %352, %438 : vector<1x32xf32>
    %440 = vector.broadcast %439 : vector<1x32xf32> to vector<64x32xf32>
    %441 = arith.mulf %437, %440 : vector<64x32xf32>
    %442 = vector.broadcast %354 : vector<1x32xf32> to vector<64x32xf32>
    %443 = arith.addf %441, %442 : vector<64x32xf32>
    %cst_222 = arith.constant dense<0.000000e+00> : vector<64x32xf32>
    %444 = tpu.matmul %443, %358, %cst_222 {dimension_numbers = #tpu.dot_dimension_numbers<[1], [0], [0], [1], [0, 0, 1, 1], [], []>} : vector<64x32xf32>, vector<32x32xf32>, vector<64x32xf32> -> vector<64x32xf32>
    %445 = vector.broadcast %360 : vector<1x32xf32> to vector<64x32xf32>
    %446 = arith.addf %444, %445 : vector<64x32xf32>
    %447 = vector.extract_strided_slice %446 {offsets = [0, 0], sizes = [64, 16], strides = [1, 1]} : vector<64x32xf32> to vector<64x16xf32>
    %448 = arith.addf %336, %447 : vector<64x16xf32>
    %449 = vector.extract_strided_slice %446 {offsets = [0, 16], sizes = [64, 16], strides = [1, 1]} : vector<64x32xf32> to vector<64x16xf32>
    %450 = arith.addf %338, %449 : vector<64x16xf32>
    %c4 = arith.constant 4 : index
    %c0_223 = arith.constant 0 : index
    %c0_224 = arith.constant 0 : index
    %451 = vector.load %arg2[%c4, %c0_223, %c0_224] : memref<6x27x32xf32, #tpu.memory_space<vmem>>, vector<1x16x32xf32>
    %452 = vector.shape_cast %451 : vector<1x16x32xf32> to vector<16x32xf32>
    %c4_225 = arith.constant 4 : index
    %c19_226 = arith.constant 19 : index
    %c0_227 = arith.constant 0 : index
    %453 = vector.load %arg2[%c4_225, %c19_226, %c0_227] : memref<6x27x32xf32, #tpu.memory_space<vmem>>, vector<1x1x32xf32>
    %454 = vector.shape_cast %453 : vector<1x1x32xf32> to vector<1x32xf32>
    %c4_228 = arith.constant 4 : index
    %c20_229 = arith.constant 20 : index
    %c0_230 = arith.constant 0 : index
    %455 = vector.load %arg2[%c4_228, %c20_229, %c0_230] : memref<6x27x32xf32, #tpu.memory_space<vmem>>, vector<1x1x32xf32>
    %456 = vector.shape_cast %455 : vector<1x1x32xf32> to vector<1x32xf32>
    %c4_231 = arith.constant 4 : index
    %c21_232 = arith.constant 21 : index
    %c0_233 = arith.constant 0 : index
    %457 = vector.load %arg2[%c4_231, %c21_232, %c0_233] : memref<6x27x32xf32, #tpu.memory_space<vmem>>, vector<1x1x32xf32>
    %458 = vector.shape_cast %457 : vector<1x1x32xf32> to vector<1x32xf32>
    %c4_234 = arith.constant 4 : index
    %c22_235 = arith.constant 22 : index
    %c0_236 = arith.constant 0 : index
    %459 = vector.load %arg2[%c4_234, %c22_235, %c0_236] : memref<6x27x32xf32, #tpu.memory_space<vmem>>, vector<1x1x32xf32>
    %460 = vector.shape_cast %459 : vector<1x1x32xf32> to vector<1x32xf32>
    %c4_237 = arith.constant 4 : index
    %c23_238 = arith.constant 23 : index
    %c0_239 = arith.constant 0 : index
    %461 = vector.load %arg2[%c4_237, %c23_238, %c0_239] : memref<6x27x32xf32, #tpu.memory_space<vmem>>, vector<1x1x32xf32>
    %462 = vector.shape_cast %461 : vector<1x1x32xf32> to vector<1x32xf32>
    %c4_240 = arith.constant 4 : index
    %c24_241 = arith.constant 24 : index
    %c0_242 = arith.constant 0 : index
    %463 = vector.load %arg2[%c4_240, %c24_241, %c0_242] : memref<6x27x32xf32, #tpu.memory_space<vmem>>, vector<1x1x32xf32>
    %464 = vector.shape_cast %463 : vector<1x1x32xf32> to vector<1x32xf32>
    %c4_243 = arith.constant 4 : index
    %c25_244 = arith.constant 25 : index
    %c0_245 = arith.constant 0 : index
    %465 = vector.load %arg2[%c4_243, %c25_244, %c0_245] : memref<6x27x32xf32, #tpu.memory_space<vmem>>, vector<1x1x32xf32>
    %466 = vector.shape_cast %465 : vector<1x1x32xf32> to vector<1x32xf32>
    %c4_246 = arith.constant 4 : index
    %c26_247 = arith.constant 26 : index
    %c0_248 = arith.constant 0 : index
    %467 = vector.load %arg2[%c4_246, %c26_247, %c0_248] : memref<6x27x32xf32, #tpu.memory_space<vmem>>, vector<1x1x32xf32>
    %468 = vector.shape_cast %467 : vector<1x1x32xf32> to vector<1x32xf32>
    %c4_249 = arith.constant 4 : index
    %c0_250 = arith.constant 0 : index
    %c0_251 = arith.constant 0 : index
    %469 = vector.load %arg3[%c4_249, %c0_250, %c0_251] : memref<6x33x32xf32, #tpu.memory_space<vmem>>, vector<1x32x32xf32>
    %470 = vector.shape_cast %469 : vector<1x32x32xf32> to vector<32x32xf32>
    %c4_252 = arith.constant 4 : index
    %c32_253 = arith.constant 32 : index
    %c0_254 = arith.constant 0 : index
    %471 = vector.load %arg3[%c4_252, %c32_253, %c0_254] : memref<6x33x32xf32, #tpu.memory_space<vmem>>, vector<1x1x32xf32>
    %472 = vector.shape_cast %471 : vector<1x1x32xf32> to vector<1x32xf32>
    %cst_255 = arith.constant dense<0.000000e+00> : vector<64x32xf32>
    %473 = tpu.matmul %450, %452, %cst_255 {dimension_numbers = #tpu.dot_dimension_numbers<[1], [0], [0], [1], [0, 0, 1, 1], [], []>} : vector<64x16xf32>, vector<16x32xf32>, vector<64x32xf32> -> vector<64x32xf32>
    %474 = vector.broadcast %454 : vector<1x32xf32> to vector<64x32xf32>
    %475 = arith.addf %473, %474 : vector<64x32xf32>
    %cst_256 = arith.constant 0.000000e+00 : f32
    %476 = vector.broadcast %cst_256 : f32 to vector<64x32xf32>
    %477 = arith.cmpf ogt, %475, %476 : vector<64x32xf32>
    %478 = vector.broadcast %460 : vector<1x32xf32> to vector<64x32xf32>
    %479 = arith.mulf %478, %475 : vector<64x32xf32>
    %480 = arith.select %477, %475, %479 : vector<64x32xi1>, vector<64x32xf32>
    %481 = vector.shape_cast %480 : vector<64x32xf32> to vector<1x64x32xf32>
    %cst_257 = arith.constant dense<0.000000e+00> : vector<1xf32>
    %482 = vector.multi_reduction <add>, %481, %cst_257 [1, 2] : vector<1x64x32xf32> to vector<1xf32>
    %483 = vector.shape_cast %482 : vector<1xf32> to vector<1x1x1xf32>
    %484 = vector.extract %483[0, 0, 0] : f32 from vector<1x1x1xf32>
    %485 = arith.mulf %480, %480 : vector<64x32xf32>
    %486 = vector.shape_cast %485 : vector<64x32xf32> to vector<1x64x32xf32>
    %cst_258 = arith.constant dense<0.000000e+00> : vector<1xf32>
    %487 = vector.multi_reduction <add>, %486, %cst_258 [1, 2] : vector<1x64x32xf32> to vector<1xf32>
    %488 = vector.shape_cast %487 : vector<1xf32> to vector<1x1x1xf32>
    %489 = vector.extract %488[0, 0, 0] : f32 from vector<1x1x1xf32>
    %cst_259 = arith.constant 4.8828125E-4 : f32
    %490 = arith.mulf %484, %cst_259 : f32
    %cst_260 = arith.constant 4.8828125E-4 : f32
    %491 = arith.mulf %489, %cst_260 : f32
    %492 = arith.mulf %490, %490 : f32
    %493 = arith.subf %491, %492 : f32
    %cst_261 = arith.constant 9.99999974E-6 : f32
    %494 = arith.addf %493, %cst_261 : f32
    %495 = math.rsqrt %494 : f32
    %496 = vector.broadcast %490 : f32 to vector<64x32xf32>
    %497 = arith.subf %480, %496 : vector<64x32xf32>
    %498 = vector.broadcast %495 : f32 to vector<1x32xf32>
    %499 = arith.mulf %456, %498 : vector<1x32xf32>
    %500 = vector.broadcast %499 : vector<1x32xf32> to vector<64x32xf32>
    %501 = arith.mulf %497, %500 : vector<64x32xf32>
    %502 = vector.broadcast %458 : vector<1x32xf32> to vector<64x32xf32>
    %503 = arith.addf %501, %502 : vector<64x32xf32>
    %cst_262 = arith.constant 0.000000e+00 : f32
    %504 = vector.broadcast %cst_262 : f32 to vector<64x32xf32>
    %c4_263 = arith.constant 4 : index
    %c16_264 = arith.constant 16 : index
    %c0_265 = arith.constant 0 : index
    %505 = vector.load %arg2[%c4_263, %c16_264, %c0_265] : memref<6x27x32xf32, #tpu.memory_space<vmem>>, vector<1x1x32xf32>
    %506 = vector.shape_cast %505 : vector<1x1x32xf32> to vector<1x32xf32>
    %cst_266 = arith.constant 0.000000e+00 : f32
    %507 = vector.broadcast %cst_266 : f32 to vector<2x32xf32>
    %508 = vector.extract_strided_slice %503 {offsets = [0, 0], sizes = [62, 32], strides = [1, 1]} : vector<64x32xf32> to vector<62x32xf32>
    %509 = tpu.concatenate %507, %508 in 0 : vector<2x32xf32>, vector<62x32xf32> -> vector<64x32xf32>
    %510 = vector.broadcast %506 : vector<1x32xf32> to vector<64x32xf32>
    %511 = arith.mulf %509, %510 : vector<64x32xf32>
    %512 = arith.addf %504, %511 : vector<64x32xf32>
    %c4_267 = arith.constant 4 : index
    %c17_268 = arith.constant 17 : index
    %c0_269 = arith.constant 0 : index
    %513 = vector.load %arg2[%c4_267, %c17_268, %c0_269] : memref<6x27x32xf32, #tpu.memory_space<vmem>>, vector<1x1x32xf32>
    %514 = vector.shape_cast %513 : vector<1x1x32xf32> to vector<1x32xf32>
    %515 = vector.broadcast %514 : vector<1x32xf32> to vector<64x32xf32>
    %516 = arith.mulf %503, %515 : vector<64x32xf32>
    %517 = arith.addf %512, %516 : vector<64x32xf32>
    %c4_270 = arith.constant 4 : index
    %c18_271 = arith.constant 18 : index
    %c0_272 = arith.constant 0 : index
    %518 = vector.load %arg2[%c4_270, %c18_271, %c0_272] : memref<6x27x32xf32, #tpu.memory_space<vmem>>, vector<1x1x32xf32>
    %519 = vector.shape_cast %518 : vector<1x1x32xf32> to vector<1x32xf32>
    %520 = vector.extract_strided_slice %503 {offsets = [2, 0], sizes = [62, 32], strides = [1, 1]} : vector<64x32xf32> to vector<62x32xf32>
    %cst_273 = arith.constant 0.000000e+00 : f32
    %521 = vector.broadcast %cst_273 : f32 to vector<2x32xf32>
    %522 = tpu.concatenate %520, %521 in 0 : vector<62x32xf32>, vector<2x32xf32> -> vector<64x32xf32>
    %523 = vector.broadcast %519 : vector<1x32xf32> to vector<64x32xf32>
    %524 = arith.mulf %522, %523 : vector<64x32xf32>
    %525 = arith.addf %517, %524 : vector<64x32xf32>
    %526 = vector.broadcast %462 : vector<1x32xf32> to vector<64x32xf32>
    %527 = arith.addf %525, %526 : vector<64x32xf32>
    %cst_274 = arith.constant 0.000000e+00 : f32
    %528 = vector.broadcast %cst_274 : f32 to vector<64x32xf32>
    %529 = arith.cmpf ogt, %527, %528 : vector<64x32xf32>
    %530 = vector.broadcast %468 : vector<1x32xf32> to vector<64x32xf32>
    %531 = arith.mulf %530, %527 : vector<64x32xf32>
    %532 = arith.select %529, %527, %531 : vector<64x32xi1>, vector<64x32xf32>
    %533 = vector.shape_cast %532 : vector<64x32xf32> to vector<1x64x32xf32>
    %cst_275 = arith.constant dense<0.000000e+00> : vector<1xf32>
    %534 = vector.multi_reduction <add>, %533, %cst_275 [1, 2] : vector<1x64x32xf32> to vector<1xf32>
    %535 = vector.shape_cast %534 : vector<1xf32> to vector<1x1x1xf32>
    %536 = vector.extract %535[0, 0, 0] : f32 from vector<1x1x1xf32>
    %537 = arith.mulf %532, %532 : vector<64x32xf32>
    %538 = vector.shape_cast %537 : vector<64x32xf32> to vector<1x64x32xf32>
    %cst_276 = arith.constant dense<0.000000e+00> : vector<1xf32>
    %539 = vector.multi_reduction <add>, %538, %cst_276 [1, 2] : vector<1x64x32xf32> to vector<1xf32>
    %540 = vector.shape_cast %539 : vector<1xf32> to vector<1x1x1xf32>
    %541 = vector.extract %540[0, 0, 0] : f32 from vector<1x1x1xf32>
    %cst_277 = arith.constant 4.8828125E-4 : f32
    %542 = arith.mulf %536, %cst_277 : f32
    %cst_278 = arith.constant 4.8828125E-4 : f32
    %543 = arith.mulf %541, %cst_278 : f32
    %544 = arith.mulf %542, %542 : f32
    %545 = arith.subf %543, %544 : f32
    %cst_279 = arith.constant 9.99999974E-6 : f32
    %546 = arith.addf %545, %cst_279 : f32
    %547 = math.rsqrt %546 : f32
    %548 = vector.broadcast %542 : f32 to vector<64x32xf32>
    %549 = arith.subf %532, %548 : vector<64x32xf32>
    %550 = vector.broadcast %547 : f32 to vector<1x32xf32>
    %551 = arith.mulf %464, %550 : vector<1x32xf32>
    %552 = vector.broadcast %551 : vector<1x32xf32> to vector<64x32xf32>
    %553 = arith.mulf %549, %552 : vector<64x32xf32>
    %554 = vector.broadcast %466 : vector<1x32xf32> to vector<64x32xf32>
    %555 = arith.addf %553, %554 : vector<64x32xf32>
    %cst_280 = arith.constant dense<0.000000e+00> : vector<64x32xf32>
    %556 = tpu.matmul %555, %470, %cst_280 {dimension_numbers = #tpu.dot_dimension_numbers<[1], [0], [0], [1], [0, 0, 1, 1], [], []>} : vector<64x32xf32>, vector<32x32xf32>, vector<64x32xf32> -> vector<64x32xf32>
    %557 = vector.broadcast %472 : vector<1x32xf32> to vector<64x32xf32>
    %558 = arith.addf %556, %557 : vector<64x32xf32>
    %559 = vector.extract_strided_slice %558 {offsets = [0, 0], sizes = [64, 16], strides = [1, 1]} : vector<64x32xf32> to vector<64x16xf32>
    %560 = arith.addf %448, %559 : vector<64x16xf32>
    %561 = vector.extract_strided_slice %558 {offsets = [0, 16], sizes = [64, 16], strides = [1, 1]} : vector<64x32xf32> to vector<64x16xf32>
    %562 = arith.addf %450, %561 : vector<64x16xf32>
    %c5 = arith.constant 5 : index
    %c0_281 = arith.constant 0 : index
    %c0_282 = arith.constant 0 : index
    %563 = vector.load %arg2[%c5, %c0_281, %c0_282] : memref<6x27x32xf32, #tpu.memory_space<vmem>>, vector<1x16x32xf32>
    %564 = vector.shape_cast %563 : vector<1x16x32xf32> to vector<16x32xf32>
    %c5_283 = arith.constant 5 : index
    %c19_284 = arith.constant 19 : index
    %c0_285 = arith.constant 0 : index
    %565 = vector.load %arg2[%c5_283, %c19_284, %c0_285] : memref<6x27x32xf32, #tpu.memory_space<vmem>>, vector<1x1x32xf32>
    %566 = vector.shape_cast %565 : vector<1x1x32xf32> to vector<1x32xf32>
    %c5_286 = arith.constant 5 : index
    %c20_287 = arith.constant 20 : index
    %c0_288 = arith.constant 0 : index
    %567 = vector.load %arg2[%c5_286, %c20_287, %c0_288] : memref<6x27x32xf32, #tpu.memory_space<vmem>>, vector<1x1x32xf32>
    %568 = vector.shape_cast %567 : vector<1x1x32xf32> to vector<1x32xf32>
    %c5_289 = arith.constant 5 : index
    %c21_290 = arith.constant 21 : index
    %c0_291 = arith.constant 0 : index
    %569 = vector.load %arg2[%c5_289, %c21_290, %c0_291] : memref<6x27x32xf32, #tpu.memory_space<vmem>>, vector<1x1x32xf32>
    %570 = vector.shape_cast %569 : vector<1x1x32xf32> to vector<1x32xf32>
    %c5_292 = arith.constant 5 : index
    %c22_293 = arith.constant 22 : index
    %c0_294 = arith.constant 0 : index
    %571 = vector.load %arg2[%c5_292, %c22_293, %c0_294] : memref<6x27x32xf32, #tpu.memory_space<vmem>>, vector<1x1x32xf32>
    %572 = vector.shape_cast %571 : vector<1x1x32xf32> to vector<1x32xf32>
    %c5_295 = arith.constant 5 : index
    %c23_296 = arith.constant 23 : index
    %c0_297 = arith.constant 0 : index
    %573 = vector.load %arg2[%c5_295, %c23_296, %c0_297] : memref<6x27x32xf32, #tpu.memory_space<vmem>>, vector<1x1x32xf32>
    %574 = vector.shape_cast %573 : vector<1x1x32xf32> to vector<1x32xf32>
    %c5_298 = arith.constant 5 : index
    %c24_299 = arith.constant 24 : index
    %c0_300 = arith.constant 0 : index
    %575 = vector.load %arg2[%c5_298, %c24_299, %c0_300] : memref<6x27x32xf32, #tpu.memory_space<vmem>>, vector<1x1x32xf32>
    %576 = vector.shape_cast %575 : vector<1x1x32xf32> to vector<1x32xf32>
    %c5_301 = arith.constant 5 : index
    %c25_302 = arith.constant 25 : index
    %c0_303 = arith.constant 0 : index
    %577 = vector.load %arg2[%c5_301, %c25_302, %c0_303] : memref<6x27x32xf32, #tpu.memory_space<vmem>>, vector<1x1x32xf32>
    %578 = vector.shape_cast %577 : vector<1x1x32xf32> to vector<1x32xf32>
    %c5_304 = arith.constant 5 : index
    %c26_305 = arith.constant 26 : index
    %c0_306 = arith.constant 0 : index
    %579 = vector.load %arg2[%c5_304, %c26_305, %c0_306] : memref<6x27x32xf32, #tpu.memory_space<vmem>>, vector<1x1x32xf32>
    %580 = vector.shape_cast %579 : vector<1x1x32xf32> to vector<1x32xf32>
    %c5_307 = arith.constant 5 : index
    %c0_308 = arith.constant 0 : index
    %c0_309 = arith.constant 0 : index
    %581 = vector.load %arg3[%c5_307, %c0_308, %c0_309] : memref<6x33x32xf32, #tpu.memory_space<vmem>>, vector<1x32x32xf32>
    %582 = vector.shape_cast %581 : vector<1x32x32xf32> to vector<32x32xf32>
    %c5_310 = arith.constant 5 : index
    %c32_311 = arith.constant 32 : index
    %c0_312 = arith.constant 0 : index
    %583 = vector.load %arg3[%c5_310, %c32_311, %c0_312] : memref<6x33x32xf32, #tpu.memory_space<vmem>>, vector<1x1x32xf32>
    %584 = vector.shape_cast %583 : vector<1x1x32xf32> to vector<1x32xf32>
    %cst_313 = arith.constant dense<0.000000e+00> : vector<64x32xf32>
    %585 = tpu.matmul %562, %564, %cst_313 {dimension_numbers = #tpu.dot_dimension_numbers<[1], [0], [0], [1], [0, 0, 1, 1], [], []>} : vector<64x16xf32>, vector<16x32xf32>, vector<64x32xf32> -> vector<64x32xf32>
    %586 = vector.broadcast %566 : vector<1x32xf32> to vector<64x32xf32>
    %587 = arith.addf %585, %586 : vector<64x32xf32>
    %cst_314 = arith.constant 0.000000e+00 : f32
    %588 = vector.broadcast %cst_314 : f32 to vector<64x32xf32>
    %589 = arith.cmpf ogt, %587, %588 : vector<64x32xf32>
    %590 = vector.broadcast %572 : vector<1x32xf32> to vector<64x32xf32>
    %591 = arith.mulf %590, %587 : vector<64x32xf32>
    %592 = arith.select %589, %587, %591 : vector<64x32xi1>, vector<64x32xf32>
    %593 = vector.shape_cast %592 : vector<64x32xf32> to vector<1x64x32xf32>
    %cst_315 = arith.constant dense<0.000000e+00> : vector<1xf32>
    %594 = vector.multi_reduction <add>, %593, %cst_315 [1, 2] : vector<1x64x32xf32> to vector<1xf32>
    %595 = vector.shape_cast %594 : vector<1xf32> to vector<1x1x1xf32>
    %596 = vector.extract %595[0, 0, 0] : f32 from vector<1x1x1xf32>
    %597 = arith.mulf %592, %592 : vector<64x32xf32>
    %598 = vector.shape_cast %597 : vector<64x32xf32> to vector<1x64x32xf32>
    %cst_316 = arith.constant dense<0.000000e+00> : vector<1xf32>
    %599 = vector.multi_reduction <add>, %598, %cst_316 [1, 2] : vector<1x64x32xf32> to vector<1xf32>
    %600 = vector.shape_cast %599 : vector<1xf32> to vector<1x1x1xf32>
    %601 = vector.extract %600[0, 0, 0] : f32 from vector<1x1x1xf32>
    %cst_317 = arith.constant 4.8828125E-4 : f32
    %602 = arith.mulf %596, %cst_317 : f32
    %cst_318 = arith.constant 4.8828125E-4 : f32
    %603 = arith.mulf %601, %cst_318 : f32
    %604 = arith.mulf %602, %602 : f32
    %605 = arith.subf %603, %604 : f32
    %cst_319 = arith.constant 9.99999974E-6 : f32
    %606 = arith.addf %605, %cst_319 : f32
    %607 = math.rsqrt %606 : f32
    %608 = vector.broadcast %602 : f32 to vector<64x32xf32>
    %609 = arith.subf %592, %608 : vector<64x32xf32>
    %610 = vector.broadcast %607 : f32 to vector<1x32xf32>
    %611 = arith.mulf %568, %610 : vector<1x32xf32>
    %612 = vector.broadcast %611 : vector<1x32xf32> to vector<64x32xf32>
    %613 = arith.mulf %609, %612 : vector<64x32xf32>
    %614 = vector.broadcast %570 : vector<1x32xf32> to vector<64x32xf32>
    %615 = arith.addf %613, %614 : vector<64x32xf32>
    %cst_320 = arith.constant 0.000000e+00 : f32
    %616 = vector.broadcast %cst_320 : f32 to vector<64x32xf32>
    %c5_321 = arith.constant 5 : index
    %c16_322 = arith.constant 16 : index
    %c0_323 = arith.constant 0 : index
    %617 = vector.load %arg2[%c5_321, %c16_322, %c0_323] : memref<6x27x32xf32, #tpu.memory_space<vmem>>, vector<1x1x32xf32>
    %618 = vector.shape_cast %617 : vector<1x1x32xf32> to vector<1x32xf32>
    %cst_324 = arith.constant 0.000000e+00 : f32
    %619 = vector.broadcast %cst_324 : f32 to vector<4x32xf32>
    %620 = vector.extract_strided_slice %615 {offsets = [0, 0], sizes = [60, 32], strides = [1, 1]} : vector<64x32xf32> to vector<60x32xf32>
    %621 = tpu.concatenate %619, %620 in 0 : vector<4x32xf32>, vector<60x32xf32> -> vector<64x32xf32>
    %622 = vector.broadcast %618 : vector<1x32xf32> to vector<64x32xf32>
    %623 = arith.mulf %621, %622 : vector<64x32xf32>
    %624 = arith.addf %616, %623 : vector<64x32xf32>
    %c5_325 = arith.constant 5 : index
    %c17_326 = arith.constant 17 : index
    %c0_327 = arith.constant 0 : index
    %625 = vector.load %arg2[%c5_325, %c17_326, %c0_327] : memref<6x27x32xf32, #tpu.memory_space<vmem>>, vector<1x1x32xf32>
    %626 = vector.shape_cast %625 : vector<1x1x32xf32> to vector<1x32xf32>
    %627 = vector.broadcast %626 : vector<1x32xf32> to vector<64x32xf32>
    %628 = arith.mulf %615, %627 : vector<64x32xf32>
    %629 = arith.addf %624, %628 : vector<64x32xf32>
    %c5_328 = arith.constant 5 : index
    %c18_329 = arith.constant 18 : index
    %c0_330 = arith.constant 0 : index
    %630 = vector.load %arg2[%c5_328, %c18_329, %c0_330] : memref<6x27x32xf32, #tpu.memory_space<vmem>>, vector<1x1x32xf32>
    %631 = vector.shape_cast %630 : vector<1x1x32xf32> to vector<1x32xf32>
    %632 = vector.extract_strided_slice %615 {offsets = [4, 0], sizes = [60, 32], strides = [1, 1]} : vector<64x32xf32> to vector<60x32xf32>
    %cst_331 = arith.constant 0.000000e+00 : f32
    %633 = vector.broadcast %cst_331 : f32 to vector<4x32xf32>
    %634 = tpu.concatenate %632, %633 in 0 : vector<60x32xf32>, vector<4x32xf32> -> vector<64x32xf32>
    %635 = vector.broadcast %631 : vector<1x32xf32> to vector<64x32xf32>
    %636 = arith.mulf %634, %635 : vector<64x32xf32>
    %637 = arith.addf %629, %636 : vector<64x32xf32>
    %638 = vector.broadcast %574 : vector<1x32xf32> to vector<64x32xf32>
    %639 = arith.addf %637, %638 : vector<64x32xf32>
    %cst_332 = arith.constant 0.000000e+00 : f32
    %640 = vector.broadcast %cst_332 : f32 to vector<64x32xf32>
    %641 = arith.cmpf ogt, %639, %640 : vector<64x32xf32>
    %642 = vector.broadcast %580 : vector<1x32xf32> to vector<64x32xf32>
    %643 = arith.mulf %642, %639 : vector<64x32xf32>
    %644 = arith.select %641, %639, %643 : vector<64x32xi1>, vector<64x32xf32>
    %645 = vector.shape_cast %644 : vector<64x32xf32> to vector<1x64x32xf32>
    %cst_333 = arith.constant dense<0.000000e+00> : vector<1xf32>
    %646 = vector.multi_reduction <add>, %645, %cst_333 [1, 2] : vector<1x64x32xf32> to vector<1xf32>
    %647 = vector.shape_cast %646 : vector<1xf32> to vector<1x1x1xf32>
    %648 = vector.extract %647[0, 0, 0] : f32 from vector<1x1x1xf32>
    %649 = arith.mulf %644, %644 : vector<64x32xf32>
    %650 = vector.shape_cast %649 : vector<64x32xf32> to vector<1x64x32xf32>
    %cst_334 = arith.constant dense<0.000000e+00> : vector<1xf32>
    %651 = vector.multi_reduction <add>, %650, %cst_334 [1, 2] : vector<1x64x32xf32> to vector<1xf32>
    %652 = vector.shape_cast %651 : vector<1xf32> to vector<1x1x1xf32>
    %653 = vector.extract %652[0, 0, 0] : f32 from vector<1x1x1xf32>
    %cst_335 = arith.constant 4.8828125E-4 : f32
    %654 = arith.mulf %648, %cst_335 : f32
    %cst_336 = arith.constant 4.8828125E-4 : f32
    %655 = arith.mulf %653, %cst_336 : f32
    %656 = arith.mulf %654, %654 : f32
    %657 = arith.subf %655, %656 : f32
    %cst_337 = arith.constant 9.99999974E-6 : f32
    %658 = arith.addf %657, %cst_337 : f32
    %659 = math.rsqrt %658 : f32
    %660 = vector.broadcast %654 : f32 to vector<64x32xf32>
    %661 = arith.subf %644, %660 : vector<64x32xf32>
    %662 = vector.broadcast %659 : f32 to vector<1x32xf32>
    %663 = arith.mulf %576, %662 : vector<1x32xf32>
    %664 = vector.broadcast %663 : vector<1x32xf32> to vector<64x32xf32>
    %665 = arith.mulf %661, %664 : vector<64x32xf32>
    %666 = vector.broadcast %578 : vector<1x32xf32> to vector<64x32xf32>
    %667 = arith.addf %665, %666 : vector<64x32xf32>
    %cst_338 = arith.constant dense<0.000000e+00> : vector<64x32xf32>
    %668 = tpu.matmul %667, %582, %cst_338 {dimension_numbers = #tpu.dot_dimension_numbers<[1], [0], [0], [1], [0, 0, 1, 1], [], []>} : vector<64x32xf32>, vector<32x32xf32>, vector<64x32xf32> -> vector<64x32xf32>
    %669 = vector.broadcast %584 : vector<1x32xf32> to vector<64x32xf32>
    %670 = arith.addf %668, %669 : vector<64x32xf32>
    %671 = vector.extract_strided_slice %670 {offsets = [0, 0], sizes = [64, 16], strides = [1, 1]} : vector<64x32xf32> to vector<64x16xf32>
    %672 = arith.addf %560, %671 : vector<64x16xf32>
    %c0_339 = arith.constant 0 : index
    %c0_340 = arith.constant 0 : index
    %c0_341 = arith.constant 0 : index
    %673 = vector.load %arg4[%c0_339, %c0_340, %c0_341] : memref<1x64x16xf32, #tpu.memory_space<vmem>>, vector<1x64x16xf32>
    %674 = vector.shape_cast %673 : vector<1x64x16xf32> to vector<64x16xf32>
    %675 = vector.shape_cast %672 : vector<64x16xf32> to vector<1x64x16xf32>
    tpu.vector_store %arg4[%c0_339, %c0_340, %c0_341], %675 {strides = array<i32>} : memref<1x64x16xf32, #tpu.memory_space<vmem>>, vector<1x64x16xf32>,
    return
  }
  func.func @transform_0(%arg0: i32) -> (i32, i32, i32) {
    %c0_i32 = arith.constant 0 : i32
    %c0_i32_0 = arith.constant 0 : i32
    %c0_i32_1 = arith.constant 0 : i32
    return %arg0, %c0_i32, %c0_i32_0 : i32, i32, i32
  }
  func.func @transform_1(%arg0: i32) -> (i32, i32, i32) {
    %c0_i32 = arith.constant 0 : i32
    %c0_i32_0 = arith.constant 0 : i32
    %c0_i32_1 = arith.constant 0 : i32
    %c0_i32_2 = arith.constant 0 : i32
    return %c0_i32, %c0_i32_0, %c0_i32_1 : i32, i32, i32
  }
  func.func @transform_2(%arg0: i32) -> (i32, i32, i32) {
    %c0_i32 = arith.constant 0 : i32
    %c0_i32_0 = arith.constant 0 : i32
    %c0_i32_1 = arith.constant 0 : i32
    %c0_i32_2 = arith.constant 0 : i32
    return %c0_i32, %c0_i32_0, %c0_i32_1 : i32, i32, i32
  }
  func.func @transform_3(%arg0: i32) -> (i32, i32, i32) {
    %c0_i32 = arith.constant 0 : i32
    %c0_i32_0 = arith.constant 0 : i32
    %c0_i32_1 = arith.constant 0 : i32
    return %arg0, %c0_i32, %c0_i32_0 : i32, i32, i32
  }
}

</mosaic_0001>

<llo_original>
// kernel: separation_forward.1
$region0: #{separation_forward.1}
  #allocation0 [shape = 'u32[]', space=smem, size = 0x4, offset = 0x4, fixed_abs, tag = 'smem constant byte address 0x4 - core index']
  #allocation1 [shape = 'u32[144,128]{1,0:T(1,128)}', space=vmem, size = 0x12000, scoped, tag = 'internal scratch']
  %s0 = inlined_call_operand.vmem [shape: f32[2,64,16], index: 0, kind: input, shape index: {}]
  %s1 = inlined_call_operand.vmem [shape: f32[6,27,32], index: 1, kind: input, shape index: {}]
  %s2 = inlined_call_operand.vmem [shape: f32[6,33,32], index: 2, kind: input, shape index: {}]
  %s3 = inlined_call_operand.vmem [shape: f32[2,64,16], index: 3, kind: output, shape index: {}]
  %s4 = sld [smem:[#allocation0]]
  $region45: #{separation_forward.1} parent=0
    _
  %s6 = ssub.s32 1, %s4
  %s7 = scalar_select 0, %s6, %s4
  loop: start=0, step=1, limit=4
  $region2: #{separation_forward.1} parent=0 // loop_pre_header
    _
  $region3: #{separation_forward.1} parent=0 // loop_header
    %s9 = sphi 0, %s13
    %p10 = scmp.ge.s32.totalorder %s9, 4
    %s19 = sphi 0, %s21
    %s22 = sphi 0, %s19
    %s23 = sphi 0, %s22
    %s39 = sphi 0, %s23
    %s43 = sphi 0, %s43
    %s45 = sphi 0, %s43
    %s46 = sphi 0, %s45
    %s60 = sphi 0, %s46
    %s64 = sphi 0, %s64
    %s66 = sphi 0, %s64
    %s67 = sphi 0, %s66
    %s81 = sphi 0, %s67
    %s87 = sphi 0, %s89
    %s90 = sphi 0, %s87
    %s91 = sphi 0, %s90
    %s107 = sphi 0, %s91
  $region4: #{separation_forward.1} parent=0 // loop_header_branch
    %12 = sbr.rel (%p10) target = $region8
  $region5: #{separation_forward.1} parent=0 // loop_body
    %s14 = ssub.s32 %s9, 1
    %s15 = ssub.s32 %s9, 2
    %s16 = sadd.s32 %s9, 1
    %s17 = ssub.s32 %s9, %s16
    %p18 = scmp.eq.s32.totalorder %s17, 0
    %s20 = sadd.s32 %s19, 1
    %s21 = scalar_select %p18, %s19, %s20
    %p24 = pneg %p18
    %p25 = scmp.eq.s32.totalorder %s9, 1
    %p26 = por %p24, %p25
    %p27 = scmp.ne.s32.totalorder %s19, %s22
    %p28 = scmp.eq.s32.totalorder %s9, 0
    %p29 = por %p27, %p28
    %p30 = scmp.ne.s32.totalorder %s19, %s22
    %p31 = scmp.eq.s32.totalorder %s14, 1
    %p32 = por %p30, %p31
    %p33 = scmp.ne.s32.totalorder %s22, %s23
    %p34 = scmp.eq.s32.totalorder %s14, 0
    %p35 = por %p33, %p34
    %p36 = scmp.ne.s32.totalorder %s22, %s23
    %p37 = scmp.eq.s32.totalorder %s15, 1
    %p38 = por %p36, %p37
    %p40 = scmp.ne.s32.totalorder %s23, %s39
    %p41 = scmp.eq.s32.totalorder %s15, 0
    %p42 = por %p40, %p41
    %s44 = sadd.s32 %s43, 1
    %p47 = scmp.eq.s32.totalorder %s9, 1
    %p48 = scmp.ne.s32.totalorder %s43, %s45
    %p49 = scmp.eq.s32.totalorder %s9, 0
    %p50 = por %p48, %p49
    %p51 = scmp.ne.s32.totalorder %s43, %s45
    %p52 = scmp.eq.s32.totalorder %s14, 1
    %p53 = por %p51, %p52
    %p54 = scmp.ne.s32.totalorder %s45, %s46
    %p55 = scmp.eq.s32.totalorder %s14, 0
    %p56 = por %p54, %p55
    %p57 = scmp.ne.s32.totalorder %s45, %s46
    %p58 = scmp.eq.s32.totalorder %s15, 1
    %p59 = por %p57, %p58
    %p61 = scmp.ne.s32.totalorder %s46, %s60
    %p62 = scmp.eq.s32.totalorder %s15, 0
    %p63 = por %p61, %p62
    %s65 = sadd.s32 %s64, 1
    %p68 = scmp.eq.s32.totalorder %s9, 1
    %p69 = scmp.ne.s32.totalorder %s64, %s66
    %p70 = scmp.eq.s32.totalorder %s9, 0
    %p71 = por %p69, %p70
    %p72 = scmp.ne.s32.totalorder %s64, %s66
    %p73 = scmp.eq.s32.totalorder %s14, 1
    %p74 = por %p72, %p73
    %p75 = scmp.ne.s32.totalorder %s66, %s67
    %p76 = scmp.eq.s32.totalorder %s14, 0
    %p77 = por %p75, %p76
    %p78 = scmp.ne.s32.totalorder %s66, %s67
    %p79 = scmp.eq.s32.totalorder %s15, 1
    %p80 = por %p78, %p79
    %p82 = scmp.ne.s32.totalorder %s67, %s81
    %p83 = scmp.eq.s32.totalorder %s15, 0
    %p84 = por %p82, %p83
    %s85 = ssub.s32 %s9, %s16
    %p86 = scmp.eq.s32.totalorder %s85, 0
    %s88 = sadd.s32 %s87, 1
    %s89 = scalar_select %p86, %s87, %s88
    %p92 = pneg %p86
    %p93 = scmp.eq.s32.totalorder %s9, 1
    %p94 = por %p92, %p93
    %p95 = scmp.ne.s32.totalorder %s87, %s90
    %p96 = scmp.eq.s32.totalorder %s9, 0
    %p97 = por %p95, %p96
    %p98 = scmp.ne.s32.totalorder %s87, %s90
    %p99 = scmp.eq.s32.totalorder %s14, 1
    %p100 = por %p98, %p99
    %p101 = scmp.ne.s32.totalorder %s90, %s91
    %p102 = scmp.eq.s32.totalorder %s14, 0
    %p103 = por %p101, %p102
    %p104 = scmp.ne.s32.totalorder %s90, %s91
    %p105 = scmp.eq.s32.totalorder %s15, 1
    %p106 = por %p104, %p105
    %p108 = scmp.ne.s32.totalorder %s91, %s107
    %p109 = scmp.eq.s32.totalorder %s15, 0
    %p110 = por %p108, %p109
    %p111 = scmp.le.s32.totalorder 1, %s9
    %p112 = scmp.lt.s32.totalorder %s9, 3
    %p113 = pnand %p111, %p112
    %p114 = pneg %p113
    // Predicated region
    $region9: #{separation_forward.1} parent=5 // pred_check
      _
    $region10: #{separation_forward.1} parent=5 // pred_check_branch
      %116 = sbr.rel (%p113) target = $region12
    $region11: #{separation_forward.1} parent=5 // pred_region
      %s117 = ssub.s32 %s9, 1
      // Predicated region
      $region13: #{separation_forward.1} parent=11 // pred_check
        %p118 = pneg %p56
      $region14: #{separation_forward.1} parent=11 // pred_check_branch
        %120 = sbr.rel (%p118) target = $region16
      $region15: #{separation_forward.1} parent=11 // pred_region
        _
      $region16: #{separation_forward.1} parent=11 // pred_fallthru
        _
      // Predicated region
      $region17: #{separation_forward.1} parent=11 // pred_check
        %p121 = pneg %p77
      $region18: #{separation_forward.1} parent=11 // pred_check_branch
        %123 = sbr.rel (%p121) target = $region20
      $region19: #{separation_forward.1} parent=11 // pred_region
        _
      $region20: #{separation_forward.1} parent=11 // pred_fallthru
        _
    $region12: #{separation_forward.1} parent=5 // pred_fallthru
      _
    %p124 = scmp.lt.s32.totalorder %s9, 2
    // Predicated region
    $region21: #{separation_forward.1} parent=5 // pred_check
      %p125 = pneg %p124
    $region22: #{separation_forward.1} parent=5 // pred_check_branch
      %127 = sbr.rel (%p125) target = $region24
    $region23: #{separation_forward.1} parent=5 // pred_region
      // Predicated region
      $region25: #{separation_forward.1} parent=23 // pred_check
        %p128 = pneg %p29
      $region26: #{separation_forward.1} parent=23 // pred_check_branch
        %130 = sbr.rel (%p128) target = $region28
      $region27: #{separation_forward.1} parent=23 // pred_region
        %p131 = scmp.lt.s32.totalorder %s9, 1
        %s132 = scalar_select %p131, %s9, 1
        %s133 = smul.addr %s132, 8
        %s134 = smul.addr %s133, 8
        %s135 = scalar_lea.vmem %s0, %s134
      $region28: #{separation_forward.1} parent=23 // pred_fallthru
        _
    $region24: #{separation_forward.1} parent=5 // pred_fallthru
      _
    %p136 = scmp.le.s32.totalorder 1, %s9
    %p137 = scmp.lt.s32.totalorder %s9, 3
    %p138 = pnand %p136, %p137
    %p139 = pneg %p138
    // Predicated region
    $region29: #{separation_forward.1} parent=5 // pred_check
      _
    $region30: #{separation_forward.1} parent=5 // pred_check_branch
      %141 = sbr.rel (%p138) target = $region32
    $region31: #{separation_forward.1} parent=5 // pred_region
      %s142 = ssub.s32 %s9, 1
      %p143 = scmp.lt.s32.totalorder %s14, 1
      %s144 = scalar_select %p143, %s14, 1
      %s145 = smul.addr %s144, 8
      %s146 = smul.addr %s145, 8
      %s147 = scalar_lea.vmem %s0, %s146
      %p148 = pneg %p35
      %p149 = pneg %p32
      %p150 = pneg %p56
      %p151 = pneg %p53
      %p152 = pneg %p77
      %p153 = pneg %p74
      %p154 = pneg %p103
      %p155 = pneg %p100
      %p156 = scmp.lt.s32.totalorder %s14, 1
      %s157 = scalar_select %p156, %s14, 1
      %s158 = smul.addr %s157, 8
      %s159 = smul.addr %s158, 8
      %s160 = scalar_lea.vmem %s3, %s159
      %p161 = scmp.lt.s32.totalorder %s14, 1
      %s162 = scalar_select %p161, %s14, 1
      %s163 = smul.addr %s162, 8
      %s164 = smul.addr %s163, 8
      %s165 = scalar_lea.vmem %s0, %s164
      %p166 = scmp.lt.s32.totalorder %s14, 1
      %s167 = scalar_select %p166, %s14, 1
      %s168 = smul.addr %s167, 8
      %s169 = smul.addr %s168, 8
      %s170 = scalar_lea.vmem %s3, %s169
      %v171 = vld [vmem:[%s165] sm:$0xff]
      %v172 = vld [vmem:[%s165 + $0x8] sm:$0xff]
      %v173 = vld [vmem:[%s165 + $0x10] sm:$0xff]
      %v174 = vld [vmem:[%s165 + $0x18] sm:$0xff]
      %v175 = vld [vmem:[%s165 + $0x20] sm:$0xff]
      %v176 = vld [vmem:[%s165 + $0x28] sm:$0xff]
      %v177 = vld [vmem:[%s165 + $0x30] sm:$0xff]
      %v178 = vld [vmem:[%s165 + $0x38] sm:$0xff]
      %v179 = vld [vmem:[%s1] sm:$0xff]
      %v180 = vld [vmem:[%s1 + $0x8] sm:$0xff]
      %v181 = vld [vmem:[%s1 + $0x13] sm:$0x1]
      %v182 = vld [vmem:[%s1 + $0x14] sm:$0x1]
      %v183 = vld [vmem:[%s1 + $0x15] sm:$0x1]
      %v184 = vld [vmem:[%s1 + $0x16] sm:$0x1]
      %v185 = vld [vmem:[%s1 + $0x17] sm:$0x1]
      %v186 = vld [vmem:[%s1 + $0x18] sm:$0x1]
      %v187 = vld [vmem:[%s1 + $0x19] sm:$0x1]
      %v188 = vld [vmem:[%s1 + $0x1a] sm:$0x1]
      %v189 = vld [vmem:[%s2] sm:$0xff]
      %v190 = vld [vmem:[%s2 + $0x8] sm:$0xff]
      %v191 = vld [vmem:[%s2 + $0x10] sm:$0xff]
      %v192 = vld [vmem:[%s2 + $0x18] sm:$0xff]
      %v193 = vld [vmem:[%s2 + $0x20] sm:$0x1]
      %v194 = vlaneseq
      %v195 = vshrl.u32 %v194, 7
      %v196 = vsub.s32 0, %v195
      %v197 = vrot.slane %v181, %v196
      %vm198 = vcmask 130048
      %v200 = vsel %vm198, %v171, 0
      %v203 = vsel %vm198, %v172, 0
      %v206 = vsel %vm198, %v173, 0
      %v209 = vsel %vm198, %v174, 0
      %v212 = vsel %vm198, %v175, 0
      %v215 = vsel %vm198, %v176, 0
      %v218 = vsel %vm198, %v177, 0
      %v221 = vsel %vm198, %v178, 0
      %223 = vmatprep.subr.mxu0 0.0
      %224 = vmatpush1.msra.mxu0 %v179
      %225 = vmatprep.subr.mxu0 0.0
      %226 = vmatpush1.msra.mxu0 %v180
      %227 = vmatprep.subr.mxu0 0.0
      %228 = vmatpush1.msra.mxu0 0.0
      %229 = vmatprep.subr.mxu0 0.0
      %230 = vmatpush1.msra.mxu0 0.0
      %231 = vmatprep.subr.mxu0 0.0
      %232 = vmatpush1.msra.mxu0 0.0
      %233 = vmatprep.subr.mxu0 0.0
      %234 = vmatpush1.msra.mxu0 0.0
      %235 = vmatprep.subr.mxu0 0.0
      %236 = vmatpush1.msra.mxu0 0.0
      %237 = vmatprep.subr.mxu0 0.0
      %238 = vmatpush1.msra.mxu0 0.0
      %239 = vmatprep.subr.mxu0 0.0
      %240 = vmatpush1.msra.mxu0 0.0
      %241 = vmatprep.subr.mxu0 0.0
      %242 = vmatpush1.msra.mxu0 0.0
      %243 = vmatprep.subr.mxu0 0.0
      %244 = vmatpush1.msra.mxu0 0.0
      %245 = vmatprep.subr.mxu0 0.0
      %246 = vmatpush1.msra.mxu0 0.0
      %247 = vmatprep.subr.mxu0 0.0
      %248 = vmatpush1.msra.mxu0 0.0
      %249 = vmatprep.subr.mxu0 0.0
      %250 = vmatpush1.msra.mxu0 0.0
      %251 = vmatprep.subr.mxu0 0.0
      %252 = vmatpush1.msra.mxu0 0.0
      %253 = vmatprep.subr.mxu0 0.0
      %254 = vmatpush1.msra.mxu0 0.0
      %255 = vmatprep.subr.mxu0 0.0
      %256 = vmatpush1.msra.mxu0 0.0
      %257 = vmatprep.subr.mxu0 0.0
      %258 = vmatpush1.msra.mxu0 0.0
      %259 = vmatprep.subr.mxu0 0.0
      %260 = vmatpush1.msra.mxu0 0.0
      %261 = vmatprep.subr.mxu0 0.0
      %262 = vmatpush1.msra.mxu0 0.0
      %263 = vmatprep.subr.mxu0 0.0
      %264 = vmatpush1.msra.mxu0 0.0
      %265 = vmatprep.subr.mxu0 0.0
      %266 = vmatpush1.msra.mxu0 0.0
      %267 = vmatprep.subr.mxu0 0.0
      %268 = vmatpush1.msra.mxu0 0.0
      %269 = vmatprep.subr.mxu0 0.0
      %270 = vmatpush1.msra.mxu0 0.0
      %271 = vmatprep.subr.mxu0 0.0
      %272 = vmatpush1.msra.mxu0 0.0
      %273 = vmatprep.subr.mxu0 0.0
      %274 = vmatpush1.msra.mxu0 0.0
      %275 = vmatprep.subr.mxu0 0.0
      %276 = vmatpush1.msra.mxu0 0.0
      %277 = vmatprep.subr.mxu0 0.0
      %278 = vmatpush1.msra.mxu0 0.0
      %279 = vmatprep.subr.mxu0 0.0
      %280 = vmatpush1.msra.mxu0 0.0
      %281 = vmatprep.subr.mxu0 0.0
      %282 = vmatpush1.msra.mxu0 0.0
      %283 = vmatprep.subr.mxu0 0.0
      %284 = vmatpush1.msra.mxu0 0.0
      %285 = vmatprep.subr.mxu0 0.0
      %286 = vmatpush1.msra.mxu0 0.0
      %287 = vmatprep.mubr.f32.mxu0 0.0
      %288 = vmatmul.mubr.f32.gmra.mrb[0].mxu0 %v200
      %v289 = vpop.f32.mrb[0].mxu0
      %v290 = vadd.f32 %v197, %v289
      %v291 = vpop.f32.mrb[0].mxu0
      %292 = vmatprep.mubr.f32.mxu0 0.0
      %293 = vmatmul.mubr.f32.gmra.mrb[0].mxu0 %v203
      %v294 = vpop.f32.mrb[0].mxu0
      %v295 = vadd.f32 %v197, %v294
      %v296 = vpop.f32.mrb[0].mxu0
      %297 = vmatprep.mubr.f32.mxu0 0.0
      %298 = vmatmul.mubr.f32.gmra.mrb[0].mxu0 %v206
      %v299 = vpop.f32.mrb[0].mxu0
      %v300 = vadd.f32 %v197, %v299
      %v301 = vpop.f32.mrb[0].mxu0
      %302 = vmatprep.mubr.f32.mxu0 0.0
      %303 = vmatmul.mubr.f32.gmra.mrb[0].mxu0 %v209
      %v304 = vpop.f32.mrb[0].mxu0
      %v305 = vadd.f32 %v197, %v304
      %v306 = vpop.f32.mrb[0].mxu0
      %307 = vmatprep.mubr.f32.mxu0 0.0
      %308 = vmatmul.mubr.f32.gmra.mrb[0].mxu0 %v212
      %v309 = vpop.f32.mrb[0].mxu0
      %v310 = vadd.f32 %v197, %v309
      %v311 = vpop.f32.mrb[0].mxu0
      %312 = vmatprep.mubr.f32.mxu0 0.0
      %313 = vmatmul.mubr.f32.gmra.mrb[0].mxu0 %v215
      %v314 = vpop.f32.mrb[0].mxu0
      %v315 = vadd.f32 %v197, %v314
      %v316 = vpop.f32.mrb[0].mxu0
      %317 = vmatprep.mubr.f32.mxu0 0.0
      %318 = vmatmul.mubr.f32.gmra.mrb[0].mxu0 %v218
      %v319 = vpop.f32.mrb[0].mxu0
      %v320 = vadd.f32 %v197, %v319
      %v321 = vpop.f32.mrb[0].mxu0
      %322 = vmatprep.mubr.f32.mxu0 0.0
      %323 = vmatmul.mubr.f32.gmra.mrb[0].mxu0 %v221
      %v324 = vpop.f32.mrb[0].mxu0
      %v325 = vadd.f32 %v197, %v324
      %v326 = vpop.f32.mrb[0].mxu0
      %327 = vdwg.mxu0
      %vm328 = vcmp.gt.f32.partialorder %v290, 0.0
      %vm329 = vcmp.gt.f32.partialorder %v295, 0.0
      %vm330 = vcmp.gt.f32.partialorder %v300, 0.0
      %vm331 = vcmp.gt.f32.partialorder %v305, 0.0
      %vm332 = vcmp.gt.f32.partialorder %v310, 0.0
      %vm333 = vcmp.gt.f32.partialorder %v315, 0.0
      %vm334 = vcmp.gt.f32.partialorder %v320, 0.0
      %vm335 = vcmp.gt.f32.partialorder %v325, 0.0
      %v336 = vlaneseq
      %v337 = vshrl.u32 %v336, 7
      %v338 = vsub.s32 0, %v337
      %v339 = vrot.slane %v184, %v338
      %v340 = vmul.f32 %v339, %v290
      %v341 = vmul.f32 %v339, %v295
      %v342 = vmul.f32 %v339, %v300
      %v343 = vmul.f32 %v339, %v305
      %v344 = vmul.f32 %v339, %v310
      %v345 = vmul.f32 %v339, %v315
      %v346 = vmul.f32 %v339, %v320
      %v347 = vmul.f32 %v339, %v325
      %v348 = vsel %vm328, %v290, %v340
      %v349 = vsel %vm329, %v295, %v341
      %v350 = vsel %vm330, %v300, %v342
      %v351 = vsel %vm331, %v305, %v343
      %v352 = vsel %vm332, %v310, %v344
      %v353 = vsel %vm333, %v315, %v345
      %v354 = vsel %vm334, %v320, %v346
      %v355 = vsel %vm335, %v325, %v347
      %vm356 = vcmask 261120
      %v357 = vsel %vm356, %v348, 0.0
      %v358 = vsel %vm356, %v349, 0.0
      %v359 = vadd.f32 %v357, %v358
      %v360 = vsel %vm356, %v350, 0.0
      %v361 = vadd.f32 %v359, %v360
      %v362 = vsel %vm356, %v351, 0.0
      %v363 = vadd.f32 %v361, %v362
      %v364 = vsel %vm356, %v352, 0.0
      %v365 = vadd.f32 %v363, %v364
      %v366 = vsel %vm356, %v353, 0.0
      %v367 = vadd.f32 %v365, %v366
      %v368 = vsel %vm356, %v354, 0.0
      %v369 = vadd.f32 %v367, %v368
      %v370 = vsel %vm356, %v355, 0.0
      %v371 = vadd.f32 %v369, %v370
      %372 = vadd.xlane.f32.xlu0 %v371
      %v373 = vpop.xlane.xlu0 %372
      %v374 = vrot.slane %v373, 4
      %v375 = vadd.f32 %v373, %v374
      %v376 = vrot.slane %v375, 2
      %v377 = vadd.f32 %v375, %v376
      %v378 = vrot.slane %v377, 1
      %v379 = vadd.f32 %v377, %v378
      %s380 = vtos %v379
      %v381 = vmul.f32 %v348, %v348
      %v382 = vmul.f32 %v349, %v349
      %v383 = vmul.f32 %v350, %v350
      %v384 = vmul.f32 %v351, %v351
      %v385 = vmul.f32 %v352, %v352
      %v386 = vmul.f32 %v353, %v353
      %v387 = vmul.f32 %v354, %v354
      %v388 = vmul.f32 %v355, %v355
      %v389 = vsel %vm356, %v381, 0.0
      %v390 = vsel %vm356, %v382, 0.0
      %v391 = vadd.f32 %v389, %v390
      %v392 = vsel %vm356, %v383, 0.0
      %v393 = vadd.f32 %v391, %v392
      %v394 = vsel %vm356, %v384, 0.0
      %v395 = vadd.f32 %v393, %v394
      %v396 = vsel %vm356, %v385, 0.0
      %v397 = vadd.f32 %v395, %v396
      %v398 = vsel %vm356, %v386, 0.0
      %v399 = vadd.f32 %v397, %v398
      %v400 = vsel %vm356, %v387, 0.0
      %v401 = vadd.f32 %v399, %v400
      %v402 = vsel %vm356, %v388, 0.0
      %v403 = vadd.f32 %v401, %v402
      %404 = vadd.xlane.f32.xlu0 %v403
      %v405 = vpop.xlane.xlu0 %404
      %v406 = vrot.slane %v405, 4
      %v407 = vadd.f32 %v405, %v406
      %v408 = vrot.slane %v407, 2
      %v409 = vadd.f32 %v407, %v408
      %v410 = vrot.slane %v409, 1
      %v411 = vadd.f32 %v409, %v410
      %s412 = vtos %v411
      %s413 = smul.f32 %s380, 0.00048828125
      %s414 = smul.f32 %s412, 0.00048828125
      %s415 = smul.f32 %s413, %s413
      %s416 = ssub.f32 %s414, %s415
      %s417 = sadd.f32 %s416, 1e-05
      %v418 = vstv %s417
      %v419 = vrsqrt.pop %v418
      %s420 = vtos %v419
      %v421 = vstv %s413
      %v422 = vsub.f32 %v348, %v421
      %v423 = vsub.f32 %v349, %v421
      %v424 = vsub.f32 %v350, %v421
      %v425 = vsub.f32 %v351, %v421
      %v426 = vsub.f32 %v352, %v421
      %v427 = vsub.f32 %v353, %v421
      %v428 = vsub.f32 %v354, %v421
      %v429 = vsub.f32 %v355, %v421
      %v430 = vstv %s420
      %v431 = vmul.f32 %v182, %v430
      %v432 = vlaneseq
      %v433 = vshrl.u32 %v432, 7
      %v434 = vsub.s32 0, %v433
      %v435 = vrot.slane %v431, %v434
      %v436 = vmul.f32 %v422, %v435
      %v437 = vmul.f32 %v423, %v435
      %v438 = vmul.f32 %v424, %v435
      %v439 = vmul.f32 %v425, %v435
      %v440 = vmul.f32 %v426, %v435
      %v441 = vmul.f32 %v427, %v435
      %v442 = vmul.f32 %v428, %v435
      %v443 = vmul.f32 %v429, %v435
      %v444 = vlaneseq
      %v445 = vshrl.u32 %v444, 7
      %v446 = vsub.s32 0, %v445
      %v447 = vrot.slane %v183, %v446
      %v448 = vadd.f32 %v436, %v447
      %v449 = vadd.f32 %v437, %v447
      %v450 = vadd.f32 %v438, %v447
      %v451 = vadd.f32 %v439, %v447
      %v452 = vadd.f32 %v440, %v447
      %v453 = vadd.f32 %v441, %v447
      %v454 = vadd.f32 %v442, %v447
      %v455 = vadd.f32 %v443, %v447
      %v456 = vld [vmem:[%s1 + $0x10] sm:$0x1]
      %vm465 = vcmask 1040384
      %v466 = vrot.slane %v448, 7
      %v467 = vrot.slane %v449, 7
      %v468 = vsel %vm465, %v466, %v467
      %v469 = vrot.slane %v450, 7
      %v470 = vsel %vm465, %v467, %v469
      %v471 = vrot.slane %v451, 7
      %v472 = vsel %vm465, %v469, %v471
      %v473 = vrot.slane %v452, 7
      %v474 = vsel %vm465, %v471, %v473
      %v475 = vrot.slane %v453, 7
      %v476 = vsel %vm465, %v473, %v475
      %v477 = vrot.slane %v454, 7
      %v478 = vsel %vm465, %v475, %v477
      %v479 = vrot.slane %v455, 7
      %v480 = vsel %vm465, %v477, %v479
      %v489 = vsel %vm465, 0.0, %v466
      %v490 = vlaneseq
      %v491 = vshrl.u32 %v490, 7
      %v492 = vsub.s32 0, %v491
      %v493 = vrot.slane %v456, %v492
      %v494 = vmul.f32 %v489, %v493
      %v495 = vmul.f32 %v468, %v493
      %v496 = vmul.f32 %v470, %v493
      %v497 = vmul.f32 %v472, %v493
      %v498 = vmul.f32 %v474, %v493
      %v499 = vmul.f32 %v476, %v493
      %v500 = vmul.f32 %v478, %v493
      %v501 = vmul.f32 %v480, %v493
      %v502 = vadd.f32 %v494, 0.0
      %v503 = vadd.f32 %v495, 0.0
      %v504 = vadd.f32 %v496, 0.0
      %v505 = vadd.f32 %v497, 0.0
      %v506 = vadd.f32 %v498, 0.0
      %v507 = vadd.f32 %v499, 0.0
      %v508 = vadd.f32 %v500, 0.0
      %v509 = vadd.f32 %v501, 0.0
      %v510 = vld [vmem:[%s1 + $0x11] sm:$0x1]
      %v511 = vlaneseq
      %v512 = vshrl.u32 %v511, 7
      %v513 = vsub.s32 0, %v512
      %v514 = vrot.slane %v510, %v513
      %v515 = vmul.f32 %v448, %v514
      %v516 = vmul.f32 %v449, %v514
      %v517 = vmul.f32 %v450, %v514
      %v518 = vmul.f32 %v451, %v514
      %v519 = vmul.f32 %v452, %v514
      %v520 = vmul.f32 %v453, %v514
      %v521 = vmul.f32 %v454, %v514
      %v522 = vmul.f32 %v455, %v514
      %v523 = vadd.f32 %v502, %v515
      %v524 = vadd.f32 %v503, %v516
      %v525 = vadd.f32 %v504, %v517
      %v526 = vadd.f32 %v505, %v518
      %v527 = vadd.f32 %v506, %v519
      %v528 = vadd.f32 %v507, %v520
      %v529 = vadd.f32 %v508, %v521
      %v530 = vadd.f32 %v509, %v522
      %v531 = vld [vmem:[%s1 + $0x12] sm:$0x1]
      %vm532 = vcmask 1046528
      %v533 = vrot.slane %v448, 1
      %v534 = vrot.slane %v449, 1
      %v535 = vsel %vm532, %v533, %v534
      %v536 = vrot.slane %v450, 1
      %v537 = vsel %vm532, %v534, %v536
      %v538 = vrot.slane %v451, 1
      %v539 = vsel %vm532, %v536, %v538
      %v540 = vrot.slane %v452, 1
      %v541 = vsel %vm532, %v538, %v540
      %v542 = vrot.slane %v453, 1
      %v543 = vsel %vm532, %v540, %v542
      %v544 = vrot.slane %v454, 1
      %v545 = vsel %vm532, %v542, %v544
      %v546 = vrot.slane %v455, 1
      %v547 = vsel %vm532, %v544, %v546
      %v556 = vsel %vm532, %v546, 0.0
      %v557 = vlaneseq
      %v558 = vshrl.u32 %v557, 7
      %v559 = vsub.s32 0, %v558
      %v560 = vrot.slane %v531, %v559
      %v561 = vmul.f32 %v535, %v560
      %v562 = vmul.f32 %v537, %v560
      %v563 = vmul.f32 %v539, %v560
      %v564 = vmul.f32 %v541, %v560
      %v565 = vmul.f32 %v543, %v560
      %v566 = vmul.f32 %v545, %v560
      %v567 = vmul.f32 %v547, %v560
      %v568 = vmul.f32 %v556, %v560
      %v569 = vadd.f32 %v523, %v561
      %v570 = vadd.f32 %v524, %v562
      %v571 = vadd.f32 %v525, %v563
      %v572 = vadd.f32 %v526, %v564
      %v573 = vadd.f32 %v527, %v565
      %v574 = vadd.f32 %v528, %v566
      %v575 = vadd.f32 %v529, %v567
      %v576 = vadd.f32 %v530, %v568
      %v577 = vlaneseq
      %v578 = vshrl.u32 %v577, 7
      %v579 = vsub.s32 0, %v578
      %v580 = vrot.slane %v185, %v579
      %v581 = vadd.f32 %v569, %v580
      %v582 = vadd.f32 %v570, %v580
      %v583 = vadd.f32 %v571, %v580
      %v584 = vadd.f32 %v572, %v580
      %v585 = vadd.f32 %v573, %v580
      %v586 = vadd.f32 %v574, %v580
      %v587 = vadd.f32 %v575, %v580
      %v588 = vadd.f32 %v576, %v580
      %vm589 = vcmp.gt.f32.partialorder %v581, 0.0
      %vm590 = vcmp.gt.f32.partialorder %v582, 0.0
      %vm591 = vcmp.gt.f32.partialorder %v583, 0.0
      %vm592 = vcmp.gt.f32.partialorder %v584, 0.0
      %vm593 = vcmp.gt.f32.partialorder %v585, 0.0
      %vm594 = vcmp.gt.f32.partialorder %v586, 0.0
      %vm595 = vcmp.gt.f32.partialorder %v587, 0.0
      %vm596 = vcmp.gt.f32.partialorder %v588, 0.0
      %v597 = vlaneseq
      %v598 = vshrl.u32 %v597, 7
      %v599 = vsub.s32 0, %v598
      %v600 = vrot.slane %v188, %v599
      %v601 = vmul.f32 %v600, %v581
      %v602 = vmul.f32 %v600, %v582
      %v603 = vmul.f32 %v600, %v583
      %v604 = vmul.f32 %v600, %v584
      %v605 = vmul.f32 %v600, %v585
      %v606 = vmul.f32 %v600, %v586
      %v607 = vmul.f32 %v600, %v587
      %v608 = vmul.f32 %v600, %v588
      %v609 = vsel %vm589, %v581, %v601
      %v610 = vsel %vm590, %v582, %v602
      %v611 = vsel %vm591, %v583, %v603
      %v612 = vsel %vm592, %v584, %v604
      %v613 = vsel %vm593, %v585, %v605
      %v614 = vsel %vm594, %v586, %v606
      %v615 = vsel %vm595, %v587, %v607
      %v616 = vsel %vm596, %v588, %v608
      %v617 = vsel %vm356, %v609, 0.0
      %v618 = vsel %vm356, %v610, 0.0
      %v619 = vadd.f32 %v617, %v618
      %v620 = vsel %vm356, %v611, 0.0
      %v621 = vadd.f32 %v619, %v620
      %v622 = vsel %vm356, %v612, 0.0
      %v623 = vadd.f32 %v621, %v622
      %v624 = vsel %vm356, %v613, 0.0
      %v625 = vadd.f32 %v623, %v624
      %v626 = vsel %vm356, %v614, 0.0
      %v627 = vadd.f32 %v625, %v626
      %v628 = vsel %vm356, %v615, 0.0
      %v629 = vadd.f32 %v627, %v628
      %v630 = vsel %vm356, %v616, 0.0
      %v631 = vadd.f32 %v629, %v630
      %632 = vadd.xlane.f32.xlu0 %v631
      %v633 = vpop.xlane.xlu0 %632
      %v634 = vrot.slane %v633, 4
      %v635 = vadd.f32 %v633, %v634
      %v636 = vrot.slane %v635, 2
      %v637 = vadd.f32 %v635, %v636
      %v638 = vrot.slane %v637, 1
      %v639 = vadd.f32 %v637, %v638
      %s640 = vtos %v639
      %v641 = vmul.f32 %v609, %v609
      %v642 = vmul.f32 %v610, %v610
      %v643 = vmul.f32 %v611, %v611
      %v644 = vmul.f32 %v612, %v612
      %v645 = vmul.f32 %v613, %v613
      %v646 = vmul.f32 %v614, %v614
      %v647 = vmul.f32 %v615, %v615
      %v648 = vmul.f32 %v616, %v616
      %v649 = vsel %vm356, %v641, 0.0
      %v650 = vsel %vm356, %v642, 0.0
      %v651 = vadd.f32 %v649, %v650
      %v652 = vsel %vm356, %v643, 0.0
      %v653 = vadd.f32 %v651, %v652
      %v654 = vsel %vm356, %v644, 0.0
      %v655 = vadd.f32 %v653, %v654
      %v656 = vsel %vm356, %v645, 0.0
      %v657 = vadd.f32 %v655, %v656
      %v658 = vsel %vm356, %v646, 0.0
      %v659 = vadd.f32 %v657, %v658
      %v660 = vsel %vm356, %v647, 0.0
      %v661 = vadd.f32 %v659, %v660
      %v662 = vsel %vm356, %v648, 0.0
      %v663 = vadd.f32 %v661, %v662
      %664 = vadd.xlane.f32.xlu0 %v663
      %v665 = vpop.xlane.xlu0 %664
      %v666 = vrot.slane %v665, 4
      %v667 = vadd.f32 %v665, %v666
      %v668 = vrot.slane %v667, 2
      %v669 = vadd.f32 %v667, %v668
      %v670 = vrot.slane %v669, 1
      %v671 = vadd.f32 %v669, %v670
      %s672 = vtos %v671
      %s673 = smul.f32 %s640, 0.00048828125
      %s674 = smul.f32 %s672, 0.00048828125
      %s675 = smul.f32 %s673, %s673
      %s676 = ssub.f32 %s674, %s675
      %s677 = sadd.f32 %s676, 1e-05
      %v678 = vstv %s677
      %v679 = vrsqrt.pop %v678
      %s680 = vtos %v679
      %v681 = vstv %s673
      %v682 = vsub.f32 %v609, %v681
      %v683 = vsub.f32 %v610, %v681
      %v684 = vsub.f32 %v611, %v681
      %v685 = vsub.f32 %v612, %v681
      %v686 = vsub.f32 %v613, %v681
      %v687 = vsub.f32 %v614, %v681
      %v688 = vsub.f32 %v615, %v681
      %v689 = vsub.f32 %v616, %v681
      %v690 = vstv %s680
      %v691 = vmul.f32 %v186, %v690
      %v692 = vlaneseq
      %v693 = vshrl.u32 %v692, 7
      %v694 = vsub.s32 0, %v693
      %v695 = vrot.slane %v691, %v694
      %v696 = vmul.f32 %v682, %v695
      %v697 = vmul.f32 %v683, %v695
      %v698 = vmul.f32 %v684, %v695
      %v699 = vmul.f32 %v685, %v695
      %v700 = vmul.f32 %v686, %v695
      %v701 = vmul.f32 %v687, %v695
      %v702 = vmul.f32 %v688, %v695
      %v703 = vmul.f32 %v689, %v695
      %v704 = vlaneseq
      %v705 = vshrl.u32 %v704, 7
      %v706 = vsub.s32 0, %v705
      %v707 = vrot.slane %v187, %v706
      %v708 = vadd.f32 %v696, %v707
      %v709 = vadd.f32 %v697, %v707
      %v710 = vadd.f32 %v698, %v707
      %v711 = vadd.f32 %v699, %v707
      %v712 = vadd.f32 %v700, %v707
      %v713 = vadd.f32 %v701, %v707
      %v714 = vadd.f32 %v702, %v707
      %v715 = vadd.f32 %v703, %v707
      %v716 = vlaneseq
      %v717 = vshrl.u32 %v716, 7
      %v718 = vsub.s32 0, %v717
      %v719 = vrot.slane %v193, %v718
      %v721 = vsel %vm356, %v708, 0
      %v724 = vsel %vm356, %v709, 0
      %v727 = vsel %vm356, %v710, 0
      %v730 = vsel %vm356, %v711, 0
      %v733 = vsel %vm356, %v712, 0
      %v736 = vsel %vm356, %v713, 0
      %v739 = vsel %vm356, %v714, 0
      %v742 = vsel %vm356, %v715, 0
      %744 = vmatprep.subr.mxu0 0.0
      %745 = vmatpush1.msra.mxu0 %v189
      %746 = vmatprep.subr.mxu0 0.0
      %747 = vmatpush1.msra.mxu0 %v190
      %748 = vmatprep.subr.mxu0 0.0
      %749 = vmatpush1.msra.mxu0 %v191
      %750 = vmatprep.subr.mxu0 0.0
      %751 = vmatpush1.msra.mxu0 %v192
      %752 = vmatprep.subr.mxu0 0.0
      %753 = vmatpush1.msra.mxu0 0.0
      %754 = vmatprep.subr.mxu0 0.0
      %755 = vmatpush1.msra.mxu0 0.0
      %756 = vmatprep.subr.mxu0 0.0
      %757 = vmatpush1.msra.mxu0 0.0
      %758 = vmatprep.subr.mxu0 0.0
      %759 = vmatpush1.msra.mxu0 0.0
      %760 = vmatprep.subr.mxu0 0.0
      %761 = vmatpush1.msra.mxu0 0.0
      %762 = vmatprep.subr.mxu0 0.0
      %763 = vmatpush1.msra.mxu0 0.0
      %764 = vmatprep.subr.mxu0 0.0
      %765 = vmatpush1.msra.mxu0 0.0
      %766 = vmatprep.subr.mxu0 0.0
      %767 = vmatpush1.msra.mxu0 0.0
      %768 = vmatprep.subr.mxu0 0.0
      %769 = vmatpush1.msra.mxu0 0.0
      %770 = vmatprep.subr.mxu0 0.0
      %771 = vmatpush1.msra.mxu0 0.0
      %772 = vmatprep.subr.mxu0 0.0
      %773 = vmatpush1.msra.mxu0 0.0
      %774 = vmatprep.subr.mxu0 0.0
      %775 = vmatpush1.msra.mxu0 0.0
      %776 = vmatprep.subr.mxu0 0.0
      %777 = vmatpush1.msra.mxu0 0.0
      %778 = vmatprep.subr.mxu0 0.0
      %779 = vmatpush1.msra.mxu0 0.0
      %780 = vmatprep.subr.mxu0 0.0
      %781 = vmatpush1.msra.mxu0 0.0
      %782 = vmatprep.subr.mxu0 0.0
      %783 = vmatpush1.msra.mxu0 0.0
      %784 = vmatprep.subr.mxu0 0.0
      %785 = vmatpush1.msra.mxu0 0.0
      %786 = vmatprep.subr.mxu0 0.0
      %787 = vmatpush1.msra.mxu0 0.0
      %788 = vmatprep.subr.mxu0 0.0
      %789 = vmatpush1.msra.mxu0 0.0
      %790 = vmatprep.subr.mxu0 0.0
      %791 = vmatpush1.msra.mxu0 0.0
      %792 = vmatprep.subr.mxu0 0.0
      %793 = vmatpush1.msra.mxu0 0.0
      %794 = vmatprep.subr.mxu0 0.0
      %795 = vmatpush1.msra.mxu0 0.0
      %796 = vmatprep.subr.mxu0 0.0
      %797 = vmatpush1.msra.mxu0 0.0
      %798 = vmatprep.subr.mxu0 0.0
      %799 = vmatpush1.msra.mxu0 0.0
      %800 = vmatprep.subr.mxu0 0.0
      %801 = vmatpush1.msra.mxu0 0.0
      %802 = vmatprep.subr.mxu0 0.0
      %803 = vmatpush1.msra.mxu0 0.0
      %804 = vmatprep.subr.mxu0 0.0
      %805 = vmatpush1.msra.mxu0 0.0
      %806 = vmatprep.subr.mxu0 0.0
      %807 = vmatpush1.msra.mxu0 0.0
      %808 = vmatprep.mubr.f32.mxu0 0.0
      %809 = vmatmul.mubr.f32.gmra.mrb[0].mxu0 %v721
      %v810 = vpop.f32.mrb[0].mxu0
      %v811 = vadd.f32 %v719, %v810
      %v812 = vpop.f32.mrb[0].mxu0
      %813 = vmatprep.mubr.f32.mxu0 0.0
      %814 = vmatmul.mubr.f32.gmra.mrb[0].mxu0 %v724
      %v815 = vpop.f32.mrb[0].mxu0
      %v816 = vadd.f32 %v719, %v815
      %v817 = vpop.f32.mrb[0].mxu0
      %818 = vmatprep.mubr.f32.mxu0 0.0
      %819 = vmatmul.mubr.f32.gmra.mrb[0].mxu0 %v727
      %v820 = vpop.f32.mrb[0].mxu0
      %v821 = vadd.f32 %v719, %v820
      %v822 = vpop.f32.mrb[0].mxu0
      %823 = vmatprep.mubr.f32.mxu0 0.0
      %824 = vmatmul.mubr.f32.gmra.mrb[0].mxu0 %v730
      %v825 = vpop.f32.mrb[0].mxu0
      %v826 = vadd.f32 %v719, %v825
      %v827 = vpop.f32.mrb[0].mxu0
      %828 = vmatprep.mubr.f32.mxu0 0.0
      %829 = vmatmul.mubr.f32.gmra.mrb[0].mxu0 %v733
      %v830 = vpop.f32.mrb[0].mxu0
      %v831 = vadd.f32 %v719, %v830
      %v832 = vpop.f32.mrb[0].mxu0
      %833 = vmatprep.mubr.f32.mxu0 0.0
      %834 = vmatmul.mubr.f32.gmra.mrb[0].mxu0 %v736
      %v835 = vpop.f32.mrb[0].mxu0
      %v836 = vadd.f32 %v719, %v835
      %v837 = vpop.f32.mrb[0].mxu0
      %838 = vmatprep.mubr.f32.mxu0 0.0
      %839 = vmatmul.mubr.f32.gmra.mrb[0].mxu0 %v739
      %v840 = vpop.f32.mrb[0].mxu0
      %v841 = vadd.f32 %v719, %v840
      %v842 = vpop.f32.mrb[0].mxu0
      %843 = vmatprep.mubr.f32.mxu0 0.0
      %844 = vmatmul.mubr.f32.gmra.mrb[0].mxu0 %v742
      %v845 = vpop.f32.mrb[0].mxu0
      %v846 = vadd.f32 %v719, %v845
      %v847 = vpop.f32.mrb[0].mxu0
      %848 = vdwg.mxu0
      %v849 = vadd.f32 %v811, 0.0
      %v850 = vadd.f32 %v816, 0.0
      %v851 = vadd.f32 %v821, 0.0
      %v852 = vadd.f32 %v826, 0.0
      %v853 = vadd.f32 %v831, 0.0
      %v854 = vadd.f32 %v836, 0.0
      %v855 = vadd.f32 %v841, 0.0
      %v856 = vadd.f32 %v846, 0.0
      %865 = vrot.lane.b32.xlu0 %v811, 112
      %v866 = vpop.permute.xlu0 %865
      %867 = vrot.lane.b32.xlu0 %v816, 112
      %v868 = vpop.permute.xlu0 %867
      %869 = vrot.lane.b32.xlu0 %v821, 112
      %v870 = vpop.permute.xlu0 %869
      %871 = vrot.lane.b32.xlu0 %v826, 112
      %v872 = vpop.permute.xlu0 %871
      %873 = vrot.lane.b32.xlu0 %v831, 112
      %v874 = vpop.permute.xlu0 %873
      %875 = vrot.lane.b32.xlu0 %v836, 112
      %v876 = vpop.permute.xlu0 %875
      %877 = vrot.lane.b32.xlu0 %v841, 112
      %v878 = vpop.permute.xlu0 %877
      %879 = vrot.lane.b32.xlu0 %v846, 112
      %v880 = vpop.permute.xlu0 %879
      %v889 = vadd.f32 %v171, %v866
      %v890 = vadd.f32 %v172, %v868
      %v891 = vadd.f32 %v173, %v870
      %v892 = vadd.f32 %v174, %v872
      %v893 = vadd.f32 %v175, %v874
      %v894 = vadd.f32 %v176, %v876
      %v895 = vadd.f32 %v177, %v878
      %v896 = vadd.f32 %v178, %v880
      %s897 = scalar_lea.vmem %s1, 32
      %v898 = vld [vmem:[%s897] sm:$0xff]
      %v899 = vld [vmem:[%s897 + $0x8] sm:$0xff]
      %v900 = vld [vmem:[%s897 + $0x13] sm:$0x1]
      %v901 = vld [vmem:[%s897 + $0x14] sm:$0x1]
      %v902 = vld [vmem:[%s897 + $0x15] sm:$0x1]
      %v903 = vld [vmem:[%s897 + $0x16] sm:$0x1]
      %v904 = vld [vmem:[%s897 + $0x17] sm:$0x1]
      %v905 = vld [vmem:[%s897 + $0x18] sm:$0x1]
      %v906 = vld [vmem:[%s897 + $0x19] sm:$0x1]
      %v907 = vld [vmem:[%s897 + $0x1a] sm:$0x1]
      %s908 = scalar_lea.vmem %s2, 40
      %v909 = vld [vmem:[%s908] sm:$0xff]
      %v910 = vld [vmem:[%s908 + $0x8] sm:$0xff]
      %v911 = vld [vmem:[%s908 + $0x10] sm:$0xff]
      %v912 = vld [vmem:[%s908 + $0x18] sm:$0xff]
      %v913 = vld [vmem:[%s908 + $0x20] sm:$0x1]
      %v914 = vlaneseq
      %v915 = vshrl.u32 %v914, 7
      %v916 = vsub.s32 0, %v915
      %v917 = vrot.slane %v900, %v916
      %v919 = vsel %vm198, %v889, 0
      %v922 = vsel %vm198, %v890, 0
      %v925 = vsel %vm198, %v891, 0
      %v928 = vsel %vm198, %v892, 0
      %v931 = vsel %vm198, %v893, 0
      %v934 = vsel %vm198, %v894, 0
      %v937 = vsel %vm198, %v895, 0
      %v940 = vsel %vm198, %v896, 0
      %942 = vmatprep.subr.mxu0 0.0
      %943 = vmatpush1.msra.mxu0 %v898
      %944 = vmatprep.subr.mxu0 0.0
      %945 = vmatpush1.msra.mxu0 %v899
      %946 = vmatprep.subr.mxu0 0.0
      %947 = vmatpush1.msra.mxu0 0.0
      %948 = vmatprep.subr.mxu0 0.0
      %949 = vmatpush1.msra.mxu0 0.0
      %950 = vmatprep.subr.mxu0 0.0
      %951 = vmatpush1.msra.mxu0 0.0
      %952 = vmatprep.subr.mxu0 0.0
      %953 = vmatpush1.msra.mxu0 0.0
      %954 = vmatprep.subr.mxu0 0.0
      %955 = vmatpush1.msra.mxu0 0.0
      %956 = vmatprep.subr.mxu0 0.0
      %957 = vmatpush1.msra.mxu0 0.0
      %958 = vmatprep.subr.mxu0 0.0
      %959 = vmatpush1.msra.mxu0 0.0
      %960 = vmatprep.subr.mxu0 0.0
      %961 = vmatpush1.msra.mxu0 0.0
      %962 = vmatprep.subr.mxu0 0.0
      %963 = vmatpush1.msra.mxu0 0.0
      %964 = vmatprep.subr.mxu0 0.0
      %965 = vmatpush1.msra.mxu0 0.0
      %966 = vmatprep.subr.mxu0 0.0
      %967 = vmatpush1.msra.mxu0 0.0
      %968 = vmatprep.subr.mxu0 0.0
      %969 = vmatpush1.msra.mxu0 0.0
      %970 = vmatprep.subr.mxu0 0.0
      %971 = vmatpush1.msra.mxu0 0.0
      %972 = vmatprep.subr.mxu0 0.0
      %973 = vmatpush1.msra.mxu0 0.0
      %974 = vmatprep.subr.mxu0 0.0
      %975 = vmatpush1.msra.mxu0 0.0
      %976 = vmatprep.subr.mxu0 0.0
      %977 = vmatpush1.msra.mxu0 0.0
      %978 = vmatprep.subr.mxu0 0.0
      %979 = vmatpush1.msra.mxu0 0.0
      %980 = vmatprep.subr.mxu0 0.0
      %981 = vmatpush1.msra.mxu0 0.0
      %982 = vmatprep.subr.mxu0 0.0
      %983 = vmatpush1.msra.mxu0 0.0
      %984 = vmatprep.subr.mxu0 0.0
      %985 = vmatpush1.msra.mxu0 0.0
      %986 = vmatprep.subr.mxu0 0.0
      %987 = vmatpush1.msra.mxu0 0.0
      %988 = vmatprep.subr.mxu0 0.0
      %989 = vmatpush1.msra.mxu0 0.0
      %990 = vmatprep.subr.mxu0 0.0
      %991 = vmatpush1.msra.mxu0 0.0
      %992 = vmatprep.subr.mxu0 0.0
      %993 = vmatpush1.msra.mxu0 0.0
      %994 = vmatprep.subr.mxu0 0.0
      %995 = vmatpush1.msra.mxu0 0.0
      %996 = vmatprep.subr.mxu0 0.0
      %997 = vmatpush1.msra.mxu0 0.0
      %998 = vmatprep.subr.mxu0 0.0
      %999 = vmatpush1.msra.mxu0 0.0
      %1000 = vmatprep.subr.mxu0 0.0
      %1001 = vmatpush1.msra.mxu0 0.0
      %1002 = vmatprep.subr.mxu0 0.0
      %1003 = vmatpush1.msra.mxu0 0.0
      %1004 = vmatprep.subr.mxu0 0.0
      %1005 = vmatpush1.msra.mxu0 0.0
      %1006 = vmatprep.mubr.f32.mxu0 0.0
      %1007 = vmatmul.mubr.f32.gmra.mrb[0].mxu0 %v919
      %v1008 = vpop.f32.mrb[0].mxu0
      %v1009 = vadd.f32 %v917, %v1008
      %v1010 = vpop.f32.mrb[0].mxu0
      %1011 = vmatprep.mubr.f32.mxu0 0.0
      %1012 = vmatmul.mubr.f32.gmra.mrb[0].mxu0 %v922
      %v1013 = vpop.f32.mrb[0].mxu0
      %v1014 = vadd.f32 %v917, %v1013
      %v1015 = vpop.f32.mrb[0].mxu0
      %1016 = vmatprep.mubr.f32.mxu0 0.0
      %1017 = vmatmul.mubr.f32.gmra.mrb[0].mxu0 %v925
      %v1018 = vpop.f32.mrb[0].mxu0
      %v1019 = vadd.f32 %v917, %v1018
      %v1020 = vpop.f32.mrb[0].mxu0
      %1021 = vmatprep.mubr.f32.mxu0 0.0
      %1022 = vmatmul.mubr.f32.gmra.mrb[0].mxu0 %v928
      %v1023 = vpop.f32.mrb[0].mxu0
      %v1024 = vadd.f32 %v917, %v1023
      %v1025 = vpop.f32.mrb[0].mxu0
      %1026 = vmatprep.mubr.f32.mxu0 0.0
      %1027 = vmatmul.mubr.f32.gmra.mrb[0].mxu0 %v931
      %v1028 = vpop.f32.mrb[0].mxu0
      %v1029 = vadd.f32 %v917, %v1028
      %v1030 = vpop.f32.mrb[0].mxu0
      %1031 = vmatprep.mubr.f32.mxu0 0.0
      %1032 = vmatmul.mubr.f32.gmra.mrb[0].mxu0 %v934
      %v1033 = vpop.f32.mrb[0].mxu0
      %v1034 = vadd.f32 %v917, %v1033
      %v1035 = vpop.f32.mrb[0].mxu0
      %1036 = vmatprep.mubr.f32.mxu0 0.0
      %1037 = vmatmul.mubr.f32.gmra.mrb[0].mxu0 %v937
      %v1038 = vpop.f32.mrb[0].mxu0
      %v1039 = vadd.f32 %v917, %v1038
      %v1040 = vpop.f32.mrb[0].mxu0
      %1041 = vmatprep.mubr.f32.mxu0 0.0
      %1042 = vmatmul.mubr.f32.gmra.mrb[0].mxu0 %v940
      %v1043 = vpop.f32.mrb[0].mxu0
      %v1044 = vadd.f32 %v917, %v1043
      %v1045 = vpop.f32.mrb[0].mxu0
      %1046 = vdwg.mxu0
      %vm1047 = vcmp.gt.f32.partialorder %v1009, 0.0
      %vm1048 = vcmp.gt.f32.partialorder %v1014, 0.0
      %vm1049 = vcmp.gt.f32.partialorder %v1019, 0.0
      %vm1050 = vcmp.gt.f32.partialorder %v1024, 0.0
      %vm1051 = vcmp.gt.f32.partialorder %v1029, 0.0
      %vm1052 = vcmp.gt.f32.partialorder %v1034, 0.0
      %vm1053 = vcmp.gt.f32.partialorder %v1039, 0.0
      %vm1054 = vcmp.gt.f32.partialorder %v1044, 0.0
      %v1055 = vlaneseq
      %v1056 = vshrl.u32 %v1055, 7
      %v1057 = vsub.s32 0, %v1056
      %v1058 = vrot.slane %v903, %v1057
      %v1059 = vmul.f32 %v1058, %v1009
      %v1060 = vmul.f32 %v1058, %v1014
      %v1061 = vmul.f32 %v1058, %v1019
      %v1062 = vmul.f32 %v1058, %v1024
      %v1063 = vmul.f32 %v1058, %v1029
      %v1064 = vmul.f32 %v1058, %v1034
      %v1065 = vmul.f32 %v1058, %v1039
      %v1066 = vmul.f32 %v1058, %v1044
      %v1067 = vsel %vm1047, %v1009, %v1059
      %v1068 = vsel %vm1048, %v1014, %v1060
      %v1069 = vsel %vm1049, %v1019, %v1061
      %v1070 = vsel %vm1050, %v1024, %v1062
      %v1071 = vsel %vm1051, %v1029, %v1063
      %v1072 = vsel %vm1052, %v1034, %v1064
      %v1073 = vsel %vm1053, %v1039, %v1065
      %v1074 = vsel %vm1054, %v1044, %v1066
      %v1075 = vsel %vm356, %v1067, 0.0
      %v1076 = vsel %vm356, %v1068, 0.0
      %v1077 = vadd.f32 %v1075, %v1076
      %v1078 = vsel %vm356, %v1069, 0.0
      %v1079 = vadd.f32 %v1077, %v1078
      %v1080 = vsel %vm356, %v1070, 0.0
      %v1081 = vadd.f32 %v1079, %v1080
      %v1082 = vsel %vm356, %v1071, 0.0
      %v1083 = vadd.f32 %v1081, %v1082
      %v1084 = vsel %vm356, %v1072, 0.0
      %v1085 = vadd.f32 %v1083, %v1084
      %v1086 = vsel %vm356, %v1073, 0.0
      %v1087 = vadd.f32 %v1085, %v1086
      %v1088 = vsel %vm356, %v1074, 0.0
      %v1089 = vadd.f32 %v1087, %v1088
      %1090 = vadd.xlane.f32.xlu0 %v1089
      %v1091 = vpop.xlane.xlu0 %1090
      %v1092 = vrot.slane %v1091, 4
      %v1093 = vadd.f32 %v1091, %v1092
      %v1094 = vrot.slane %v1093, 2
      %v1095 = vadd.f32 %v1093, %v1094
      %v1096 = vrot.slane %v1095, 1
      %v1097 = vadd.f32 %v1095, %v1096
      %s1098 = vtos %v1097
      %v1099 = vmul.f32 %v1067, %v1067
      %v1100 = vmul.f32 %v1068, %v1068
      %v1101 = vmul.f32 %v1069, %v1069
      %v1102 = vmul.f32 %v1070, %v1070
      %v1103 = vmul.f32 %v1071, %v1071
      %v1104 = vmul.f32 %v1072, %v1072
      %v1105 = vmul.f32 %v1073, %v1073
      %v1106 = vmul.f32 %v1074, %v1074
      %v1107 = vsel %vm356, %v1099, 0.0
      %v1108 = vsel %vm356, %v1100, 0.0
      %v1109 = vadd.f32 %v1107, %v1108
      %v1110 = vsel %vm356, %v1101, 0.0
      %v1111 = vadd.f32 %v1109, %v1110
      %v1112 = vsel %vm356, %v1102, 0.0
      %v1113 = vadd.f32 %v1111, %v1112
      %v1114 = vsel %vm356, %v1103, 0.0
      %v1115 = vadd.f32 %v1113, %v1114
      %v1116 = vsel %vm356, %v1104, 0.0
      %v1117 = vadd.f32 %v1115, %v1116
      %v1118 = vsel %vm356, %v1105, 0.0
      %v1119 = vadd.f32 %v1117, %v1118
      %v1120 = vsel %vm356, %v1106, 0.0
      %v1121 = vadd.f32 %v1119, %v1120
      %1122 = vadd.xlane.f32.xlu0 %v1121
      %v1123 = vpop.xlane.xlu0 %1122
      %v1124 = vrot.slane %v1123, 4
      %v1125 = vadd.f32 %v1123, %v1124
      %v1126 = vrot.slane %v1125, 2
      %v1127 = vadd.f32 %v1125, %v1126
      %v1128 = vrot.slane %v1127, 1
      %v1129 = vadd.f32 %v1127, %v1128
      %s1130 = vtos %v1129
      %s1131 = smul.f32 %s1098, 0.00048828125
      %s1132 = smul.f32 %s1130, 0.00048828125
      %s1133 = smul.f32 %s1131, %s1131
      %s1134 = ssub.f32 %s1132, %s1133
      %s1135 = sadd.f32 %s1134, 1e-05
      %v1136 = vstv %s1135
      %v1137 = vrsqrt.pop %v1136
      %s1138 = vtos %v1137
      %v1139 = vstv %s1131
      %v1140 = vsub.f32 %v1067, %v1139
      %v1141 = vsub.f32 %v1068, %v1139
      %v1142 = vsub.f32 %v1069, %v1139
      %v1143 = vsub.f32 %v1070, %v1139
      %v1144 = vsub.f32 %v1071, %v1139
      %v1145 = vsub.f32 %v1072, %v1139
      %v1146 = vsub.f32 %v1073, %v1139
      %v1147 = vsub.f32 %v1074, %v1139
      %v1148 = vstv %s1138
      %v1149 = vmul.f32 %v901, %v1148
      %v1150 = vlaneseq
      %v1151 = vshrl.u32 %v1150, 7
      %v1152 = vsub.s32 0, %v1151
      %v1153 = vrot.slane %v1149, %v1152
      %v1154 = vmul.f32 %v1140, %v1153
      %v1155 = vmul.f32 %v1141, %v1153
      %v1156 = vmul.f32 %v1142, %v1153
      %v1157 = vmul.f32 %v1143, %v1153
      %v1158 = vmul.f32 %v1144, %v1153
      %v1159 = vmul.f32 %v1145, %v1153
      %v1160 = vmul.f32 %v1146, %v1153
      %v1161 = vmul.f32 %v1147, %v1153
      %v1162 = vlaneseq
      %v1163 = vshrl.u32 %v1162, 7
      %v1164 = vsub.s32 0, %v1163
      %v1165 = vrot.slane %v902, %v1164
      %v1166 = vadd.f32 %v1154, %v1165
      %v1167 = vadd.f32 %v1155, %v1165
      %v1168 = vadd.f32 %v1156, %v1165
      %v1169 = vadd.f32 %v1157, %v1165
      %v1170 = vadd.f32 %v1158, %v1165
      %v1171 = vadd.f32 %v1159, %v1165
      %v1172 = vadd.f32 %v1160, %v1165
      %v1173 = vadd.f32 %v1161, %v1165
      %v1174 = vld [vmem:[%s897 + $0x10] sm:$0x1]
      %vm1183 = vcmask 1041408
      %v1184 = vrot.slane %v1166, 6
      %v1185 = vrot.slane %v1167, 6
      %v1186 = vsel %vm1183, %v1184, %v1185
      %v1187 = vrot.slane %v1168, 6
      %v1188 = vsel %vm1183, %v1185, %v1187
      %v1189 = vrot.slane %v1169, 6
      %v1190 = vsel %vm1183, %v1187, %v1189
      %v1191 = vrot.slane %v1170, 6
      %v1192 = vsel %vm1183, %v1189, %v1191
      %v1193 = vrot.slane %v1171, 6
      %v1194 = vsel %vm1183, %v1191, %v1193
      %v1195 = vrot.slane %v1172, 6
      %v1196 = vsel %vm1183, %v1193, %v1195
      %v1197 = vrot.slane %v1173, 6
      %v1198 = vsel %vm1183, %v1195, %v1197
      %v1207 = vsel %vm1183, 0.0, %v1184
      %v1208 = vlaneseq
      %v1209 = vshrl.u32 %v1208, 7
      %v1210 = vsub.s32 0, %v1209
      %v1211 = vrot.slane %v1174, %v1210
      %v1212 = vmul.f32 %v1207, %v1211
      %v1213 = vmul.f32 %v1186, %v1211
      %v1214 = vmul.f32 %v1188, %v1211
      %v1215 = vmul.f32 %v1190, %v1211
      %v1216 = vmul.f32 %v1192, %v1211
      %v1217 = vmul.f32 %v1194, %v1211
      %v1218 = vmul.f32 %v1196, %v1211
      %v1219 = vmul.f32 %v1198, %v1211
      %v1220 = vadd.f32 %v1212, 0.0
      %v1221 = vadd.f32 %v1213, 0.0
      %v1222 = vadd.f32 %v1214, 0.0
      %v1223 = vadd.f32 %v1215, 0.0
      %v1224 = vadd.f32 %v1216, 0.0
      %v1225 = vadd.f32 %v1217, 0.0
      %v1226 = vadd.f32 %v1218, 0.0
      %v1227 = vadd.f32 %v1219, 0.0
      %v1228 = vld [vmem:[%s897 + $0x11] sm:$0x1]
      %v1229 = vlaneseq
      %v1230 = vshrl.u32 %v1229, 7
      %v1231 = vsub.s32 0, %v1230
      %v1232 = vrot.slane %v1228, %v1231
      %v1233 = vmul.f32 %v1166, %v1232
      %v1234 = vmul.f32 %v1167, %v1232
      %v1235 = vmul.f32 %v1168, %v1232
      %v1236 = vmul.f32 %v1169, %v1232
      %v1237 = vmul.f32 %v1170, %v1232
      %v1238 = vmul.f32 %v1171, %v1232
      %v1239 = vmul.f32 %v1172, %v1232
      %v1240 = vmul.f32 %v1173, %v1232
      %v1241 = vadd.f32 %v1220, %v1233
      %v1242 = vadd.f32 %v1221, %v1234
      %v1243 = vadd.f32 %v1222, %v1235
      %v1244 = vadd.f32 %v1223, %v1236
      %v1245 = vadd.f32 %v1224, %v1237
      %v1246 = vadd.f32 %v1225, %v1238
      %v1247 = vadd.f32 %v1226, %v1239
      %v1248 = vadd.f32 %v1227, %v1240
      %v1249 = vld [vmem:[%s897 + $0x12] sm:$0x1]
      %vm1250 = vcmask 1045504
      %v1251 = vrot.slane %v1166, 2
      %v1252 = vrot.slane %v1167, 2
      %v1253 = vsel %vm1250, %v1251, %v1252
      %v1254 = vrot.slane %v1168, 2
      %v1255 = vsel %vm1250, %v1252, %v1254
      %v1256 = vrot.slane %v1169, 2
      %v1257 = vsel %vm1250, %v1254, %v1256
      %v1258 = vrot.slane %v1170, 2
      %v1259 = vsel %vm1250, %v1256, %v1258
      %v1260 = vrot.slane %v1171, 2
      %v1261 = vsel %vm1250, %v1258, %v1260
      %v1262 = vrot.slane %v1172, 2
      %v1263 = vsel %vm1250, %v1260, %v1262
      %v1264 = vrot.slane %v1173, 2
      %v1265 = vsel %vm1250, %v1262, %v1264
      %v1274 = vsel %vm1250, %v1264, 0.0
      %v1275 = vlaneseq
      %v1276 = vshrl.u32 %v1275, 7
      %v1277 = vsub.s32 0, %v1276
      %v1278 = vrot.slane %v1249, %v1277
      %v1279 = vmul.f32 %v1253, %v1278
      %v1280 = vmul.f32 %v1255, %v1278
      %v1281 = vmul.f32 %v1257, %v1278
      %v1282 = vmul.f32 %v1259, %v1278
      %v1283 = vmul.f32 %v1261, %v1278
      %v1284 = vmul.f32 %v1263, %v1278
      %v1285 = vmul.f32 %v1265, %v1278
      %v1286 = vmul.f32 %v1274, %v1278
      %v1287 = vadd.f32 %v1241, %v1279
      %v1288 = vadd.f32 %v1242, %v1280
      %v1289 = vadd.f32 %v1243, %v1281
      %v1290 = vadd.f32 %v1244, %v1282
      %v1291 = vadd.f32 %v1245, %v1283
      %v1292 = vadd.f32 %v1246, %v1284
      %v1293 = vadd.f32 %v1247, %v1285
      %v1294 = vadd.f32 %v1248, %v1286
      %v1295 = vlaneseq
      %v1296 = vshrl.u32 %v1295, 7
      %v1297 = vsub.s32 0, %v1296
      %v1298 = vrot.slane %v904, %v1297
      %v1299 = vadd.f32 %v1287, %v1298
      %v1300 = vadd.f32 %v1288, %v1298
      %v1301 = vadd.f32 %v1289, %v1298
      %v1302 = vadd.f32 %v1290, %v1298
      %v1303 = vadd.f32 %v1291, %v1298
      %v1304 = vadd.f32 %v1292, %v1298
      %v1305 = vadd.f32 %v1293, %v1298
      %v1306 = vadd.f32 %v1294, %v1298
      %vm1307 = vcmp.gt.f32.partialorder %v1299, 0.0
      %vm1308 = vcmp.gt.f32.partialorder %v1300, 0.0
      %vm1309 = vcmp.gt.f32.partialorder %v1301, 0.0
      %vm1310 = vcmp.gt.f32.partialorder %v1302, 0.0
      %vm1311 = vcmp.gt.f32.partialorder %v1303, 0.0
      %vm1312 = vcmp.gt.f32.partialorder %v1304, 0.0
      %vm1313 = vcmp.gt.f32.partialorder %v1305, 0.0
      %vm1314 = vcmp.gt.f32.partialorder %v1306, 0.0
      %v1315 = vlaneseq
      %v1316 = vshrl.u32 %v1315, 7
      %v1317 = vsub.s32 0, %v1316
      %v1318 = vrot.slane %v907, %v1317
      %v1319 = vmul.f32 %v1318, %v1299
      %v1320 = vmul.f32 %v1318, %v1300
      %v1321 = vmul.f32 %v1318, %v1301
      %v1322 = vmul.f32 %v1318, %v1302
      %v1323 = vmul.f32 %v1318, %v1303
      %v1324 = vmul.f32 %v1318, %v1304
      %v1325 = vmul.f32 %v1318, %v1305
      %v1326 = vmul.f32 %v1318, %v1306
      %v1327 = vsel %vm1307, %v1299, %v1319
      %v1328 = vsel %vm1308, %v1300, %v1320
      %v1329 = vsel %vm1309, %v1301, %v1321
      %v1330 = vsel %vm1310, %v1302, %v1322
      %v1331 = vsel %vm1311, %v1303, %v1323
      %v1332 = vsel %vm1312, %v1304, %v1324
      %v1333 = vsel %vm1313, %v1305, %v1325
      %v1334 = vsel %vm1314, %v1306, %v1326
      %v1335 = vsel %vm356, %v1327, 0.0
      %v1336 = vsel %vm356, %v1328, 0.0
      %v1337 = vadd.f32 %v1335, %v1336
      %v1338 = vsel %vm356, %v1329, 0.0
      %v1339 = vadd.f32 %v1337, %v1338
      %v1340 = vsel %vm356, %v1330, 0.0
      %v1341 = vadd.f32 %v1339, %v1340
      %v1342 = vsel %vm356, %v1331, 0.0
      %v1343 = vadd.f32 %v1341, %v1342
      %v1344 = vsel %vm356, %v1332, 0.0
      %v1345 = vadd.f32 %v1343, %v1344
      %v1346 = vsel %vm356, %v1333, 0.0
      %v1347 = vadd.f32 %v1345, %v1346
      %v1348 = vsel %vm356, %v1334, 0.0
      %v1349 = vadd.f32 %v1347, %v1348
      %1350 = vadd.xlane.f32.xlu0 %v1349
      %v1351 = vpop.xlane.xlu0 %1350
      %v1352 = vrot.slane %v1351, 4
      %v1353 = vadd.f32 %v1351, %v1352
      %v1354 = vrot.slane %v1353, 2
      %v1355 = vadd.f32 %v1353, %v1354
      %v1356 = vrot.slane %v1355, 1
      %v1357 = vadd.f32 %v1355, %v1356
      %s1358 = vtos %v1357
      %v1359 = vmul.f32 %v1327, %v1327
      %v1360 = vmul.f32 %v1328, %v1328
      %v1361 = vmul.f32 %v1329, %v1329
      %v1362 = vmul.f32 %v1330, %v1330
      %v1363 = vmul.f32 %v1331, %v1331
      %v1364 = vmul.f32 %v1332, %v1332
      %v1365 = vmul.f32 %v1333, %v1333
      %v1366 = vmul.f32 %v1334, %v1334
      %v1367 = vsel %vm356, %v1359, 0.0
      %v1368 = vsel %vm356, %v1360, 0.0
      %v1369 = vadd.f32 %v1367, %v1368
      %v1370 = vsel %vm356, %v1361, 0.0
      %v1371 = vadd.f32 %v1369, %v1370
      %v1372 = vsel %vm356, %v1362, 0.0
      %v1373 = vadd.f32 %v1371, %v1372
      %v1374 = vsel %vm356, %v1363, 0.0
      %v1375 = vadd.f32 %v1373, %v1374
      %v1376 = vsel %vm356, %v1364, 0.0
      %v1377 = vadd.f32 %v1375, %v1376
      %v1378 = vsel %vm356, %v1365, 0.0
      %v1379 = vadd.f32 %v1377, %v1378
      %v1380 = vsel %vm356, %v1366, 0.0
      %v1381 = vadd.f32 %v1379, %v1380
      %1382 = vadd.xlane.f32.xlu0 %v1381
      %v1383 = vpop.xlane.xlu0 %1382
      %v1384 = vrot.slane %v1383, 4
      %v1385 = vadd.f32 %v1383, %v1384
      %v1386 = vrot.slane %v1385, 2
      %v1387 = vadd.f32 %v1385, %v1386
      %v1388 = vrot.slane %v1387, 1
      %v1389 = vadd.f32 %v1387, %v1388
      %s1390 = vtos %v1389
      %s1391 = smul.f32 %s1358, 0.00048828125
      %s1392 = smul.f32 %s1390, 0.00048828125
      %s1393 = smul.f32 %s1391, %s1391
      %s1394 = ssub.f32 %s1392, %s1393
      %s1395 = sadd.f32 %s1394, 1e-05
      %v1396 = vstv %s1395
      %v1397 = vrsqrt.pop %v1396
      %s1398 = vtos %v1397
      %v1399 = vstv %s1391
      %v1400 = vsub.f32 %v1327, %v1399
      %v1401 = vsub.f32 %v1328, %v1399
      %v1402 = vsub.f32 %v1329, %v1399
      %v1403 = vsub.f32 %v1330, %v1399
      %v1404 = vsub.f32 %v1331, %v1399
      %v1405 = vsub.f32 %v1332, %v1399
      %v1406 = vsub.f32 %v1333, %v1399
      %v1407 = vsub.f32 %v1334, %v1399
      %v1408 = vstv %s1398
      %v1409 = vmul.f32 %v905, %v1408
      %v1410 = vlaneseq
      %v1411 = vshrl.u32 %v1410, 7
      %v1412 = vsub.s32 0, %v1411
      %v1413 = vrot.slane %v1409, %v1412
      %v1414 = vmul.f32 %v1400, %v1413
      %v1415 = vmul.f32 %v1401, %v1413
      %v1416 = vmul.f32 %v1402, %v1413
      %v1417 = vmul.f32 %v1403, %v1413
      %v1418 = vmul.f32 %v1404, %v1413
      %v1419 = vmul.f32 %v1405, %v1413
      %v1420 = vmul.f32 %v1406, %v1413
      %v1421 = vmul.f32 %v1407, %v1413
      %v1422 = vlaneseq
      %v1423 = vshrl.u32 %v1422, 7
      %v1424 = vsub.s32 0, %v1423
      %v1425 = vrot.slane %v906, %v1424
      %v1426 = vadd.f32 %v1414, %v1425
      %v1427 = vadd.f32 %v1415, %v1425
      %v1428 = vadd.f32 %v1416, %v1425
      %v1429 = vadd.f32 %v1417, %v1425
      %v1430 = vadd.f32 %v1418, %v1425
      %v1431 = vadd.f32 %v1419, %v1425
      %v1432 = vadd.f32 %v1420, %v1425
      %v1433 = vadd.f32 %v1421, %v1425
      %v1434 = vlaneseq
      %v1435 = vshrl.u32 %v1434, 7
      %v1436 = vsub.s32 0, %v1435
      %v1437 = vrot.slane %v913, %v1436
      %v1439 = vsel %vm356, %v1426, 0
      %v1442 = vsel %vm356, %v1427, 0
      %v1445 = vsel %vm356, %v1428, 0
      %v1448 = vsel %vm356, %v1429, 0
      %v1451 = vsel %vm356, %v1430, 0
      %v1454 = vsel %vm356, %v1431, 0
      %v1457 = vsel %vm356, %v1432, 0
      %v1460 = vsel %vm356, %v1433, 0
      %1462 = vmatprep.subr.mxu0 0.0
      %1463 = vmatpush1.msra.mxu0 %v909
      %1464 = vmatprep.subr.mxu0 0.0
      %1465 = vmatpush1.msra.mxu0 %v910
      %1466 = vmatprep.subr.mxu0 0.0
      %1467 = vmatpush1.msra.mxu0 %v911
      %1468 = vmatprep.subr.mxu0 0.0
      %1469 = vmatpush1.msra.mxu0 %v912
      %1470 = vmatprep.subr.mxu0 0.0
      %1471 = vmatpush1.msra.mxu0 0.0
      %1472 = vmatprep.subr.mxu0 0.0
      %1473 = vmatpush1.msra.mxu0 0.0
      %1474 = vmatprep.subr.mxu0 0.0
      %1475 = vmatpush1.msra.mxu0 0.0
      %1476 = vmatprep.subr.mxu0 0.0
      %1477 = vmatpush1.msra.mxu0 0.0
      %1478 = vmatprep.subr.mxu0 0.0
      %1479 = vmatpush1.msra.mxu0 0.0
      %1480 = vmatprep.subr.mxu0 0.0
      %1481 = vmatpush1.msra.mxu0 0.0
      %1482 = vmatprep.subr.mxu0 0.0
      %1483 = vmatpush1.msra.mxu0 0.0
      %1484 = vmatprep.subr.mxu0 0.0
      %1485 = vmatpush1.msra.mxu0 0.0
      %1486 = vmatprep.subr.mxu0 0.0
      %1487 = vmatpush1.msra.mxu0 0.0
      %1488 = vmatprep.subr.mxu0 0.0
      %1489 = vmatpush1.msra.mxu0 0.0
      %1490 = vmatprep.subr.mxu0 0.0
      %1491 = vmatpush1.msra.mxu0 0.0
      %1492 = vmatprep.subr.mxu0 0.0
      %1493 = vmatpush1.msra.mxu0 0.0
      %1494 = vmatprep.subr.mxu0 0.0
      %1495 = vmatpush1.msra.mxu0 0.0
      %1496 = vmatprep.subr.mxu0 0.0
      %1497 = vmatpush1.msra.mxu0 0.0
      %1498 = vmatprep.subr.mxu0 0.0
      %1499 = vmatpush1.msra.mxu0 0.0
      %1500 = vmatprep.subr.mxu0 0.0
      %1501 = vmatpush1.msra.mxu0 0.0
      %1502 = vmatprep.subr.mxu0 0.0
      %1503 = vmatpush1.msra.mxu0 0.0
      %1504 = vmatprep.subr.mxu0 0.0
      %1505 = vmatpush1.msra.mxu0 0.0
      %1506 = vmatprep.subr.mxu0 0.0
      %1507 = vmatpush1.msra.mxu0 0.0
      %1508 = vmatprep.subr.mxu0 0.0
      %1509 = vmatpush1.msra.mxu0 0.0
      %1510 = vmatprep.subr.mxu0 0.0
      %1511 = vmatpush1.msra.mxu0 0.0
      %1512 = vmatprep.subr.mxu0 0.0
      %1513 = vmatpush1.msra.mxu0 0.0
      %1514 = vmatprep.subr.mxu0 0.0
      %1515 = vmatpush1.msra.mxu0 0.0
      %1516 = vmatprep.subr.mxu0 0.0
      %1517 = vmatpush1.msra.mxu0 0.0
      %1518 = vmatprep.subr.mxu0 0.0
      %1519 = vmatpush1.msra.mxu0 0.0
      %1520 = vmatprep.subr.mxu0 0.0
      %1521 = vmatpush1.msra.mxu0 0.0
      %1522 = vmatprep.subr.mxu0 0.0
      %1523 = vmatpush1.msra.mxu0 0.0
      %1524 = vmatprep.subr.mxu0 0.0
      %1525 = vmatpush1.msra.mxu0 0.0
      %1526 = vmatprep.mubr.f32.mxu0 0.0
      %1527 = vmatmul.mubr.f32.gmra.mrb[0].mxu0 %v1439
      %v1528 = vpop.f32.mrb[0].mxu0
      %v1529 = vadd.f32 %v1437, %v1528
      %v1530 = vpop.f32.mrb[0].mxu0
      %1531 = vmatprep.mubr.f32.mxu0 0.0
      %1532 = vmatmul.mubr.f32.gmra.mrb[0].mxu0 %v1442
      %v1533 = vpop.f32.mrb[0].mxu0
      %v1534 = vadd.f32 %v1437, %v1533
      %v1535 = vpop.f32.mrb[0].mxu0
      %1536 = vmatprep.mubr.f32.mxu0 0.0
      %1537 = vmatmul.mubr.f32.gmra.mrb[0].mxu0 %v1445
      %v1538 = vpop.f32.mrb[0].mxu0
      %v1539 = vadd.f32 %v1437, %v1538
      %v1540 = vpop.f32.mrb[0].mxu0
      %1541 = vmatprep.mubr.f32.mxu0 0.0
      %1542 = vmatmul.mubr.f32.gmra.mrb[0].mxu0 %v1448
      %v1543 = vpop.f32.mrb[0].mxu0
      %v1544 = vadd.f32 %v1437, %v1543
      %v1545 = vpop.f32.mrb[0].mxu0
      %1546 = vmatprep.mubr.f32.mxu0 0.0
      %1547 = vmatmul.mubr.f32.gmra.mrb[0].mxu0 %v1451
      %v1548 = vpop.f32.mrb[0].mxu0
      %v1549 = vadd.f32 %v1437, %v1548
      %v1550 = vpop.f32.mrb[0].mxu0
      %1551 = vmatprep.mubr.f32.mxu0 0.0
      %1552 = vmatmul.mubr.f32.gmra.mrb[0].mxu0 %v1454
      %v1553 = vpop.f32.mrb[0].mxu0
      %v1554 = vadd.f32 %v1437, %v1553
      %v1555 = vpop.f32.mrb[0].mxu0
      %1556 = vmatprep.mubr.f32.mxu0 0.0
      %1557 = vmatmul.mubr.f32.gmra.mrb[0].mxu0 %v1457
      %v1558 = vpop.f32.mrb[0].mxu0
      %v1559 = vadd.f32 %v1437, %v1558
      %v1560 = vpop.f32.mrb[0].mxu0
      %1561 = vmatprep.mubr.f32.mxu0 0.0
      %1562 = vmatmul.mubr.f32.gmra.mrb[0].mxu0 %v1460
      %v1563 = vpop.f32.mrb[0].mxu0
      %v1564 = vadd.f32 %v1437, %v1563
      %v1565 = vpop.f32.mrb[0].mxu0
      %1566 = vdwg.mxu0
      %v1567 = vadd.f32 %v849, %v1529
      %v1568 = vadd.f32 %v850, %v1534
      %v1569 = vadd.f32 %v851, %v1539
      %v1570 = vadd.f32 %v852, %v1544
      %v1571 = vadd.f32 %v853, %v1549
      %v1572 = vadd.f32 %v854, %v1554
      %v1573 = vadd.f32 %v855, %v1559
      %v1574 = vadd.f32 %v856, %v1564
      %1583 = vrot.lane.b32.xlu0 %v1529, 112
      %v1584 = vpop.permute.xlu0 %1583
      %1585 = vrot.lane.b32.xlu0 %v1534, 112
      %v1586 = vpop.permute.xlu0 %1585
      %1587 = vrot.lane.b32.xlu0 %v1539, 112
      %v1588 = vpop.permute.xlu0 %1587
      %1589 = vrot.lane.b32.xlu0 %v1544, 112
      %v1590 = vpop.permute.xlu0 %1589
      %1591 = vrot.lane.b32.xlu0 %v1549, 112
      %v1592 = vpop.permute.xlu0 %1591
      %1593 = vrot.lane.b32.xlu0 %v1554, 112
      %v1594 = vpop.permute.xlu0 %1593
      %1595 = vrot.lane.b32.xlu0 %v1559, 112
      %v1596 = vpop.permute.xlu0 %1595
      %1597 = vrot.lane.b32.xlu0 %v1564, 112
      %v1598 = vpop.permute.xlu0 %1597
      %v1607 = vadd.f32 %v889, %v1584
      %v1608 = vadd.f32 %v890, %v1586
      %v1609 = vadd.f32 %v891, %v1588
      %v1610 = vadd.f32 %v892, %v1590
      %v1611 = vadd.f32 %v893, %v1592
      %v1612 = vadd.f32 %v894, %v1594
      %v1613 = vadd.f32 %v895, %v1596
      %v1614 = vadd.f32 %v896, %v1598
      %s1615 = scalar_lea.vmem %s1, 64
      %v1616 = vld [vmem:[%s1615] sm:$0xff]
      %v1617 = vld [vmem:[%s1615 + $0x8] sm:$0xff]
      %v1618 = vld [vmem:[%s1615 + $0x13] sm:$0x1]
      %v1619 = vld [vmem:[%s1615 + $0x14] sm:$0x1]
      %v1620 = vld [vmem:[%s1615 + $0x15] sm:$0x1]
      %v1621 = vld [vmem:[%s1615 + $0x16] sm:$0x1]
      %v1622 = vld [vmem:[%s1615 + $0x17] sm:$0x1]
      %v1623 = vld [vmem:[%s1615 + $0x18] sm:$0x1]
      %v1624 = vld [vmem:[%s1615 + $0x19] sm:$0x1]
      %v1625 = vld [vmem:[%s1615 + $0x1a] sm:$0x1]
      %s1626 = scalar_lea.vmem %s2, 80
      %v1627 = vld [vmem:[%s1626] sm:$0xff]
      %v1628 = vld [vmem:[%s1626 + $0x8] sm:$0xff]
      %v1629 = vld [vmem:[%s1626 + $0x10] sm:$0xff]
      %v1630 = vld [vmem:[%s1626 + $0x18] sm:$0xff]
      %v1631 = vld [vmem:[%s1626 + $0x20] sm:$0x1]
      %v1632 = vlaneseq
      %v1633 = vshrl.u32 %v1632, 7
      %v1634 = vsub.s32 0, %v1633
      %v1635 = vrot.slane %v1618, %v1634
      %v1637 = vsel %vm198, %v1607, 0
      %v1640 = vsel %vm198, %v1608, 0
      %v1643 = vsel %vm198, %v1609, 0
      %v1646 = vsel %vm198, %v1610, 0
      %v1649 = vsel %vm198, %v1611, 0
      %v1652 = vsel %vm198, %v1612, 0
      %v1655 = vsel %vm198, %v1613, 0
      %v1658 = vsel %vm198, %v1614, 0
      %1660 = vmatprep.subr.mxu0 0.0
      %1661 = vmatpush1.msra.mxu0 %v1616
      %1662 = vmatprep.subr.mxu0 0.0
      %1663 = vmatpush1.msra.mxu0 %v1617
      %1664 = vmatprep.subr.mxu0 0.0
      %1665 = vmatpush1.msra.mxu0 0.0
      %1666 = vmatprep.subr.mxu0 0.0
      %1667 = vmatpush1.msra.mxu0 0.0
      %1668 = vmatprep.subr.mxu0 0.0
      %1669 = vmatpush1.msra.mxu0 0.0
      %1670 = vmatprep.subr.mxu0 0.0
      %1671 = vmatpush1.msra.mxu0 0.0
      %1672 = vmatprep.subr.mxu0 0.0
      %1673 = vmatpush1.msra.mxu0 0.0
      %1674 = vmatprep.subr.mxu0 0.0
      %1675 = vmatpush1.msra.mxu0 0.0
      %1676 = vmatprep.subr.mxu0 0.0
      %1677 = vmatpush1.msra.mxu0 0.0
      %1678 = vmatprep.subr.mxu0 0.0
      %1679 = vmatpush1.msra.mxu0 0.0
      %1680 = vmatprep.subr.mxu0 0.0
      %1681 = vmatpush1.msra.mxu0 0.0
      %1682 = vmatprep.subr.mxu0 0.0
      %1683 = vmatpush1.msra.mxu0 0.0
      %1684 = vmatprep.subr.mxu0 0.0
      %1685 = vmatpush1.msra.mxu0 0.0
      %1686 = vmatprep.subr.mxu0 0.0
      %1687 = vmatpush1.msra.mxu0 0.0
      %1688 = vmatprep.subr.mxu0 0.0
      %1689 = vmatpush1.msra.mxu0 0.0
      %1690 = vmatprep.subr.mxu0 0.0
      %1691 = vmatpush1.msra.mxu0 0.0
      %1692 = vmatprep.subr.mxu0 0.0
      %1693 = vmatpush1.msra.mxu0 0.0
      %1694 = vmatprep.subr.mxu0 0.0
      %1695 = vmatpush1.msra.mxu0 0.0
      %1696 = vmatprep.subr.mxu0 0.0
      %1697 = vmatpush1.msra.mxu0 0.0
      %1698 = vmatprep.subr.mxu0 0.0
      %1699 = vmatpush1.msra.mxu0 0.0
      %1700 = vmatprep.subr.mxu0 0.0
      %1701 = vmatpush1.msra.mxu0 0.0
      %1702 = vmatprep.subr.mxu0 0.0
      %1703 = vmatpush1.msra.mxu0 0.0
      %1704 = vmatprep.subr.mxu0 0.0
      %1705 = vmatpush1.msra.mxu0 0.0
      %1706 = vmatprep.subr.mxu0 0.0
      %1707 = vmatpush1.msra.mxu0 0.0
      %1708 = vmatprep.subr.mxu0 0.0
      %1709 = vmatpush1.msra.mxu0 0.0
      %1710 = vmatprep.subr.mxu0 0.0
      %1711 = vmatpush1.msra.mxu0 0.0
      %1712 = vmatprep.subr.mxu0 0.0
      %1713 = vmatpush1.msra.mxu0 0.0
      %1714 = vmatprep.subr.mxu0 0.0
      %1715 = vmatpush1.msra.mxu0 0.0
      %1716 = vmatprep.subr.mxu0 0.0
      %1717 = vmatpush1.msra.mxu0 0.0
      %1718 = vmatprep.subr.mxu0 0.0
      %1719 = vmatpush1.msra.mxu0 0.0
      %1720 = vmatprep.subr.mxu0 0.0
      %1721 = vmatpush1.msra.mxu0 0.0
      %1722 = vmatprep.subr.mxu0 0.0
      %1723 = vmatpush1.msra.mxu0 0.0
      %1724 = vmatprep.mubr.f32.mxu0 0.0
      %1725 = vmatmul.mubr.f32.gmra.mrb[0].mxu0 %v1637
      %v1726 = vpop.f32.mrb[0].mxu0
      %v1727 = vadd.f32 %v1635, %v1726
      %v1728 = vpop.f32.mrb[0].mxu0
      %1729 = vmatprep.mubr.f32.mxu0 0.0
      %1730 = vmatmul.mubr.f32.gmra.mrb[0].mxu0 %v1640
      %v1731 = vpop.f32.mrb[0].mxu0
      %v1732 = vadd.f32 %v1635, %v1731
      %v1733 = vpop.f32.mrb[0].mxu0
      %1734 = vmatprep.mubr.f32.mxu0 0.0
      %1735 = vmatmul.mubr.f32.gmra.mrb[0].mxu0 %v1643
      %v1736 = vpop.f32.mrb[0].mxu0
      %v1737 = vadd.f32 %v1635, %v1736
      %v1738 = vpop.f32.mrb[0].mxu0
      %1739 = vmatprep.mubr.f32.mxu0 0.0
      %1740 = vmatmul.mubr.f32.gmra.mrb[0].mxu0 %v1646
      %v1741 = vpop.f32.mrb[0].mxu0
      %v1742 = vadd.f32 %v1635, %v1741
      %v1743 = vpop.f32.mrb[0].mxu0
      %1744 = vmatprep.mubr.f32.mxu0 0.0
      %1745 = vmatmul.mubr.f32.gmra.mrb[0].mxu0 %v1649
      %v1746 = vpop.f32.mrb[0].mxu0
      %v1747 = vadd.f32 %v1635, %v1746
      %v1748 = vpop.f32.mrb[0].mxu0
      %1749 = vmatprep.mubr.f32.mxu0 0.0
      %1750 = vmatmul.mubr.f32.gmra.mrb[0].mxu0 %v1652
      %v1751 = vpop.f32.mrb[0].mxu0
      %v1752 = vadd.f32 %v1635, %v1751
      %v1753 = vpop.f32.mrb[0].mxu0
      %1754 = vmatprep.mubr.f32.mxu0 0.0
      %1755 = vmatmul.mubr.f32.gmra.mrb[0].mxu0 %v1655
      %v1756 = vpop.f32.mrb[0].mxu0
      %v1757 = vadd.f32 %v1635, %v1756
      %v1758 = vpop.f32.mrb[0].mxu0
      %1759 = vmatprep.mubr.f32.mxu0 0.0
      %1760 = vmatmul.mubr.f32.gmra.mrb[0].mxu0 %v1658
      %v1761 = vpop.f32.mrb[0].mxu0
      %v1762 = vadd.f32 %v1635, %v1761
      %v1763 = vpop.f32.mrb[0].mxu0
      %1764 = vdwg.mxu0
      %vm1765 = vcmp.gt.f32.partialorder %v1727, 0.0
      %vm1766 = vcmp.gt.f32.partialorder %v1732, 0.0
      %vm1767 = vcmp.gt.f32.partialorder %v1737, 0.0
      %vm1768 = vcmp.gt.f32.partialorder %v1742, 0.0
      %vm1769 = vcmp.gt.f32.partialorder %v1747, 0.0
      %vm1770 = vcmp.gt.f32.partialorder %v1752, 0.0
      %vm1771 = vcmp.gt.f32.partialorder %v1757, 0.0
      %vm1772 = vcmp.gt.f32.partialorder %v1762, 0.0
      %v1773 = vlaneseq
      %v1774 = vshrl.u32 %v1773, 7
      %v1775 = vsub.s32 0, %v1774
      %v1776 = vrot.slane %v1621, %v1775
      %v1777 = vmul.f32 %v1776, %v1727
      %v1778 = vmul.f32 %v1776, %v1732
      %v1779 = vmul.f32 %v1776, %v1737
      %v1780 = vmul.f32 %v1776, %v1742
      %v1781 = vmul.f32 %v1776, %v1747
      %v1782 = vmul.f32 %v1776, %v1752
      %v1783 = vmul.f32 %v1776, %v1757
      %v1784 = vmul.f32 %v1776, %v1762
      %v1785 = vsel %vm1765, %v1727, %v1777
      %v1786 = vsel %vm1766, %v1732, %v1778
      %v1787 = vsel %vm1767, %v1737, %v1779
      %v1788 = vsel %vm1768, %v1742, %v1780
      %v1789 = vsel %vm1769, %v1747, %v1781
      %v1790 = vsel %vm1770, %v1752, %v1782
      %v1791 = vsel %vm1771, %v1757, %v1783
      %v1792 = vsel %vm1772, %v1762, %v1784
      %v1793 = vsel %vm356, %v1785, 0.0
      %v1794 = vsel %vm356, %v1786, 0.0
      %v1795 = vadd.f32 %v1793, %v1794
      %v1796 = vsel %vm356, %v1787, 0.0
      %v1797 = vadd.f32 %v1795, %v1796
      %v1798 = vsel %vm356, %v1788, 0.0
      %v1799 = vadd.f32 %v1797, %v1798
      %v1800 = vsel %vm356, %v1789, 0.0
      %v1801 = vadd.f32 %v1799, %v1800
      %v1802 = vsel %vm356, %v1790, 0.0
      %v1803 = vadd.f32 %v1801, %v1802
      %v1804 = vsel %vm356, %v1791, 0.0
      %v1805 = vadd.f32 %v1803, %v1804
      %v1806 = vsel %vm356, %v1792, 0.0
      %v1807 = vadd.f32 %v1805, %v1806
      %1808 = vadd.xlane.f32.xlu0 %v1807
      %v1809 = vpop.xlane.xlu0 %1808
      %v1810 = vrot.slane %v1809, 4
      %v1811 = vadd.f32 %v1809, %v1810
      %v1812 = vrot.slane %v1811, 2
      %v1813 = vadd.f32 %v1811, %v1812
      %v1814 = vrot.slane %v1813, 1
      %v1815 = vadd.f32 %v1813, %v1814
      %s1816 = vtos %v1815
      %v1817 = vmul.f32 %v1785, %v1785
      %v1818 = vmul.f32 %v1786, %v1786
      %v1819 = vmul.f32 %v1787, %v1787
      %v1820 = vmul.f32 %v1788, %v1788
      %v1821 = vmul.f32 %v1789, %v1789
      %v1822 = vmul.f32 %v1790, %v1790
      %v1823 = vmul.f32 %v1791, %v1791
      %v1824 = vmul.f32 %v1792, %v1792
      %v1825 = vsel %vm356, %v1817, 0.0
      %v1826 = vsel %vm356, %v1818, 0.0
      %v1827 = vadd.f32 %v1825, %v1826
      %v1828 = vsel %vm356, %v1819, 0.0
      %v1829 = vadd.f32 %v1827, %v1828
      %v1830 = vsel %vm356, %v1820, 0.0
      %v1831 = vadd.f32 %v1829, %v1830
      %v1832 = vsel %vm356, %v1821, 0.0
      %v1833 = vadd.f32 %v1831, %v1832
      %v1834 = vsel %vm356, %v1822, 0.0
      %v1835 = vadd.f32 %v1833, %v1834
      %v1836 = vsel %vm356, %v1823, 0.0
      %v1837 = vadd.f32 %v1835, %v1836
      %v1838 = vsel %vm356, %v1824, 0.0
      %v1839 = vadd.f32 %v1837, %v1838
      %1840 = vadd.xlane.f32.xlu0 %v1839
      %v1841 = vpop.xlane.xlu0 %1840
      %v1842 = vrot.slane %v1841, 4
      %v1843 = vadd.f32 %v1841, %v1842
      %v1844 = vrot.slane %v1843, 2
      %v1845 = vadd.f32 %v1843, %v1844
      %v1846 = vrot.slane %v1845, 1
      %v1847 = vadd.f32 %v1845, %v1846
      %s1848 = vtos %v1847
      %s1849 = smul.f32 %s1816, 0.00048828125
      %s1850 = smul.f32 %s1848, 0.00048828125
      %s1851 = smul.f32 %s1849, %s1849
      %s1852 = ssub.f32 %s1850, %s1851
      %s1853 = sadd.f32 %s1852, 1e-05
      %v1854 = vstv %s1853
      %v1855 = vrsqrt.pop %v1854
      %s1856 = vtos %v1855
      %v1857 = vstv %s1849
      %v1858 = vsub.f32 %v1785, %v1857
      %v1859 = vsub.f32 %v1786, %v1857
      %v1860 = vsub.f32 %v1787, %v1857
      %v1861 = vsub.f32 %v1788, %v1857
      %v1862 = vsub.f32 %v1789, %v1857
      %v1863 = vsub.f32 %v1790, %v1857
      %v1864 = vsub.f32 %v1791, %v1857
      %v1865 = vsub.f32 %v1792, %v1857
      %v1866 = vstv %s1856
      %v1867 = vmul.f32 %v1619, %v1866
      %v1868 = vlaneseq
      %v1869 = vshrl.u32 %v1868, 7
      %v1870 = vsub.s32 0, %v1869
      %v1871 = vrot.slane %v1867, %v1870
      %v1872 = vmul.f32 %v1858, %v1871
      %v1873 = vmul.f32 %v1859, %v1871
      %v1874 = vmul.f32 %v1860, %v1871
      %v1875 = vmul.f32 %v1861, %v1871
      %v1876 = vmul.f32 %v1862, %v1871
      %v1877 = vmul.f32 %v1863, %v1871
      %v1878 = vmul.f32 %v1864, %v1871
      %v1879 = vmul.f32 %v1865, %v1871
      %v1880 = vlaneseq
      %v1881 = vshrl.u32 %v1880, 7
      %v1882 = vsub.s32 0, %v1881
      %v1883 = vrot.slane %v1620, %v1882
      %v1884 = vadd.f32 %v1872, %v1883
      %v1885 = vadd.f32 %v1873, %v1883
      %v1886 = vadd.f32 %v1874, %v1883
      %v1887 = vadd.f32 %v1875, %v1883
      %v1888 = vadd.f32 %v1876, %v1883
      %v1889 = vadd.f32 %v1877, %v1883
      %v1890 = vadd.f32 %v1878, %v1883
      %v1891 = vadd.f32 %v1879, %v1883
      %v1892 = vld [vmem:[%s1615 + $0x10] sm:$0x1]
      %vm1901 = vcmask 1043456
      %v1902 = vrot.slane %v1884, 4
      %v1903 = vrot.slane %v1885, 4
      %v1904 = vsel %vm1901, %v1902, %v1903
      %v1905 = vrot.slane %v1886, 4
      %v1906 = vsel %vm1901, %v1903, %v1905
      %v1907 = vrot.slane %v1887, 4
      %v1908 = vsel %vm1901, %v1905, %v1907
      %v1909 = vrot.slane %v1888, 4
      %v1910 = vsel %vm1901, %v1907, %v1909
      %v1911 = vrot.slane %v1889, 4
      %v1912 = vsel %vm1901, %v1909, %v1911
      %v1913 = vrot.slane %v1890, 4
      %v1914 = vsel %vm1901, %v1911, %v1913
      %v1915 = vrot.slane %v1891, 4
      %v1916 = vsel %vm1901, %v1913, %v1915
      %v1925 = vsel %vm1901, 0.0, %v1902
      %v1926 = vlaneseq
      %v1927 = vshrl.u32 %v1926, 7
      %v1928 = vsub.s32 0, %v1927
      %v1929 = vrot.slane %v1892, %v1928
      %v1930 = vmul.f32 %v1925, %v1929
      %v1931 = vmul.f32 %v1904, %v1929
      %v1932 = vmul.f32 %v1906, %v1929
      %v1933 = vmul.f32 %v1908, %v1929
      %v1934 = vmul.f32 %v1910, %v1929
      %v1935 = vmul.f32 %v1912, %v1929
      %v1936 = vmul.f32 %v1914, %v1929
      %v1937 = vmul.f32 %v1916, %v1929
      %v1938 = vadd.f32 %v1930, 0.0
      %v1939 = vadd.f32 %v1931, 0.0
      %v1940 = vadd.f32 %v1932, 0.0
      %v1941 = vadd.f32 %v1933, 0.0
      %v1942 = vadd.f32 %v1934, 0.0
      %v1943 = vadd.f32 %v1935, 0.0
      %v1944 = vadd.f32 %v1936, 0.0
      %v1945 = vadd.f32 %v1937, 0.0
      %v1946 = vld [vmem:[%s1615 + $0x11] sm:$0x1]
      %v1947 = vlaneseq
      %v1948 = vshrl.u32 %v1947, 7
      %v1949 = vsub.s32 0, %v1948
      %v1950 = vrot.slane %v1946, %v1949
      %v1951 = vmul.f32 %v1884, %v1950
      %v1952 = vmul.f32 %v1885, %v1950
      %v1953 = vmul.f32 %v1886, %v1950
      %v1954 = vmul.f32 %v1887, %v1950
      %v1955 = vmul.f32 %v1888, %v1950
      %v1956 = vmul.f32 %v1889, %v1950
      %v1957 = vmul.f32 %v1890, %v1950
      %v1958 = vmul.f32 %v1891, %v1950
      %v1959 = vadd.f32 %v1938, %v1951
      %v1960 = vadd.f32 %v1939, %v1952
      %v1961 = vadd.f32 %v1940, %v1953
      %v1962 = vadd.f32 %v1941, %v1954
      %v1963 = vadd.f32 %v1942, %v1955
      %v1964 = vadd.f32 %v1943, %v1956
      %v1965 = vadd.f32 %v1944, %v1957
      %v1966 = vadd.f32 %v1945, %v1958
      %v1967 = vld [vmem:[%s1615 + $0x12] sm:$0x1]
      %v1969 = vsel %vm1901, %v1915, 0.0
      %v1970 = vlaneseq
      %v1971 = vshrl.u32 %v1970, 7
      %v1972 = vsub.s32 0, %v1971
      %v1973 = vrot.slane %v1967, %v1972
      %v1974 = vmul.f32 %v1904, %v1973
      %v1975 = vmul.f32 %v1906, %v1973
      %v1976 = vmul.f32 %v1908, %v1973
      %v1977 = vmul.f32 %v1910, %v1973
      %v1978 = vmul.f32 %v1912, %v1973
      %v1979 = vmul.f32 %v1914, %v1973
      %v1980 = vmul.f32 %v1916, %v1973
      %v1981 = vmul.f32 %v1969, %v1973
      %v1982 = vadd.f32 %v1959, %v1974
      %v1983 = vadd.f32 %v1960, %v1975
      %v1984 = vadd.f32 %v1961, %v1976
      %v1985 = vadd.f32 %v1962, %v1977
      %v1986 = vadd.f32 %v1963, %v1978
      %v1987 = vadd.f32 %v1964, %v1979
      %v1988 = vadd.f32 %v1965, %v1980
      %v1989 = vadd.f32 %v1966, %v1981
      %v1990 = vlaneseq
      %v1991 = vshrl.u32 %v1990, 7
      %v1992 = vsub.s32 0, %v1991
      %v1993 = vrot.slane %v1622, %v1992
      %v1994 = vadd.f32 %v1982, %v1993
      %v1995 = vadd.f32 %v1983, %v1993
      %v1996 = vadd.f32 %v1984, %v1993
      %v1997 = vadd.f32 %v1985, %v1993
      %v1998 = vadd.f32 %v1986, %v1993
      %v1999 = vadd.f32 %v1987, %v1993
      %v2000 = vadd.f32 %v1988, %v1993
      %v2001 = vadd.f32 %v1989, %v1993
      %vm2002 = vcmp.gt.f32.partialorder %v1994, 0.0
      %vm2003 = vcmp.gt.f32.partialorder %v1995, 0.0
      %vm2004 = vcmp.gt.f32.partialorder %v1996, 0.0
      %vm2005 = vcmp.gt.f32.partialorder %v1997, 0.0
      %vm2006 = vcmp.gt.f32.partialorder %v1998, 0.0
      %vm2007 = vcmp.gt.f32.partialorder %v1999, 0.0
      %vm2008 = vcmp.gt.f32.partialorder %v2000, 0.0
      %vm2009 = vcmp.gt.f32.partialorder %v2001, 0.0
      %v2010 = vlaneseq
      %v2011 = vshrl.u32 %v2010, 7
      %v2012 = vsub.s32 0, %v2011
      %v2013 = vrot.slane %v1625, %v2012
      %v2014 = vmul.f32 %v2013, %v1994
      %v2015 = vmul.f32 %v2013, %v1995
      %v2016 = vmul.f32 %v2013, %v1996
      %v2017 = vmul.f32 %v2013, %v1997
      %v2018 = vmul.f32 %v2013, %v1998
      %v2019 = vmul.f32 %v2013, %v1999
      %v2020 = vmul.f32 %v2013, %v2000
      %v2021 = vmul.f32 %v2013, %v2001
      %v2022 = vsel %vm2002, %v1994, %v2014
      %v2023 = vsel %vm2003, %v1995, %v2015
      %v2024 = vsel %vm2004, %v1996, %v2016
      %v2025 = vsel %vm2005, %v1997, %v2017
      %v2026 = vsel %vm2006, %v1998, %v2018
      %v2027 = vsel %vm2007, %v1999, %v2019
      %v2028 = vsel %vm2008, %v2000, %v2020
      %v2029 = vsel %vm2009, %v2001, %v2021
      %v2030 = vsel %vm356, %v2022, 0.0
      %v2031 = vsel %vm356, %v2023, 0.0
      %v2032 = vadd.f32 %v2030, %v2031
      %v2033 = vsel %vm356, %v2024, 0.0
      %v2034 = vadd.f32 %v2032, %v2033
      %v2035 = vsel %vm356, %v2025, 0.0
      %v2036 = vadd.f32 %v2034, %v2035
      %v2037 = vsel %vm356, %v2026, 0.0
      %v2038 = vadd.f32 %v2036, %v2037
      %v2039 = vsel %vm356, %v2027, 0.0
      %v2040 = vadd.f32 %v2038, %v2039
      %v2041 = vsel %vm356, %v2028, 0.0
      %v2042 = vadd.f32 %v2040, %v2041
      %v2043 = vsel %vm356, %v2029, 0.0
      %v2044 = vadd.f32 %v2042, %v2043
      %2045 = vadd.xlane.f32.xlu0 %v2044
      %v2046 = vpop.xlane.xlu0 %2045
      %v2047 = vrot.slane %v2046, 4
      %v2048 = vadd.f32 %v2046, %v2047
      %v2049 = vrot.slane %v2048, 2
      %v2050 = vadd.f32 %v2048, %v2049
      %v2051 = vrot.slane %v2050, 1
      %v2052 = vadd.f32 %v2050, %v2051
      %s2053 = vtos %v2052
      %v2054 = vmul.f32 %v2022, %v2022
      %v2055 = vmul.f32 %v2023, %v2023
      %v2056 = vmul.f32 %v2024, %v2024
      %v2057 = vmul.f32 %v2025, %v2025
      %v2058 = vmul.f32 %v2026, %v2026
      %v2059 = vmul.f32 %v2027, %v2027
      %v2060 = vmul.f32 %v2028, %v2028
      %v2061 = vmul.f32 %v2029, %v2029
      %v2062 = vsel %vm356, %v2054, 0.0
      %v2063 = vsel %vm356, %v2055, 0.0
      %v2064 = vadd.f32 %v2062, %v2063
      %v2065 = vsel %vm356, %v2056, 0.0
      %v2066 = vadd.f32 %v2064, %v2065
      %v2067 = vsel %vm356, %v2057, 0.0
      %v2068 = vadd.f32 %v2066, %v2067
      %v2069 = vsel %vm356, %v2058, 0.0
      %v2070 = vadd.f32 %v2068, %v2069
      %v2071 = vsel %vm356, %v2059, 0.0
      %v2072 = vadd.f32 %v2070, %v2071
      %v2073 = vsel %vm356, %v2060, 0.0
      %v2074 = vadd.f32 %v2072, %v2073
      %v2075 = vsel %vm356, %v2061, 0.0
      %v2076 = vadd.f32 %v2074, %v2075
      %2077 = vadd.xlane.f32.xlu0 %v2076
      %v2078 = vpop.xlane.xlu0 %2077
      %v2079 = vrot.slane %v2078, 4
      %v2080 = vadd.f32 %v2078, %v2079
      %v2081 = vrot.slane %v2080, 2
      %v2082 = vadd.f32 %v2080, %v2081
      %v2083 = vrot.slane %v2082, 1
      %v2084 = vadd.f32 %v2082, %v2083
      %s2085 = vtos %v2084
      %s2086 = smul.f32 %s2053, 0.00048828125
      %s2087 = smul.f32 %s2085, 0.00048828125
      %s2088 = smul.f32 %s2086, %s2086
      %s2089 = ssub.f32 %s2087, %s2088
      %s2090 = sadd.f32 %s2089, 1e-05
      %v2091 = vstv %s2090
      %v2092 = vrsqrt.pop %v2091
      %s2093 = vtos %v2092
      %v2094 = vstv %s2086
      %v2095 = vsub.f32 %v2022, %v2094
      %v2096 = vsub.f32 %v2023, %v2094
      %v2097 = vsub.f32 %v2024, %v2094
      %v2098 = vsub.f32 %v2025, %v2094
      %v2099 = vsub.f32 %v2026, %v2094
      %v2100 = vsub.f32 %v2027, %v2094
      %v2101 = vsub.f32 %v2028, %v2094
      %v2102 = vsub.f32 %v2029, %v2094
      %v2103 = vstv %s2093
      %v2104 = vmul.f32 %v1623, %v2103
      %v2105 = vlaneseq
      %v2106 = vshrl.u32 %v2105, 7
      %v2107 = vsub.s32 0, %v2106
      %v2108 = vrot.slane %v2104, %v2107
      %v2109 = vmul.f32 %v2095, %v2108
      %v2110 = vmul.f32 %v2096, %v2108
      %v2111 = vmul.f32 %v2097, %v2108
      %v2112 = vmul.f32 %v2098, %v2108
      %v2113 = vmul.f32 %v2099, %v2108
      %v2114 = vmul.f32 %v2100, %v2108
      %v2115 = vmul.f32 %v2101, %v2108
      %v2116 = vmul.f32 %v2102, %v2108
      %v2117 = vlaneseq
      %v2118 = vshrl.u32 %v2117, 7
      %v2119 = vsub.s32 0, %v2118
      %v2120 = vrot.slane %v1624, %v2119
      %v2121 = vadd.f32 %v2109, %v2120
      %v2122 = vadd.f32 %v2110, %v2120
      %v2123 = vadd.f32 %v2111, %v2120
      %v2124 = vadd.f32 %v2112, %v2120
      %v2125 = vadd.f32 %v2113, %v2120
      %v2126 = vadd.f32 %v2114, %v2120
      %v2127 = vadd.f32 %v2115, %v2120
      %v2128 = vadd.f32 %v2116, %v2120
      %v2129 = vlaneseq
      %v2130 = vshrl.u32 %v2129, 7
      %v2131 = vsub.s32 0, %v2130
      %v2132 = vrot.slane %v1631, %v2131
      %v2134 = vsel %vm356, %v2121, 0
      %v2137 = vsel %vm356, %v2122, 0
      %v2140 = vsel %vm356, %v2123, 0
      %v2143 = vsel %vm356, %v2124, 0
      %v2146 = vsel %vm356, %v2125, 0
      %v2149 = vsel %vm356, %v2126, 0
      %v2152 = vsel %vm356, %v2127, 0
      %v2155 = vsel %vm356, %v2128, 0
      %2157 = vmatprep.subr.mxu0 0.0
      %2158 = vmatpush1.msra.mxu0 %v1627
      %2159 = vmatprep.subr.mxu0 0.0
      %2160 = vmatpush1.msra.mxu0 %v1628
      %2161 = vmatprep.subr.mxu0 0.0
      %2162 = vmatpush1.msra.mxu0 %v1629
      %2163 = vmatprep.subr.mxu0 0.0
      %2164 = vmatpush1.msra.mxu0 %v1630
      %2165 = vmatprep.subr.mxu0 0.0
      %2166 = vmatpush1.msra.mxu0 0.0
      %2167 = vmatprep.subr.mxu0 0.0
      %2168 = vmatpush1.msra.mxu0 0.0
      %2169 = vmatprep.subr.mxu0 0.0
      %2170 = vmatpush1.msra.mxu0 0.0
      %2171 = vmatprep.subr.mxu0 0.0
      %2172 = vmatpush1.msra.mxu0 0.0
      %2173 = vmatprep.subr.mxu0 0.0
      %2174 = vmatpush1.msra.mxu0 0.0
      %2175 = vmatprep.subr.mxu0 0.0
      %2176 = vmatpush1.msra.mxu0 0.0
      %2177 = vmatprep.subr.mxu0 0.0
      %2178 = vmatpush1.msra.mxu0 0.0
      %2179 = vmatprep.subr.mxu0 0.0
      %2180 = vmatpush1.msra.mxu0 0.0
      %2181 = vmatprep.subr.mxu0 0.0
      %2182 = vmatpush1.msra.mxu0 0.0
      %2183 = vmatprep.subr.mxu0 0.0
      %2184 = vmatpush1.msra.mxu0 0.0
      %2185 = vmatprep.subr.mxu0 0.0
      %2186 = vmatpush1.msra.mxu0 0.0
      %2187 = vmatprep.subr.mxu0 0.0
      %2188 = vmatpush1.msra.mxu0 0.0
      %2189 = vmatprep.subr.mxu0 0.0
      %2190 = vmatpush1.msra.mxu0 0.0
      %2191 = vmatprep.subr.mxu0 0.0
      %2192 = vmatpush1.msra.mxu0 0.0
      %2193 = vmatprep.subr.mxu0 0.0
      %2194 = vmatpush1.msra.mxu0 0.0
      %2195 = vmatprep.subr.mxu0 0.0
      %2196 = vmatpush1.msra.mxu0 0.0
      %2197 = vmatprep.subr.mxu0 0.0
      %2198 = vmatpush1.msra.mxu0 0.0
      %2199 = vmatprep.subr.mxu0 0.0
      %2200 = vmatpush1.msra.mxu0 0.0
      %2201 = vmatprep.subr.mxu0 0.0
      %2202 = vmatpush1.msra.mxu0 0.0
      %2203 = vmatprep.subr.mxu0 0.0
      %2204 = vmatpush1.msra.mxu0 0.0
      %2205 = vmatprep.subr.mxu0 0.0
      %2206 = vmatpush1.msra.mxu0 0.0
      %2207 = vmatprep.subr.mxu0 0.0
      %2208 = vmatpush1.msra.mxu0 0.0
      %2209 = vmatprep.subr.mxu0 0.0
      %2210 = vmatpush1.msra.mxu0 0.0
      %2211 = vmatprep.subr.mxu0 0.0
      %2212 = vmatpush1.msra.mxu0 0.0
      %2213 = vmatprep.subr.mxu0 0.0
      %2214 = vmatpush1.msra.mxu0 0.0
      %2215 = vmatprep.subr.mxu0 0.0
      %2216 = vmatpush1.msra.mxu0 0.0
      %2217 = vmatprep.subr.mxu0 0.0
      %2218 = vmatpush1.msra.mxu0 0.0
      %2219 = vmatprep.subr.mxu0 0.0
      %2220 = vmatpush1.msra.mxu0 0.0
      %2221 = vmatprep.mubr.f32.mxu0 0.0
      %2222 = vmatmul.mubr.f32.gmra.mrb[0].mxu0 %v2134
      %v2223 = vpop.f32.mrb[0].mxu0
      %v2224 = vadd.f32 %v2132, %v2223
      %v2225 = vpop.f32.mrb[0].mxu0
      %2226 = vmatprep.mubr.f32.mxu0 0.0
      %2227 = vmatmul.mubr.f32.gmra.mrb[0].mxu0 %v2137
      %v2228 = vpop.f32.mrb[0].mxu0
      %v2229 = vadd.f32 %v2132, %v2228
      %v2230 = vpop.f32.mrb[0].mxu0
      %2231 = vmatprep.mubr.f32.mxu0 0.0
      %2232 = vmatmul.mubr.f32.gmra.mrb[0].mxu0 %v2140
      %v2233 = vpop.f32.mrb[0].mxu0
      %v2234 = vadd.f32 %v2132, %v2233
      %v2235 = vpop.f32.mrb[0].mxu0
      %2236 = vmatprep.mubr.f32.mxu0 0.0
      %2237 = vmatmul.mubr.f32.gmra.mrb[0].mxu0 %v2143
      %v2238 = vpop.f32.mrb[0].mxu0
      %v2239 = vadd.f32 %v2132, %v2238
      %v2240 = vpop.f32.mrb[0].mxu0
      %2241 = vmatprep.mubr.f32.mxu0 0.0
      %2242 = vmatmul.mubr.f32.gmra.mrb[0].mxu0 %v2146
      %v2243 = vpop.f32.mrb[0].mxu0
      %v2244 = vadd.f32 %v2132, %v2243
      %v2245 = vpop.f32.mrb[0].mxu0
      %2246 = vmatprep.mubr.f32.mxu0 0.0
      %2247 = vmatmul.mubr.f32.gmra.mrb[0].mxu0 %v2149
      %v2248 = vpop.f32.mrb[0].mxu0
      %v2249 = vadd.f32 %v2132, %v2248
      %v2250 = vpop.f32.mrb[0].mxu0
      %2251 = vmatprep.mubr.f32.mxu0 0.0
      %2252 = vmatmul.mubr.f32.gmra.mrb[0].mxu0 %v2152
      %v2253 = vpop.f32.mrb[0].mxu0
      %v2254 = vadd.f32 %v2132, %v2253
      %v2255 = vpop.f32.mrb[0].mxu0
      %2256 = vmatprep.mubr.f32.mxu0 0.0
      %2257 = vmatmul.mubr.f32.gmra.mrb[0].mxu0 %v2155
      %v2258 = vpop.f32.mrb[0].mxu0
      %v2259 = vadd.f32 %v2132, %v2258
      %v2260 = vpop.f32.mrb[0].mxu0
      %2261 = vdwg.mxu0
      %v2262 = vadd.f32 %v1567, %v2224
      %v2263 = vadd.f32 %v1568, %v2229
      %v2264 = vadd.f32 %v1569, %v2234
      %v2265 = vadd.f32 %v1570, %v2239
      %v2266 = vadd.f32 %v1571, %v2244
      %v2267 = vadd.f32 %v1572, %v2249
      %v2268 = vadd.f32 %v1573, %v2254
      %v2269 = vadd.f32 %v1574, %v2259
      %2278 = vrot.lane.b32.xlu0 %v2224, 112
      %v2279 = vpop.permute.xlu0 %2278
      %2280 = vrot.lane.b32.xlu0 %v2229, 112
      %v2281 = vpop.permute.xlu0 %2280
      %2282 = vrot.lane.b32.xlu0 %v2234, 112
      %v2283 = vpop.permute.xlu0 %2282
      %2284 = vrot.lane.b32.xlu0 %v2239, 112
      %v2285 = vpop.permute.xlu0 %2284
      %2286 = vrot.lane.b32.xlu0 %v2244, 112
      %v2287 = vpop.permute.xlu0 %2286
      %2288 = vrot.lane.b32.xlu0 %v2249, 112
      %v2289 = vpop.permute.xlu0 %2288
      %2290 = vrot.lane.b32.xlu0 %v2254, 112
      %v2291 = vpop.permute.xlu0 %2290
      %2292 = vrot.lane.b32.xlu0 %v2259, 112
      %v2293 = vpop.permute.xlu0 %2292
      %v2302 = vadd.f32 %v1607, %v2279
      %v2303 = vadd.f32 %v1608, %v2281
      %v2304 = vadd.f32 %v1609, %v2283
      %v2305 = vadd.f32 %v1610, %v2285
      %v2306 = vadd.f32 %v1611, %v2287
      %v2307 = vadd.f32 %v1612, %v2289
      %v2308 = vadd.f32 %v1613, %v2291
      %v2309 = vadd.f32 %v1614, %v2293
      %s2310 = scalar_lea.vmem %s1, 96
      %v2311 = vld [vmem:[%s2310] sm:$0xff]
      %v2312 = vld [vmem:[%s2310 + $0x8] sm:$0xff]
      %v2313 = vld [vmem:[%s2310 + $0x13] sm:$0x1]
      %v2314 = vld [vmem:[%s2310 + $0x14] sm:$0x1]
      %v2315 = vld [vmem:[%s2310 + $0x15] sm:$0x1]
      %v2316 = vld [vmem:[%s2310 + $0x16] sm:$0x1]
      %v2317 = vld [vmem:[%s2310 + $0x17] sm:$0x1]
      %v2318 = vld [vmem:[%s2310 + $0x18] sm:$0x1]
      %v2319 = vld [vmem:[%s2310 + $0x19] sm:$0x1]
      %v2320 = vld [vmem:[%s2310 + $0x1a] sm:$0x1]
      %s2321 = scalar_lea.vmem %s2, 120
      %v2322 = vld [vmem:[%s2321] sm:$0xff]
      %v2323 = vld [vmem:[%s2321 + $0x8] sm:$0xff]
      %v2324 = vld [vmem:[%s2321 + $0x10] sm:$0xff]
      %v2325 = vld [vmem:[%s2321 + $0x18] sm:$0xff]
      %v2326 = vld [vmem:[%s2321 + $0x20] sm:$0x1]
      %v2327 = vlaneseq
      %v2328 = vshrl.u32 %v2327, 7
      %v2329 = vsub.s32 0, %v2328
      %v2330 = vrot.slane %v2313, %v2329
      %v2332 = vsel %vm198, %v2302, 0
      %v2335 = vsel %vm198, %v2303, 0
      %v2338 = vsel %vm198, %v2304, 0
      %v2341 = vsel %vm198, %v2305, 0
      %v2344 = vsel %vm198, %v2306, 0
      %v2347 = vsel %vm198, %v2307, 0
      %v2350 = vsel %vm198, %v2308, 0
      %v2353 = vsel %vm198, %v2309, 0
      %2355 = vmatprep.subr.mxu0 0.0
      %2356 = vmatpush1.msra.mxu0 %v2311
      %2357 = vmatprep.subr.mxu0 0.0
      %2358 = vmatpush1.msra.mxu0 %v2312
      %2359 = vmatprep.subr.mxu0 0.0
      %2360 = vmatpush1.msra.mxu0 0.0
      %2361 = vmatprep.subr.mxu0 0.0
      %2362 = vmatpush1.msra.mxu0 0.0
      %2363 = vmatprep.subr.mxu0 0.0
      %2364 = vmatpush1.msra.mxu0 0.0
      %2365 = vmatprep.subr.mxu0 0.0
      %2366 = vmatpush1.msra.mxu0 0.0
      %2367 = vmatprep.subr.mxu0 0.0
      %2368 = vmatpush1.msra.mxu0 0.0
      %2369 = vmatprep.subr.mxu0 0.0
      %2370 = vmatpush1.msra.mxu0 0.0
      %2371 = vmatprep.subr.mxu0 0.0
      %2372 = vmatpush1.msra.mxu0 0.0
      %2373 = vmatprep.subr.mxu0 0.0
      %2374 = vmatpush1.msra.mxu0 0.0
      %2375 = vmatprep.subr.mxu0 0.0
      %2376 = vmatpush1.msra.mxu0 0.0
      %2377 = vmatprep.subr.mxu0 0.0
      %2378 = vmatpush1.msra.mxu0 0.0
      %2379 = vmatprep.subr.mxu0 0.0
      %2380 = vmatpush1.msra.mxu0 0.0
      %2381 = vmatprep.subr.mxu0 0.0
      %2382 = vmatpush1.msra.mxu0 0.0
      %2383 = vmatprep.subr.mxu0 0.0
      %2384 = vmatpush1.msra.mxu0 0.0
      %2385 = vmatprep.subr.mxu0 0.0
      %2386 = vmatpush1.msra.mxu0 0.0
      %2387 = vmatprep.subr.mxu0 0.0
      %2388 = vmatpush1.msra.mxu0 0.0
      %2389 = vmatprep.subr.mxu0 0.0
      %2390 = vmatpush1.msra.mxu0 0.0
      %2391 = vmatprep.subr.mxu0 0.0
      %2392 = vmatpush1.msra.mxu0 0.0
      %2393 = vmatprep.subr.mxu0 0.0
      %2394 = vmatpush1.msra.mxu0 0.0
      %2395 = vmatprep.subr.mxu0 0.0
      %2396 = vmatpush1.msra.mxu0 0.0
      %2397 = vmatprep.subr.mxu0 0.0
      %2398 = vmatpush1.msra.mxu0 0.0
      %2399 = vmatprep.subr.mxu0 0.0
      %2400 = vmatpush1.msra.mxu0 0.0
      %2401 = vmatprep.subr.mxu0 0.0
      %2402 = vmatpush1.msra.mxu0 0.0
      %2403 = vmatprep.subr.mxu0 0.0
      %2404 = vmatpush1.msra.mxu0 0.0
      %2405 = vmatprep.subr.mxu0 0.0
      %2406 = vmatpush1.msra.mxu0 0.0
      %2407 = vmatprep.subr.mxu0 0.0
      %2408 = vmatpush1.msra.mxu0 0.0
      %2409 = vmatprep.subr.mxu0 0.0
      %2410 = vmatpush1.msra.mxu0 0.0
      %2411 = vmatprep.subr.mxu0 0.0
      %2412 = vmatpush1.msra.mxu0 0.0
      %2413 = vmatprep.subr.mxu0 0.0
      %2414 = vmatpush1.msra.mxu0 0.0
      %2415 = vmatprep.subr.mxu0 0.0
      %2416 = vmatpush1.msra.mxu0 0.0
      %2417 = vmatprep.subr.mxu0 0.0
      %2418 = vmatpush1.msra.mxu0 0.0
      %2419 = vmatprep.mubr.f32.mxu0 0.0
      %2420 = vmatmul.mubr.f32.gmra.mrb[0].mxu0 %v2332
      %v2421 = vpop.f32.mrb[0].mxu0
      %v2422 = vadd.f32 %v2330, %v2421
      %v2423 = vpop.f32.mrb[0].mxu0
      %2424 = vmatprep.mubr.f32.mxu0 0.0
      %2425 = vmatmul.mubr.f32.gmra.mrb[0].mxu0 %v2335
      %v2426 = vpop.f32.mrb[0].mxu0
      %v2427 = vadd.f32 %v2330, %v2426
      %v2428 = vpop.f32.mrb[0].mxu0
      %2429 = vmatprep.mubr.f32.mxu0 0.0
      %2430 = vmatmul.mubr.f32.gmra.mrb[0].mxu0 %v2338
      %v2431 = vpop.f32.mrb[0].mxu0
      %v2432 = vadd.f32 %v2330, %v2431
      %v2433 = vpop.f32.mrb[0].mxu0
      %2434 = vmatprep.mubr.f32.mxu0 0.0
      %2435 = vmatmul.mubr.f32.gmra.mrb[0].mxu0 %v2341
      %v2436 = vpop.f32.mrb[0].mxu0
      %v2437 = vadd.f32 %v2330, %v2436
      %v2438 = vpop.f32.mrb[0].mxu0
      %2439 = vmatprep.mubr.f32.mxu0 0.0
      %2440 = vmatmul.mubr.f32.gmra.mrb[0].mxu0 %v2344
      %v2441 = vpop.f32.mrb[0].mxu0
      %v2442 = vadd.f32 %v2330, %v2441
      %v2443 = vpop.f32.mrb[0].mxu0
      %2444 = vmatprep.mubr.f32.mxu0 0.0
      %2445 = vmatmul.mubr.f32.gmra.mrb[0].mxu0 %v2347
      %v2446 = vpop.f32.mrb[0].mxu0
      %v2447 = vadd.f32 %v2330, %v2446
      %v2448 = vpop.f32.mrb[0].mxu0
      %2449 = vmatprep.mubr.f32.mxu0 0.0
      %2450 = vmatmul.mubr.f32.gmra.mrb[0].mxu0 %v2350
      %v2451 = vpop.f32.mrb[0].mxu0
      %v2452 = vadd.f32 %v2330, %v2451
      %v2453 = vpop.f32.mrb[0].mxu0
      %2454 = vmatprep.mubr.f32.mxu0 0.0
      %2455 = vmatmul.mubr.f32.gmra.mrb[0].mxu0 %v2353
      %v2456 = vpop.f32.mrb[0].mxu0
      %v2457 = vadd.f32 %v2330, %v2456
      %v2458 = vpop.f32.mrb[0].mxu0
      %2459 = vdwg.mxu0
      %vm2460 = vcmp.gt.f32.partialorder %v2422, 0.0
      %vm2461 = vcmp.gt.f32.partialorder %v2427, 0.0
      %vm2462 = vcmp.gt.f32.partialorder %v2432, 0.0
      %vm2463 = vcmp.gt.f32.partialorder %v2437, 0.0
      %vm2464 = vcmp.gt.f32.partialorder %v2442, 0.0
      %vm2465 = vcmp.gt.f32.partialorder %v2447, 0.0
      %vm2466 = vcmp.gt.f32.partialorder %v2452, 0.0
      %vm2467 = vcmp.gt.f32.partialorder %v2457, 0.0
      %v2468 = vlaneseq
      %v2469 = vshrl.u32 %v2468, 7
      %v2470 = vsub.s32 0, %v2469
      %v2471 = vrot.slane %v2316, %v2470
      %v2472 = vmul.f32 %v2471, %v2422
      %v2473 = vmul.f32 %v2471, %v2427
      %v2474 = vmul.f32 %v2471, %v2432
      %v2475 = vmul.f32 %v2471, %v2437
      %v2476 = vmul.f32 %v2471, %v2442
      %v2477 = vmul.f32 %v2471, %v2447
      %v2478 = vmul.f32 %v2471, %v2452
      %v2479 = vmul.f32 %v2471, %v2457
      %v2480 = vsel %vm2460, %v2422, %v2472
      %v2481 = vsel %vm2461, %v2427, %v2473
      %v2482 = vsel %vm2462, %v2432, %v2474
      %v2483 = vsel %vm2463, %v2437, %v2475
      %v2484 = vsel %vm2464, %v2442, %v2476
      %v2485 = vsel %vm2465, %v2447, %v2477
      %v2486 = vsel %vm2466, %v2452, %v2478
      %v2487 = vsel %vm2467, %v2457, %v2479
      %v2488 = vsel %vm356, %v2480, 0.0
      %v2489 = vsel %vm356, %v2481, 0.0
      %v2490 = vadd.f32 %v2488, %v2489
      %v2491 = vsel %vm356, %v2482, 0.0
      %v2492 = vadd.f32 %v2490, %v2491
      %v2493 = vsel %vm356, %v2483, 0.0
      %v2494 = vadd.f32 %v2492, %v2493
      %v2495 = vsel %vm356, %v2484, 0.0
      %v2496 = vadd.f32 %v2494, %v2495
      %v2497 = vsel %vm356, %v2485, 0.0
      %v2498 = vadd.f32 %v2496, %v2497
      %v2499 = vsel %vm356, %v2486, 0.0
      %v2500 = vadd.f32 %v2498, %v2499
      %v2501 = vsel %vm356, %v2487, 0.0
      %v2502 = vadd.f32 %v2500, %v2501
      %2503 = vadd.xlane.f32.xlu0 %v2502
      %v2504 = vpop.xlane.xlu0 %2503
      %v2505 = vrot.slane %v2504, 4
      %v2506 = vadd.f32 %v2504, %v2505
      %v2507 = vrot.slane %v2506, 2
      %v2508 = vadd.f32 %v2506, %v2507
      %v2509 = vrot.slane %v2508, 1
      %v2510 = vadd.f32 %v2508, %v2509
      %s2511 = vtos %v2510
      %v2512 = vmul.f32 %v2480, %v2480
      %v2513 = vmul.f32 %v2481, %v2481
      %v2514 = vmul.f32 %v2482, %v2482
      %v2515 = vmul.f32 %v2483, %v2483
      %v2516 = vmul.f32 %v2484, %v2484
      %v2517 = vmul.f32 %v2485, %v2485
      %v2518 = vmul.f32 %v2486, %v2486
      %v2519 = vmul.f32 %v2487, %v2487
      %v2520 = vsel %vm356, %v2512, 0.0
      %v2521 = vsel %vm356, %v2513, 0.0
      %v2522 = vadd.f32 %v2520, %v2521
      %v2523 = vsel %vm356, %v2514, 0.0
      %v2524 = vadd.f32 %v2522, %v2523
      %v2525 = vsel %vm356, %v2515, 0.0
      %v2526 = vadd.f32 %v2524, %v2525
      %v2527 = vsel %vm356, %v2516, 0.0
      %v2528 = vadd.f32 %v2526, %v2527
      %v2529 = vsel %vm356, %v2517, 0.0
      %v2530 = vadd.f32 %v2528, %v2529
      %v2531 = vsel %vm356, %v2518, 0.0
      %v2532 = vadd.f32 %v2530, %v2531
      %v2533 = vsel %vm356, %v2519, 0.0
      %v2534 = vadd.f32 %v2532, %v2533
      %2535 = vadd.xlane.f32.xlu0 %v2534
      %v2536 = vpop.xlane.xlu0 %2535
      %v2537 = vrot.slane %v2536, 4
      %v2538 = vadd.f32 %v2536, %v2537
      %v2539 = vrot.slane %v2538, 2
      %v2540 = vadd.f32 %v2538, %v2539
      %v2541 = vrot.slane %v2540, 1
      %v2542 = vadd.f32 %v2540, %v2541
      %s2543 = vtos %v2542
      %s2544 = smul.f32 %s2511, 0.00048828125
      %s2545 = smul.f32 %s2543, 0.00048828125
      %s2546 = smul.f32 %s2544, %s2544
      %s2547 = ssub.f32 %s2545, %s2546
      %s2548 = sadd.f32 %s2547, 1e-05
      %v2549 = vstv %s2548
      %v2550 = vrsqrt.pop %v2549
      %s2551 = vtos %v2550
      %v2552 = vstv %s2544
      %v2553 = vsub.f32 %v2480, %v2552
      %v2554 = vsub.f32 %v2481, %v2552
      %v2555 = vsub.f32 %v2482, %v2552
      %v2556 = vsub.f32 %v2483, %v2552
      %v2557 = vsub.f32 %v2484, %v2552
      %v2558 = vsub.f32 %v2485, %v2552
      %v2559 = vsub.f32 %v2486, %v2552
      %v2560 = vsub.f32 %v2487, %v2552
      %v2561 = vstv %s2551
      %v2562 = vmul.f32 %v2314, %v2561
      %v2563 = vlaneseq
      %v2564 = vshrl.u32 %v2563, 7
      %v2565 = vsub.s32 0, %v2564
      %v2566 = vrot.slane %v2562, %v2565
      %v2567 = vmul.f32 %v2553, %v2566
      %v2568 = vmul.f32 %v2554, %v2566
      %v2569 = vmul.f32 %v2555, %v2566
      %v2570 = vmul.f32 %v2556, %v2566
      %v2571 = vmul.f32 %v2557, %v2566
      %v2572 = vmul.f32 %v2558, %v2566
      %v2573 = vmul.f32 %v2559, %v2566
      %v2574 = vmul.f32 %v2560, %v2566
      %v2575 = vlaneseq
      %v2576 = vshrl.u32 %v2575, 7
      %v2577 = vsub.s32 0, %v2576
      %v2578 = vrot.slane %v2315, %v2577
      %v2579 = vadd.f32 %v2567, %v2578
      %v2580 = vadd.f32 %v2568, %v2578
      %v2581 = vadd.f32 %v2569, %v2578
      %v2582 = vadd.f32 %v2570, %v2578
      %v2583 = vadd.f32 %v2571, %v2578
      %v2584 = vadd.f32 %v2572, %v2578
      %v2585 = vadd.f32 %v2573, %v2578
      %v2586 = vadd.f32 %v2574, %v2578
      %v2587 = vld [vmem:[%s2310 + $0x10] sm:$0x1]
      %v2596 = vrot.slane %v2579, 7
      %v2597 = vrot.slane %v2580, 7
      %v2598 = vsel %vm465, %v2596, %v2597
      %v2599 = vrot.slane %v2581, 7
      %v2600 = vsel %vm465, %v2597, %v2599
      %v2601 = vrot.slane %v2582, 7
      %v2602 = vsel %vm465, %v2599, %v2601
      %v2603 = vrot.slane %v2583, 7
      %v2604 = vsel %vm465, %v2601, %v2603
      %v2605 = vrot.slane %v2584, 7
      %v2606 = vsel %vm465, %v2603, %v2605
      %v2607 = vrot.slane %v2585, 7
      %v2608 = vsel %vm465, %v2605, %v2607
      %v2609 = vrot.slane %v2586, 7
      %v2610 = vsel %vm465, %v2607, %v2609
      %v2619 = vsel %vm465, 0.0, %v2596
      %v2620 = vlaneseq
      %v2621 = vshrl.u32 %v2620, 7
      %v2622 = vsub.s32 0, %v2621
      %v2623 = vrot.slane %v2587, %v2622
      %v2624 = vmul.f32 %v2619, %v2623
      %v2625 = vmul.f32 %v2598, %v2623
      %v2626 = vmul.f32 %v2600, %v2623
      %v2627 = vmul.f32 %v2602, %v2623
      %v2628 = vmul.f32 %v2604, %v2623
      %v2629 = vmul.f32 %v2606, %v2623
      %v2630 = vmul.f32 %v2608, %v2623
      %v2631 = vmul.f32 %v2610, %v2623
      %v2632 = vadd.f32 %v2624, 0.0
      %v2633 = vadd.f32 %v2625, 0.0
      %v2634 = vadd.f32 %v2626, 0.0
      %v2635 = vadd.f32 %v2627, 0.0
      %v2636 = vadd.f32 %v2628, 0.0
      %v2637 = vadd.f32 %v2629, 0.0
      %v2638 = vadd.f32 %v2630, 0.0
      %v2639 = vadd.f32 %v2631, 0.0
      %v2640 = vld [vmem:[%s2310 + $0x11] sm:$0x1]
      %v2641 = vlaneseq
      %v2642 = vshrl.u32 %v2641, 7
      %v2643 = vsub.s32 0, %v2642
      %v2644 = vrot.slane %v2640, %v2643
      %v2645 = vmul.f32 %v2579, %v2644
      %v2646 = vmul.f32 %v2580, %v2644
      %v2647 = vmul.f32 %v2581, %v2644
      %v2648 = vmul.f32 %v2582, %v2644
      %v2649 = vmul.f32 %v2583, %v2644
      %v2650 = vmul.f32 %v2584, %v2644
      %v2651 = vmul.f32 %v2585, %v2644
      %v2652 = vmul.f32 %v2586, %v2644
      %v2653 = vadd.f32 %v2632, %v2645
      %v2654 = vadd.f32 %v2633, %v2646
      %v2655 = vadd.f32 %v2634, %v2647
      %v2656 = vadd.f32 %v2635, %v2648
      %v2657 = vadd.f32 %v2636, %v2649
      %v2658 = vadd.f32 %v2637, %v2650
      %v2659 = vadd.f32 %v2638, %v2651
      %v2660 = vadd.f32 %v2639, %v2652
      %v2661 = vld [vmem:[%s2310 + $0x12] sm:$0x1]
      %v2662 = vrot.slane %v2579, 1
      %v2663 = vrot.slane %v2580, 1
      %v2664 = vsel %vm532, %v2662, %v2663
      %v2665 = vrot.slane %v2581, 1
      %v2666 = vsel %vm532, %v2663, %v2665
      %v2667 = vrot.slane %v2582, 1
      %v2668 = vsel %vm532, %v2665, %v2667
      %v2669 = vrot.slane %v2583, 1
      %v2670 = vsel %vm532, %v2667, %v2669
      %v2671 = vrot.slane %v2584, 1
      %v2672 = vsel %vm532, %v2669, %v2671
      %v2673 = vrot.slane %v2585, 1
      %v2674 = vsel %vm532, %v2671, %v2673
      %v2675 = vrot.slane %v2586, 1
      %v2676 = vsel %vm532, %v2673, %v2675
      %v2685 = vsel %vm532, %v2675, 0.0
      %v2686 = vlaneseq
      %v2687 = vshrl.u32 %v2686, 7
      %v2688 = vsub.s32 0, %v2687
      %v2689 = vrot.slane %v2661, %v2688
      %v2690 = vmul.f32 %v2664, %v2689
      %v2691 = vmul.f32 %v2666, %v2689
      %v2692 = vmul.f32 %v2668, %v2689
      %v2693 = vmul.f32 %v2670, %v2689
      %v2694 = vmul.f32 %v2672, %v2689
      %v2695 = vmul.f32 %v2674, %v2689
      %v2696 = vmul.f32 %v2676, %v2689
      %v2697 = vmul.f32 %v2685, %v2689
      %v2698 = vadd.f32 %v2653, %v2690
      %v2699 = vadd.f32 %v2654, %v2691
      %v2700 = vadd.f32 %v2655, %v2692
      %v2701 = vadd.f32 %v2656, %v2693
      %v2702 = vadd.f32 %v2657, %v2694
      %v2703 = vadd.f32 %v2658, %v2695
      %v2704 = vadd.f32 %v2659, %v2696
      %v2705 = vadd.f32 %v2660, %v2697
      %v2706 = vlaneseq
      %v2707 = vshrl.u32 %v2706, 7
      %v2708 = vsub.s32 0, %v2707
      %v2709 = vrot.slane %v2317, %v2708
      %v2710 = vadd.f32 %v2698, %v2709
      %v2711 = vadd.f32 %v2699, %v2709
      %v2712 = vadd.f32 %v2700, %v2709
      %v2713 = vadd.f32 %v2701, %v2709
      %v2714 = vadd.f32 %v2702, %v2709
      %v2715 = vadd.f32 %v2703, %v2709
      %v2716 = vadd.f32 %v2704, %v2709
      %v2717 = vadd.f32 %v2705, %v2709
      %vm2718 = vcmp.gt.f32.partialorder %v2710, 0.0
      %vm2719 = vcmp.gt.f32.partialorder %v2711, 0.0
      %vm2720 = vcmp.gt.f32.partialorder %v2712, 0.0
      %vm2721 = vcmp.gt.f32.partialorder %v2713, 0.0
      %vm2722 = vcmp.gt.f32.partialorder %v2714, 0.0
      %vm2723 = vcmp.gt.f32.partialorder %v2715, 0.0
      %vm2724 = vcmp.gt.f32.partialorder %v2716, 0.0
      %vm2725 = vcmp.gt.f32.partialorder %v2717, 0.0
      %v2726 = vlaneseq
      %v2727 = vshrl.u32 %v2726, 7
      %v2728 = vsub.s32 0, %v2727
      %v2729 = vrot.slane %v2320, %v2728
      %v2730 = vmul.f32 %v2729, %v2710
      %v2731 = vmul.f32 %v2729, %v2711
      %v2732 = vmul.f32 %v2729, %v2712
      %v2733 = vmul.f32 %v2729, %v2713
      %v2734 = vmul.f32 %v2729, %v2714
      %v2735 = vmul.f32 %v2729, %v2715
      %v2736 = vmul.f32 %v2729, %v2716
      %v2737 = vmul.f32 %v2729, %v2717
      %v2738 = vsel %vm2718, %v2710, %v2730
      %v2739 = vsel %vm2719, %v2711, %v2731
      %v2740 = vsel %vm2720, %v2712, %v2732
      %v2741 = vsel %vm2721, %v2713, %v2733
      %v2742 = vsel %vm2722, %v2714, %v2734
      %v2743 = vsel %vm2723, %v2715, %v2735
      %v2744 = vsel %vm2724, %v2716, %v2736
      %v2745 = vsel %vm2725, %v2717, %v2737
      %v2746 = vsel %vm356, %v2738, 0.0
      %v2747 = vsel %vm356, %v2739, 0.0
      %v2748 = vadd.f32 %v2746, %v2747
      %v2749 = vsel %vm356, %v2740, 0.0
      %v2750 = vadd.f32 %v2748, %v2749
      %v2751 = vsel %vm356, %v2741, 0.0
      %v2752 = vadd.f32 %v2750, %v2751
      %v2753 = vsel %vm356, %v2742, 0.0
      %v2754 = vadd.f32 %v2752, %v2753
      %v2755 = vsel %vm356, %v2743, 0.0
      %v2756 = vadd.f32 %v2754, %v2755
      %v2757 = vsel %vm356, %v2744, 0.0
      %v2758 = vadd.f32 %v2756, %v2757
      %v2759 = vsel %vm356, %v2745, 0.0
      %v2760 = vadd.f32 %v2758, %v2759
      %2761 = vadd.xlane.f32.xlu0 %v2760
      %v2762 = vpop.xlane.xlu0 %2761
      %v2763 = vrot.slane %v2762, 4
      %v2764 = vadd.f32 %v2762, %v2763
      %v2765 = vrot.slane %v2764, 2
      %v2766 = vadd.f32 %v2764, %v2765
      %v2767 = vrot.slane %v2766, 1
      %v2768 = vadd.f32 %v2766, %v2767
      %s2769 = vtos %v2768
      %v2770 = vmul.f32 %v2738, %v2738
      %v2771 = vmul.f32 %v2739, %v2739
      %v2772 = vmul.f32 %v2740, %v2740
      %v2773 = vmul.f32 %v2741, %v2741
      %v2774 = vmul.f32 %v2742, %v2742
      %v2775 = vmul.f32 %v2743, %v2743
      %v2776 = vmul.f32 %v2744, %v2744
      %v2777 = vmul.f32 %v2745, %v2745
      %v2778 = vsel %vm356, %v2770, 0.0
      %v2779 = vsel %vm356, %v2771, 0.0
      %v2780 = vadd.f32 %v2778, %v2779
      %v2781 = vsel %vm356, %v2772, 0.0
      %v2782 = vadd.f32 %v2780, %v2781
      %v2783 = vsel %vm356, %v2773, 0.0
      %v2784 = vadd.f32 %v2782, %v2783
      %v2785 = vsel %vm356, %v2774, 0.0
      %v2786 = vadd.f32 %v2784, %v2785
      %v2787 = vsel %vm356, %v2775, 0.0
      %v2788 = vadd.f32 %v2786, %v2787
      %v2789 = vsel %vm356, %v2776, 0.0
      %v2790 = vadd.f32 %v2788, %v2789
      %v2791 = vsel %vm356, %v2777, 0.0
      %v2792 = vadd.f32 %v2790, %v2791
      %2793 = vadd.xlane.f32.xlu0 %v2792
      %v2794 = vpop.xlane.xlu0 %2793
      %v2795 = vrot.slane %v2794, 4
      %v2796 = vadd.f32 %v2794, %v2795
      %v2797 = vrot.slane %v2796, 2
      %v2798 = vadd.f32 %v2796, %v2797
      %v2799 = vrot.slane %v2798, 1
      %v2800 = vadd.f32 %v2798, %v2799
      %s2801 = vtos %v2800
      %s2802 = smul.f32 %s2769, 0.00048828125
      %s2803 = smul.f32 %s2801, 0.00048828125
      %s2804 = smul.f32 %s2802, %s2802
      %s2805 = ssub.f32 %s2803, %s2804
      %s2806 = sadd.f32 %s2805, 1e-05
      %v2807 = vstv %s2806
      %v2808 = vrsqrt.pop %v2807
      %s2809 = vtos %v2808
      %v2810 = vstv %s2802
      %v2811 = vsub.f32 %v2738, %v2810
      %v2812 = vsub.f32 %v2739, %v2810
      %v2813 = vsub.f32 %v2740, %v2810
      %v2814 = vsub.f32 %v2741, %v2810
      %v2815 = vsub.f32 %v2742, %v2810
      %v2816 = vsub.f32 %v2743, %v2810
      %v2817 = vsub.f32 %v2744, %v2810
      %v2818 = vsub.f32 %v2745, %v2810
      %v2819 = vstv %s2809
      %v2820 = vmul.f32 %v2318, %v2819
      %v2821 = vlaneseq
      %v2822 = vshrl.u32 %v2821, 7
      %v2823 = vsub.s32 0, %v2822
      %v2824 = vrot.slane %v2820, %v2823
      %v2825 = vmul.f32 %v2811, %v2824
      %v2826 = vmul.f32 %v2812, %v2824
      %v2827 = vmul.f32 %v2813, %v2824
      %v2828 = vmul.f32 %v2814, %v2824
      %v2829 = vmul.f32 %v2815, %v2824
      %v2830 = vmul.f32 %v2816, %v2824
      %v2831 = vmul.f32 %v2817, %v2824
      %v2832 = vmul.f32 %v2818, %v2824
      %v2833 = vlaneseq
      %v2834 = vshrl.u32 %v2833, 7
      %v2835 = vsub.s32 0, %v2834
      %v2836 = vrot.slane %v2319, %v2835
      %v2837 = vadd.f32 %v2825, %v2836
      %v2838 = vadd.f32 %v2826, %v2836
      %v2839 = vadd.f32 %v2827, %v2836
      %v2840 = vadd.f32 %v2828, %v2836
      %v2841 = vadd.f32 %v2829, %v2836
      %v2842 = vadd.f32 %v2830, %v2836
      %v2843 = vadd.f32 %v2831, %v2836
      %v2844 = vadd.f32 %v2832, %v2836
      %v2845 = vlaneseq
      %v2846 = vshrl.u32 %v2845, 7
      %v2847 = vsub.s32 0, %v2846
      %v2848 = vrot.slane %v2326, %v2847
      %v2850 = vsel %vm356, %v2837, 0
      %v2853 = vsel %vm356, %v2838, 0
      %v2856 = vsel %vm356, %v2839, 0
      %v2859 = vsel %vm356, %v2840, 0
      %v2862 = vsel %vm356, %v2841, 0
      %v2865 = vsel %vm356, %v2842, 0
      %v2868 = vsel %vm356, %v2843, 0
      %v2871 = vsel %vm356, %v2844, 0
      %2873 = vmatprep.subr.mxu0 0.0
      %2874 = vmatpush1.msra.mxu0 %v2322
      %2875 = vmatprep.subr.mxu0 0.0
      %2876 = vmatpush1.msra.mxu0 %v2323
      %2877 = vmatprep.subr.mxu0 0.0
      %2878 = vmatpush1.msra.mxu0 %v2324
      %2879 = vmatprep.subr.mxu0 0.0
      %2880 = vmatpush1.msra.mxu0 %v2325
      %2881 = vmatprep.subr.mxu0 0.0
      %2882 = vmatpush1.msra.mxu0 0.0
      %2883 = vmatprep.subr.mxu0 0.0
      %2884 = vmatpush1.msra.mxu0 0.0
      %2885 = vmatprep.subr.mxu0 0.0
      %2886 = vmatpush1.msra.mxu0 0.0
      %2887 = vmatprep.subr.mxu0 0.0
      %2888 = vmatpush1.msra.mxu0 0.0
      %2889 = vmatprep.subr.mxu0 0.0
      %2890 = vmatpush1.msra.mxu0 0.0
      %2891 = vmatprep.subr.mxu0 0.0
      %2892 = vmatpush1.msra.mxu0 0.0
      %2893 = vmatprep.subr.mxu0 0.0
      %2894 = vmatpush1.msra.mxu0 0.0
      %2895 = vmatprep.subr.mxu0 0.0
      %2896 = vmatpush1.msra.mxu0 0.0
      %2897 = vmatprep.subr.mxu0 0.0
      %2898 = vmatpush1.msra.mxu0 0.0
      %2899 = vmatprep.subr.mxu0 0.0
      %2900 = vmatpush1.msra.mxu0 0.0
      %2901 = vmatprep.subr.mxu0 0.0
      %2902 = vmatpush1.msra.mxu0 0.0
      %2903 = vmatprep.subr.mxu0 0.0
      %2904 = vmatpush1.msra.mxu0 0.0
      %2905 = vmatprep.subr.mxu0 0.0
      %2906 = vmatpush1.msra.mxu0 0.0
      %2907 = vmatprep.subr.mxu0 0.0
      %2908 = vmatpush1.msra.mxu0 0.0
      %2909 = vmatprep.subr.mxu0 0.0
      %2910 = vmatpush1.msra.mxu0 0.0
      %2911 = vmatprep.subr.mxu0 0.0
      %2912 = vmatpush1.msra.mxu0 0.0
      %2913 = vmatprep.subr.mxu0 0.0
      %2914 = vmatpush1.msra.mxu0 0.0
      %2915 = vmatprep.subr.mxu0 0.0
      %2916 = vmatpush1.msra.mxu0 0.0
      %2917 = vmatprep.subr.mxu0 0.0
      %2918 = vmatpush1.msra.mxu0 0.0
      %2919 = vmatprep.subr.mxu0 0.0
      %2920 = vmatpush1.msra.mxu0 0.0
      %2921 = vmatprep.subr.mxu0 0.0
      %2922 = vmatpush1.msra.mxu0 0.0
      %2923 = vmatprep.subr.mxu0 0.0
      %2924 = vmatpush1.msra.mxu0 0.0
      %2925 = vmatprep.subr.mxu0 0.0
      %2926 = vmatpush1.msra.mxu0 0.0
      %2927 = vmatprep.subr.mxu0 0.0
      %2928 = vmatpush1.msra.mxu0 0.0
      %2929 = vmatprep.subr.mxu0 0.0
      %2930 = vmatpush1.msra.mxu0 0.0
      %2931 = vmatprep.subr.mxu0 0.0
      %2932 = vmatpush1.msra.mxu0 0.0
      %2933 = vmatprep.subr.mxu0 0.0
      %2934 = vmatpush1.msra.mxu0 0.0
      %2935 = vmatprep.subr.mxu0 0.0
      %2936 = vmatpush1.msra.mxu0 0.0
      %2937 = vmatprep.mubr.f32.mxu0 0.0
      %2938 = vmatmul.mubr.f32.gmra.mrb[0].mxu0 %v2850
      %v2939 = vpop.f32.mrb[0].mxu0
      %v2940 = vadd.f32 %v2848, %v2939
      %v2941 = vpop.f32.mrb[0].mxu0
      %2942 = vmatprep.mubr.f32.mxu0 0.0
      %2943 = vmatmul.mubr.f32.gmra.mrb[0].mxu0 %v2853
      %v2944 = vpop.f32.mrb[0].mxu0
      %v2945 = vadd.f32 %v2848, %v2944
      %v2946 = vpop.f32.mrb[0].mxu0
      %2947 = vmatprep.mubr.f32.mxu0 0.0
      %2948 = vmatmul.mubr.f32.gmra.mrb[0].mxu0 %v2856
      %v2949 = vpop.f32.mrb[0].mxu0
      %v2950 = vadd.f32 %v2848, %v2949
      %v2951 = vpop.f32.mrb[0].mxu0
      %2952 = vmatprep.mubr.f32.mxu0 0.0
      %2953 = vmatmul.mubr.f32.gmra.mrb[0].mxu0 %v2859
      %v2954 = vpop.f32.mrb[0].mxu0
      %v2955 = vadd.f32 %v2848, %v2954
      %v2956 = vpop.f32.mrb[0].mxu0
      %2957 = vmatprep.mubr.f32.mxu0 0.0
      %2958 = vmatmul.mubr.f32.gmra.mrb[0].mxu0 %v2862
      %v2959 = vpop.f32.mrb[0].mxu0
      %v2960 = vadd.f32 %v2848, %v2959
      %v2961 = vpop.f32.mrb[0].mxu0
      %2962 = vmatprep.mubr.f32.mxu0 0.0
      %2963 = vmatmul.mubr.f32.gmra.mrb[0].mxu0 %v2865
      %v2964 = vpop.f32.mrb[0].mxu0
      %v2965 = vadd.f32 %v2848, %v2964
      %v2966 = vpop.f32.mrb[0].mxu0
      %2967 = vmatprep.mubr.f32.mxu0 0.0
      %2968 = vmatmul.mubr.f32.gmra.mrb[0].mxu0 %v2868
      %v2969 = vpop.f32.mrb[0].mxu0
      %v2970 = vadd.f32 %v2848, %v2969
      %v2971 = vpop.f32.mrb[0].mxu0
      %2972 = vmatprep.mubr.f32.mxu0 0.0
      %2973 = vmatmul.mubr.f32.gmra.mrb[0].mxu0 %v2871
      %v2974 = vpop.f32.mrb[0].mxu0
      %v2975 = vadd.f32 %v2848, %v2974
      %v2976 = vpop.f32.mrb[0].mxu0
      %2977 = vdwg.mxu0
      %v2978 = vadd.f32 %v2262, %v2940
      %v2979 = vadd.f32 %v2263, %v2945
      %v2980 = vadd.f32 %v2264, %v2950
      %v2981 = vadd.f32 %v2265, %v2955
      %v2982 = vadd.f32 %v2266, %v2960
      %v2983 = vadd.f32 %v2267, %v2965
      %v2984 = vadd.f32 %v2268, %v2970
      %v2985 = vadd.f32 %v2269, %v2975
      %2994 = vrot.lane.b32.xlu0 %v2940, 112
      %v2995 = vpop.permute.xlu0 %2994
      %2996 = vrot.lane.b32.xlu0 %v2945, 112
      %v2997 = vpop.permute.xlu0 %2996
      %2998 = vrot.lane.b32.xlu0 %v2950, 112
      %v2999 = vpop.permute.xlu0 %2998
      %3000 = vrot.lane.b32.xlu0 %v2955, 112
      %v3001 = vpop.permute.xlu0 %3000
      %3002 = vrot.lane.b32.xlu0 %v2960, 112
      %v3003 = vpop.permute.xlu0 %3002
      %3004 = vrot.lane.b32.xlu0 %v2965, 112
      %v3005 = vpop.permute.xlu0 %3004
      %3006 = vrot.lane.b32.xlu0 %v2970, 112
      %v3007 = vpop.permute.xlu0 %3006
      %3008 = vrot.lane.b32.xlu0 %v2975, 112
      %v3009 = vpop.permute.xlu0 %3008
      %v3018 = vadd.f32 %v2302, %v2995
      %v3019 = vadd.f32 %v2303, %v2997
      %v3020 = vadd.f32 %v2304, %v2999
      %v3021 = vadd.f32 %v2305, %v3001
      %v3022 = vadd.f32 %v2306, %v3003
      %v3023 = vadd.f32 %v2307, %v3005
      %v3024 = vadd.f32 %v2308, %v3007
      %v3025 = vadd.f32 %v2309, %v3009
      %s3026 = scalar_lea.vmem %s1, 128
      %v3027 = vld [vmem:[%s3026] sm:$0xff]
      %v3028 = vld [vmem:[%s3026 + $0x8] sm:$0xff]
      %v3029 = vld [vmem:[%s3026 + $0x13] sm:$0x1]
      %v3030 = vld [vmem:[%s3026 + $0x14] sm:$0x1]
      %v3031 = vld [vmem:[%s3026 + $0x15] sm:$0x1]
      %v3032 = vld [vmem:[%s3026 + $0x16] sm:$0x1]
      %v3033 = vld [vmem:[%s3026 + $0x17] sm:$0x1]
      %v3034 = vld [vmem:[%s3026 + $0x18] sm:$0x1]
      %v3035 = vld [vmem:[%s3026 + $0x19] sm:$0x1]
      %v3036 = vld [vmem:[%s3026 + $0x1a] sm:$0x1]
      %s3037 = scalar_lea.vmem %s2, 160
      %v3038 = vld [vmem:[%s3037] sm:$0xff]
      %v3039 = vld [vmem:[%s3037 + $0x8] sm:$0xff]
      %v3040 = vld [vmem:[%s3037 + $0x10] sm:$0xff]
      %v3041 = vld [vmem:[%s3037 + $0x18] sm:$0xff]
      %v3042 = vld [vmem:[%s3037 + $0x20] sm:$0x1]
      %v3043 = vlaneseq
      %v3044 = vshrl.u32 %v3043, 7
      %v3045 = vsub.s32 0, %v3044
      %v3046 = vrot.slane %v3029, %v3045
      %v3048 = vsel %vm198, %v3018, 0
      %v3051 = vsel %vm198, %v3019, 0
      %v3054 = vsel %vm198, %v3020, 0
      %v3057 = vsel %vm198, %v3021, 0
      %v3060 = vsel %vm198, %v3022, 0
      %v3063 = vsel %vm198, %v3023, 0
      %v3066 = vsel %vm198, %v3024, 0
      %v3069 = vsel %vm198, %v3025, 0
      %3071 = vmatprep.subr.mxu0 0.0
      %3072 = vmatpush1.msra.mxu0 %v3027
      %3073 = vmatprep.subr.mxu0 0.0
      %3074 = vmatpush1.msra.mxu0 %v3028
      %3075 = vmatprep.subr.mxu0 0.0
      %3076 = vmatpush1.msra.mxu0 0.0
      %3077 = vmatprep.subr.mxu0 0.0
      %3078 = vmatpush1.msra.mxu0 0.0
      %3079 = vmatprep.subr.mxu0 0.0
      %3080 = vmatpush1.msra.mxu0 0.0
      %3081 = vmatprep.subr.mxu0 0.0
      %3082 = vmatpush1.msra.mxu0 0.0
      %3083 = vmatprep.subr.mxu0 0.0
      %3084 = vmatpush1.msra.mxu0 0.0
      %3085 = vmatprep.subr.mxu0 0.0
      %3086 = vmatpush1.msra.mxu0 0.0
      %3087 = vmatprep.subr.mxu0 0.0
      %3088 = vmatpush1.msra.mxu0 0.0
      %3089 = vmatprep.subr.mxu0 0.0
      %3090 = vmatpush1.msra.mxu0 0.0
      %3091 = vmatprep.subr.mxu0 0.0
      %3092 = vmatpush1.msra.mxu0 0.0
      %3093 = vmatprep.subr.mxu0 0.0
      %3094 = vmatpush1.msra.mxu0 0.0
      %3095 = vmatprep.subr.mxu0 0.0
      %3096 = vmatpush1.msra.mxu0 0.0
      %3097 = vmatprep.subr.mxu0 0.0
      %3098 = vmatpush1.msra.mxu0 0.0
      %3099 = vmatprep.subr.mxu0 0.0
      %3100 = vmatpush1.msra.mxu0 0.0
      %3101 = vmatprep.subr.mxu0 0.0
      %3102 = vmatpush1.msra.mxu0 0.0
      %3103 = vmatprep.subr.mxu0 0.0
      %3104 = vmatpush1.msra.mxu0 0.0
      %3105 = vmatprep.subr.mxu0 0.0
      %3106 = vmatpush1.msra.mxu0 0.0
      %3107 = vmatprep.subr.mxu0 0.0
      %3108 = vmatpush1.msra.mxu0 0.0
      %3109 = vmatprep.subr.mxu0 0.0
      %3110 = vmatpush1.msra.mxu0 0.0
      %3111 = vmatprep.subr.mxu0 0.0
      %3112 = vmatpush1.msra.mxu0 0.0
      %3113 = vmatprep.subr.mxu0 0.0
      %3114 = vmatpush1.msra.mxu0 0.0
      %3115 = vmatprep.subr.mxu0 0.0
      %3116 = vmatpush1.msra.mxu0 0.0
      %3117 = vmatprep.subr.mxu0 0.0
      %3118 = vmatpush1.msra.mxu0 0.0
      %3119 = vmatprep.subr.mxu0 0.0
      %3120 = vmatpush1.msra.mxu0 0.0
      %3121 = vmatprep.subr.mxu0 0.0
      %3122 = vmatpush1.msra.mxu0 0.0
      %3123 = vmatprep.subr.mxu0 0.0
      %3124 = vmatpush1.msra.mxu0 0.0
      %3125 = vmatprep.subr.mxu0 0.0
      %3126 = vmatpush1.msra.mxu0 0.0
      %3127 = vmatprep.subr.mxu0 0.0
      %3128 = vmatpush1.msra.mxu0 0.0
      %3129 = vmatprep.subr.mxu0 0.0
      %3130 = vmatpush1.msra.mxu0 0.0
      %3131 = vmatprep.subr.mxu0 0.0
      %3132 = vmatpush1.msra.mxu0 0.0
      %3133 = vmatprep.subr.mxu0 0.0
      %3134 = vmatpush1.msra.mxu0 0.0
      %3135 = vmatprep.mubr.f32.mxu0 0.0
      %3136 = vmatmul.mubr.f32.gmra.mrb[0].mxu0 %v3048
      %v3137 = vpop.f32.mrb[0].mxu0
      %v3138 = vadd.f32 %v3046, %v3137
      %v3139 = vpop.f32.mrb[0].mxu0
      %3140 = vmatprep.mubr.f32.mxu0 0.0
      %3141 = vmatmul.mubr.f32.gmra.mrb[0].mxu0 %v3051
      %v3142 = vpop.f32.mrb[0].mxu0
      %v3143 = vadd.f32 %v3046, %v3142
      %v3144 = vpop.f32.mrb[0].mxu0
      %3145 = vmatprep.mubr.f32.mxu0 0.0
      %3146 = vmatmul.mubr.f32.gmra.mrb[0].mxu0 %v3054
      %v3147 = vpop.f32.mrb[0].mxu0
      %v3148 = vadd.f32 %v3046, %v3147
      %v3149 = vpop.f32.mrb[0].mxu0
      %3150 = vmatprep.mubr.f32.mxu0 0.0
      %3151 = vmatmul.mubr.f32.gmra.mrb[0].mxu0 %v3057
      %v3152 = vpop.f32.mrb[0].mxu0
      %v3153 = vadd.f32 %v3046, %v3152
      %v3154 = vpop.f32.mrb[0].mxu0
      %3155 = vmatprep.mubr.f32.mxu0 0.0
      %3156 = vmatmul.mubr.f32.gmra.mrb[0].mxu0 %v3060
      %v3157 = vpop.f32.mrb[0].mxu0
      %v3158 = vadd.f32 %v3046, %v3157
      %v3159 = vpop.f32.mrb[0].mxu0
      %3160 = vmatprep.mubr.f32.mxu0 0.0
      %3161 = vmatmul.mubr.f32.gmra.mrb[0].mxu0 %v3063
      %v3162 = vpop.f32.mrb[0].mxu0
      %v3163 = vadd.f32 %v3046, %v3162
      %v3164 = vpop.f32.mrb[0].mxu0
      %3165 = vmatprep.mubr.f32.mxu0 0.0
      %3166 = vmatmul.mubr.f32.gmra.mrb[0].mxu0 %v3066
      %v3167 = vpop.f32.mrb[0].mxu0
      %v3168 = vadd.f32 %v3046, %v3167
      %v3169 = vpop.f32.mrb[0].mxu0
      %3170 = vmatprep.mubr.f32.mxu0 0.0
      %3171 = vmatmul.mubr.f32.gmra.mrb[0].mxu0 %v3069
      %v3172 = vpop.f32.mrb[0].mxu0
      %v3173 = vadd.f32 %v3046, %v3172
      %v3174 = vpop.f32.mrb[0].mxu0
      %3175 = vdwg.mxu0
      %vm3176 = vcmp.gt.f32.partialorder %v3138, 0.0
      %vm3177 = vcmp.gt.f32.partialorder %v3143, 0.0
      %vm3178 = vcmp.gt.f32.partialorder %v3148, 0.0
      %vm3179 = vcmp.gt.f32.partialorder %v3153, 0.0
      %vm3180 = vcmp.gt.f32.partialorder %v3158, 0.0
      %vm3181 = vcmp.gt.f32.partialorder %v3163, 0.0
      %vm3182 = vcmp.gt.f32.partialorder %v3168, 0.0
      %vm3183 = vcmp.gt.f32.partialorder %v3173, 0.0
      %v3184 = vlaneseq
      %v3185 = vshrl.u32 %v3184, 7
      %v3186 = vsub.s32 0, %v3185
      %v3187 = vrot.slane %v3032, %v3186
      %v3188 = vmul.f32 %v3187, %v3138
      %v3189 = vmul.f32 %v3187, %v3143
      %v3190 = vmul.f32 %v3187, %v3148
      %v3191 = vmul.f32 %v3187, %v3153
      %v3192 = vmul.f32 %v3187, %v3158
      %v3193 = vmul.f32 %v3187, %v3163
      %v3194 = vmul.f32 %v3187, %v3168
      %v3195 = vmul.f32 %v3187, %v3173
      %v3196 = vsel %vm3176, %v3138, %v3188
      %v3197 = vsel %vm3177, %v3143, %v3189
      %v3198 = vsel %vm3178, %v3148, %v3190
      %v3199 = vsel %vm3179, %v3153, %v3191
      %v3200 = vsel %vm3180, %v3158, %v3192
      %v3201 = vsel %vm3181, %v3163, %v3193
      %v3202 = vsel %vm3182, %v3168, %v3194
      %v3203 = vsel %vm3183, %v3173, %v3195
      %v3204 = vsel %vm356, %v3196, 0.0
      %v3205 = vsel %vm356, %v3197, 0.0
      %v3206 = vadd.f32 %v3204, %v3205
      %v3207 = vsel %vm356, %v3198, 0.0
      %v3208 = vadd.f32 %v3206, %v3207
      %v3209 = vsel %vm356, %v3199, 0.0
      %v3210 = vadd.f32 %v3208, %v3209
      %v3211 = vsel %vm356, %v3200, 0.0
      %v3212 = vadd.f32 %v3210, %v3211
      %v3213 = vsel %vm356, %v3201, 0.0
      %v3214 = vadd.f32 %v3212, %v3213
      %v3215 = vsel %vm356, %v3202, 0.0
      %v3216 = vadd.f32 %v3214, %v3215
      %v3217 = vsel %vm356, %v3203, 0.0
      %v3218 = vadd.f32 %v3216, %v3217
      %3219 = vadd.xlane.f32.xlu0 %v3218
      %v3220 = vpop.xlane.xlu0 %3219
      %v3221 = vrot.slane %v3220, 4
      %v3222 = vadd.f32 %v3220, %v3221
      %v3223 = vrot.slane %v3222, 2
      %v3224 = vadd.f32 %v3222, %v3223
      %v3225 = vrot.slane %v3224, 1
      %v3226 = vadd.f32 %v3224, %v3225
      %s3227 = vtos %v3226
      %v3228 = vmul.f32 %v3196, %v3196
      %v3229 = vmul.f32 %v3197, %v3197
      %v3230 = vmul.f32 %v3198, %v3198
      %v3231 = vmul.f32 %v3199, %v3199
      %v3232 = vmul.f32 %v3200, %v3200
      %v3233 = vmul.f32 %v3201, %v3201
      %v3234 = vmul.f32 %v3202, %v3202
      %v3235 = vmul.f32 %v3203, %v3203
      %v3236 = vsel %vm356, %v3228, 0.0
      %v3237 = vsel %vm356, %v3229, 0.0
      %v3238 = vadd.f32 %v3236, %v3237
      %v3239 = vsel %vm356, %v3230, 0.0
      %v3240 = vadd.f32 %v3238, %v3239
      %v3241 = vsel %vm356, %v3231, 0.0
      %v3242 = vadd.f32 %v3240, %v3241
      %v3243 = vsel %vm356, %v3232, 0.0
      %v3244 = vadd.f32 %v3242, %v3243
      %v3245 = vsel %vm356, %v3233, 0.0
      %v3246 = vadd.f32 %v3244, %v3245
      %v3247 = vsel %vm356, %v3234, 0.0
      %v3248 = vadd.f32 %v3246, %v3247
      %v3249 = vsel %vm356, %v3235, 0.0
      %v3250 = vadd.f32 %v3248, %v3249
      %3251 = vadd.xlane.f32.xlu0 %v3250
      %v3252 = vpop.xlane.xlu0 %3251
      %v3253 = vrot.slane %v3252, 4
      %v3254 = vadd.f32 %v3252, %v3253
      %v3255 = vrot.slane %v3254, 2
      %v3256 = vadd.f32 %v3254, %v3255
      %v3257 = vrot.slane %v3256, 1
      %v3258 = vadd.f32 %v3256, %v3257
      %s3259 = vtos %v3258
      %s3260 = smul.f32 %s3227, 0.00048828125
      %s3261 = smul.f32 %s3259, 0.00048828125
      %s3262 = smul.f32 %s3260, %s3260
      %s3263 = ssub.f32 %s3261, %s3262
      %s3264 = sadd.f32 %s3263, 1e-05
      %v3265 = vstv %s3264
      %v3266 = vrsqrt.pop %v3265
      %s3267 = vtos %v3266
      %v3268 = vstv %s3260
      %v3269 = vsub.f32 %v3196, %v3268
      %v3270 = vsub.f32 %v3197, %v3268
      %v3271 = vsub.f32 %v3198, %v3268
      %v3272 = vsub.f32 %v3199, %v3268
      %v3273 = vsub.f32 %v3200, %v3268
      %v3274 = vsub.f32 %v3201, %v3268
      %v3275 = vsub.f32 %v3202, %v3268
      %v3276 = vsub.f32 %v3203, %v3268
      %v3277 = vstv %s3267
      %v3278 = vmul.f32 %v3030, %v3277
      %v3279 = vlaneseq
      %v3280 = vshrl.u32 %v3279, 7
      %v3281 = vsub.s32 0, %v3280
      %v3282 = vrot.slane %v3278, %v3281
      %v3283 = vmul.f32 %v3269, %v3282
      %v3284 = vmul.f32 %v3270, %v3282
      %v3285 = vmul.f32 %v3271, %v3282
      %v3286 = vmul.f32 %v3272, %v3282
      %v3287 = vmul.f32 %v3273, %v3282
      %v3288 = vmul.f32 %v3274, %v3282
      %v3289 = vmul.f32 %v3275, %v3282
      %v3290 = vmul.f32 %v3276, %v3282
      %v3291 = vlaneseq
      %v3292 = vshrl.u32 %v3291, 7
      %v3293 = vsub.s32 0, %v3292
      %v3294 = vrot.slane %v3031, %v3293
      %v3295 = vadd.f32 %v3283, %v3294
      %v3296 = vadd.f32 %v3284, %v3294
      %v3297 = vadd.f32 %v3285, %v3294
      %v3298 = vadd.f32 %v3286, %v3294
      %v3299 = vadd.f32 %v3287, %v3294
      %v3300 = vadd.f32 %v3288, %v3294
      %v3301 = vadd.f32 %v3289, %v3294
      %v3302 = vadd.f32 %v3290, %v3294
      %v3303 = vld [vmem:[%s3026 + $0x10] sm:$0x1]
      %v3312 = vrot.slane %v3295, 6
      %v3313 = vrot.slane %v3296, 6
      %v3314 = vsel %vm1183, %v3312, %v3313
      %v3315 = vrot.slane %v3297, 6
      %v3316 = vsel %vm1183, %v3313, %v3315
      %v3317 = vrot.slane %v3298, 6
      %v3318 = vsel %vm1183, %v3315, %v3317
      %v3319 = vrot.slane %v3299, 6
      %v3320 = vsel %vm1183, %v3317, %v3319
      %v3321 = vrot.slane %v3300, 6
      %v3322 = vsel %vm1183, %v3319, %v3321
      %v3323 = vrot.slane %v3301, 6
      %v3324 = vsel %vm1183, %v3321, %v3323
      %v3325 = vrot.slane %v3302, 6
      %v3326 = vsel %vm1183, %v3323, %v3325
      %v3335 = vsel %vm1183, 0.0, %v3312
      %v3336 = vlaneseq
      %v3337 = vshrl.u32 %v3336, 7
      %v3338 = vsub.s32 0, %v3337
      %v3339 = vrot.slane %v3303, %v3338
      %v3340 = vmul.f32 %v3335, %v3339
      %v3341 = vmul.f32 %v3314, %v3339
      %v3342 = vmul.f32 %v3316, %v3339
      %v3343 = vmul.f32 %v3318, %v3339
      %v3344 = vmul.f32 %v3320, %v3339
      %v3345 = vmul.f32 %v3322, %v3339
      %v3346 = vmul.f32 %v3324, %v3339
      %v3347 = vmul.f32 %v3326, %v3339
      %v3348 = vadd.f32 %v3340, 0.0
      %v3349 = vadd.f32 %v3341, 0.0
      %v3350 = vadd.f32 %v3342, 0.0
      %v3351 = vadd.f32 %v3343, 0.0
      %v3352 = vadd.f32 %v3344, 0.0
      %v3353 = vadd.f32 %v3345, 0.0
      %v3354 = vadd.f32 %v3346, 0.0
      %v3355 = vadd.f32 %v3347, 0.0
      %v3356 = vld [vmem:[%s3026 + $0x11] sm:$0x1]
      %v3357 = vlaneseq
      %v3358 = vshrl.u32 %v3357, 7
      %v3359 = vsub.s32 0, %v3358
      %v3360 = vrot.slane %v3356, %v3359
      %v3361 = vmul.f32 %v3295, %v3360
      %v3362 = vmul.f32 %v3296, %v3360
      %v3363 = vmul.f32 %v3297, %v3360
      %v3364 = vmul.f32 %v3298, %v3360
      %v3365 = vmul.f32 %v3299, %v3360
      %v3366 = vmul.f32 %v3300, %v3360
      %v3367 = vmul.f32 %v3301, %v3360
      %v3368 = vmul.f32 %v3302, %v3360
      %v3369 = vadd.f32 %v3348, %v3361
      %v3370 = vadd.f32 %v3349, %v3362
      %v3371 = vadd.f32 %v3350, %v3363
      %v3372 = vadd.f32 %v3351, %v3364
      %v3373 = vadd.f32 %v3352, %v3365
      %v3374 = vadd.f32 %v3353, %v3366
      %v3375 = vadd.f32 %v3354, %v3367
      %v3376 = vadd.f32 %v3355, %v3368
      %v3377 = vld [vmem:[%s3026 + $0x12] sm:$0x1]
      %v3378 = vrot.slane %v3295, 2
      %v3379 = vrot.slane %v3296, 2
      %v3380 = vsel %vm1250, %v3378, %v3379
      %v3381 = vrot.slane %v3297, 2
      %v3382 = vsel %vm1250, %v3379, %v3381
      %v3383 = vrot.slane %v3298, 2
      %v3384 = vsel %vm1250, %v3381, %v3383
      %v3385 = vrot.slane %v3299, 2
      %v3386 = vsel %vm1250, %v3383, %v3385
      %v3387 = vrot.slane %v3300, 2
      %v3388 = vsel %vm1250, %v3385, %v3387
      %v3389 = vrot.slane %v3301, 2
      %v3390 = vsel %vm1250, %v3387, %v3389
      %v3391 = vrot.slane %v3302, 2
      %v3392 = vsel %vm1250, %v3389, %v3391
      %v3401 = vsel %vm1250, %v3391, 0.0
      %v3402 = vlaneseq
      %v3403 = vshrl.u32 %v3402, 7
      %v3404 = vsub.s32 0, %v3403
      %v3405 = vrot.slane %v3377, %v3404
      %v3406 = vmul.f32 %v3380, %v3405
      %v3407 = vmul.f32 %v3382, %v3405
      %v3408 = vmul.f32 %v3384, %v3405
      %v3409 = vmul.f32 %v3386, %v3405
      %v3410 = vmul.f32 %v3388, %v3405
      %v3411 = vmul.f32 %v3390, %v3405
      %v3412 = vmul.f32 %v3392, %v3405
      %v3413 = vmul.f32 %v3401, %v3405
      %v3414 = vadd.f32 %v3369, %v3406
      %v3415 = vadd.f32 %v3370, %v3407
      %v3416 = vadd.f32 %v3371, %v3408
      %v3417 = vadd.f32 %v3372, %v3409
      %v3418 = vadd.f32 %v3373, %v3410
      %v3419 = vadd.f32 %v3374, %v3411
      %v3420 = vadd.f32 %v3375, %v3412
      %v3421 = vadd.f32 %v3376, %v3413
      %v3422 = vlaneseq
      %v3423 = vshrl.u32 %v3422, 7
      %v3424 = vsub.s32 0, %v3423
      %v3425 = vrot.slane %v3033, %v3424
      %v3426 = vadd.f32 %v3414, %v3425
      %v3427 = vadd.f32 %v3415, %v3425
      %v3428 = vadd.f32 %v3416, %v3425
      %v3429 = vadd.f32 %v3417, %v3425
      %v3430 = vadd.f32 %v3418, %v3425
      %v3431 = vadd.f32 %v3419, %v3425
      %v3432 = vadd.f32 %v3420, %v3425
      %v3433 = vadd.f32 %v3421, %v3425
      %vm3434 = vcmp.gt.f32.partialorder %v3426, 0.0
      %vm3435 = vcmp.gt.f32.partialorder %v3427, 0.0
      %vm3436 = vcmp.gt.f32.partialorder %v3428, 0.0
      %vm3437 = vcmp.gt.f32.partialorder %v3429, 0.0
      %vm3438 = vcmp.gt.f32.partialorder %v3430, 0.0
      %vm3439 = vcmp.gt.f32.partialorder %v3431, 0.0
      %vm3440 = vcmp.gt.f32.partialorder %v3432, 0.0
      %vm3441 = vcmp.gt.f32.partialorder %v3433, 0.0
      %v3442 = vlaneseq
      %v3443 = vshrl.u32 %v3442, 7
      %v3444 = vsub.s32 0, %v3443
      %v3445 = vrot.slane %v3036, %v3444
      %v3446 = vmul.f32 %v3445, %v3426
      %v3447 = vmul.f32 %v3445, %v3427
      %v3448 = vmul.f32 %v3445, %v3428
      %v3449 = vmul.f32 %v3445, %v3429
      %v3450 = vmul.f32 %v3445, %v3430
      %v3451 = vmul.f32 %v3445, %v3431
      %v3452 = vmul.f32 %v3445, %v3432
      %v3453 = vmul.f32 %v3445, %v3433
      %v3454 = vsel %vm3434, %v3426, %v3446
      %v3455 = vsel %vm3435, %v3427, %v3447
      %v3456 = vsel %vm3436, %v3428, %v3448
      %v3457 = vsel %vm3437, %v3429, %v3449
      %v3458 = vsel %vm3438, %v3430, %v3450
      %v3459 = vsel %vm3439, %v3431, %v3451
      %v3460 = vsel %vm3440, %v3432, %v3452
      %v3461 = vsel %vm3441, %v3433, %v3453
      %v3462 = vsel %vm356, %v3454, 0.0
      %v3463 = vsel %vm356, %v3455, 0.0
      %v3464 = vadd.f32 %v3462, %v3463
      %v3465 = vsel %vm356, %v3456, 0.0
      %v3466 = vadd.f32 %v3464, %v3465
      %v3467 = vsel %vm356, %v3457, 0.0
      %v3468 = vadd.f32 %v3466, %v3467
      %v3469 = vsel %vm356, %v3458, 0.0
      %v3470 = vadd.f32 %v3468, %v3469
      %v3471 = vsel %vm356, %v3459, 0.0
      %v3472 = vadd.f32 %v3470, %v3471
      %v3473 = vsel %vm356, %v3460, 0.0
      %v3474 = vadd.f32 %v3472, %v3473
      %v3475 = vsel %vm356, %v3461, 0.0
      %v3476 = vadd.f32 %v3474, %v3475
      %3477 = vadd.xlane.f32.xlu0 %v3476
      %v3478 = vpop.xlane.xlu0 %3477
      %v3479 = vrot.slane %v3478, 4
      %v3480 = vadd.f32 %v3478, %v3479
      %v3481 = vrot.slane %v3480, 2
      %v3482 = vadd.f32 %v3480, %v3481
      %v3483 = vrot.slane %v3482, 1
      %v3484 = vadd.f32 %v3482, %v3483
      %s3485 = vtos %v3484
      %v3486 = vmul.f32 %v3454, %v3454
      %v3487 = vmul.f32 %v3455, %v3455
      %v3488 = vmul.f32 %v3456, %v3456
      %v3489 = vmul.f32 %v3457, %v3457
      %v3490 = vmul.f32 %v3458, %v3458
      %v3491 = vmul.f32 %v3459, %v3459
      %v3492 = vmul.f32 %v3460, %v3460
      %v3493 = vmul.f32 %v3461, %v3461
      %v3494 = vsel %vm356, %v3486, 0.0
      %v3495 = vsel %vm356, %v3487, 0.0
      %v3496 = vadd.f32 %v3494, %v3495
      %v3497 = vsel %vm356, %v3488, 0.0
      %v3498 = vadd.f32 %v3496, %v3497
      %v3499 = vsel %vm356, %v3489, 0.0
      %v3500 = vadd.f32 %v3498, %v3499
      %v3501 = vsel %vm356, %v3490, 0.0
      %v3502 = vadd.f32 %v3500, %v3501
      %v3503 = vsel %vm356, %v3491, 0.0
      %v3504 = vadd.f32 %v3502, %v3503
      %v3505 = vsel %vm356, %v3492, 0.0
      %v3506 = vadd.f32 %v3504, %v3505
      %v3507 = vsel %vm356, %v3493, 0.0
      %v3508 = vadd.f32 %v3506, %v3507
      %3509 = vadd.xlane.f32.xlu0 %v3508
      %v3510 = vpop.xlane.xlu0 %3509
      %v3511 = vrot.slane %v3510, 4
      %v3512 = vadd.f32 %v3510, %v3511
      %v3513 = vrot.slane %v3512, 2
      %v3514 = vadd.f32 %v3512, %v3513
      %v3515 = vrot.slane %v3514, 1
      %v3516 = vadd.f32 %v3514, %v3515
      %s3517 = vtos %v3516
      %s3518 = smul.f32 %s3485, 0.00048828125
      %s3519 = smul.f32 %s3517, 0.00048828125
      %s3520 = smul.f32 %s3518, %s3518
      %s3521 = ssub.f32 %s3519, %s3520
      %s3522 = sadd.f32 %s3521, 1e-05
      %v3523 = vstv %s3522
      %v3524 = vrsqrt.pop %v3523
      %s3525 = vtos %v3524
      %v3526 = vstv %s3518
      %v3527 = vsub.f32 %v3454, %v3526
      %v3528 = vsub.f32 %v3455, %v3526
      %v3529 = vsub.f32 %v3456, %v3526
      %v3530 = vsub.f32 %v3457, %v3526
      %v3531 = vsub.f32 %v3458, %v3526
      %v3532 = vsub.f32 %v3459, %v3526
      %v3533 = vsub.f32 %v3460, %v3526
      %v3534 = vsub.f32 %v3461, %v3526
      %v3535 = vstv %s3525
      %v3536 = vmul.f32 %v3034, %v3535
      %v3537 = vlaneseq
      %v3538 = vshrl.u32 %v3537, 7
      %v3539 = vsub.s32 0, %v3538
      %v3540 = vrot.slane %v3536, %v3539
      %v3541 = vmul.f32 %v3527, %v3540
      %v3542 = vmul.f32 %v3528, %v3540
      %v3543 = vmul.f32 %v3529, %v3540
      %v3544 = vmul.f32 %v3530, %v3540
      %v3545 = vmul.f32 %v3531, %v3540
      %v3546 = vmul.f32 %v3532, %v3540
      %v3547 = vmul.f32 %v3533, %v3540
      %v3548 = vmul.f32 %v3534, %v3540
      %v3549 = vlaneseq
      %v3550 = vshrl.u32 %v3549, 7
      %v3551 = vsub.s32 0, %v3550
      %v3552 = vrot.slane %v3035, %v3551
      %v3553 = vadd.f32 %v3541, %v3552
      %v3554 = vadd.f32 %v3542, %v3552
      %v3555 = vadd.f32 %v3543, %v3552
      %v3556 = vadd.f32 %v3544, %v3552
      %v3557 = vadd.f32 %v3545, %v3552
      %v3558 = vadd.f32 %v3546, %v3552
      %v3559 = vadd.f32 %v3547, %v3552
      %v3560 = vadd.f32 %v3548, %v3552
      %v3561 = vlaneseq
      %v3562 = vshrl.u32 %v3561, 7
      %v3563 = vsub.s32 0, %v3562
      %v3564 = vrot.slane %v3042, %v3563
      %v3566 = vsel %vm356, %v3553, 0
      %v3569 = vsel %vm356, %v3554, 0
      %v3572 = vsel %vm356, %v3555, 0
      %v3575 = vsel %vm356, %v3556, 0
      %v3578 = vsel %vm356, %v3557, 0
      %v3581 = vsel %vm356, %v3558, 0
      %v3584 = vsel %vm356, %v3559, 0
      %v3587 = vsel %vm356, %v3560, 0
      %3589 = vmatprep.subr.mxu0 0.0
      %3590 = vmatpush1.msra.mxu0 %v3038
      %3591 = vmatprep.subr.mxu0 0.0
      %3592 = vmatpush1.msra.mxu0 %v3039
      %3593 = vmatprep.subr.mxu0 0.0
      %3594 = vmatpush1.msra.mxu0 %v3040
      %3595 = vmatprep.subr.mxu0 0.0
      %3596 = vmatpush1.msra.mxu0 %v3041
      %3597 = vmatprep.subr.mxu0 0.0
      %3598 = vmatpush1.msra.mxu0 0.0
      %3599 = vmatprep.subr.mxu0 0.0
      %3600 = vmatpush1.msra.mxu0 0.0
      %3601 = vmatprep.subr.mxu0 0.0
      %3602 = vmatpush1.msra.mxu0 0.0
      %3603 = vmatprep.subr.mxu0 0.0
      %3604 = vmatpush1.msra.mxu0 0.0
      %3605 = vmatprep.subr.mxu0 0.0
      %3606 = vmatpush1.msra.mxu0 0.0
      %3607 = vmatprep.subr.mxu0 0.0
      %3608 = vmatpush1.msra.mxu0 0.0
      %3609 = vmatprep.subr.mxu0 0.0
      %3610 = vmatpush1.msra.mxu0 0.0
      %3611 = vmatprep.subr.mxu0 0.0
      %3612 = vmatpush1.msra.mxu0 0.0
      %3613 = vmatprep.subr.mxu0 0.0
      %3614 = vmatpush1.msra.mxu0 0.0
      %3615 = vmatprep.subr.mxu0 0.0
      %3616 = vmatpush1.msra.mxu0 0.0
      %3617 = vmatprep.subr.mxu0 0.0
      %3618 = vmatpush1.msra.mxu0 0.0
      %3619 = vmatprep.subr.mxu0 0.0
      %3620 = vmatpush1.msra.mxu0 0.0
      %3621 = vmatprep.subr.mxu0 0.0
      %3622 = vmatpush1.msra.mxu0 0.0
      %3623 = vmatprep.subr.mxu0 0.0
      %3624 = vmatpush1.msra.mxu0 0.0
      %3625 = vmatprep.subr.mxu0 0.0
      %3626 = vmatpush1.msra.mxu0 0.0
      %3627 = vmatprep.subr.mxu0 0.0
      %3628 = vmatpush1.msra.mxu0 0.0
      %3629 = vmatprep.subr.mxu0 0.0
      %3630 = vmatpush1.msra.mxu0 0.0
      %3631 = vmatprep.subr.mxu0 0.0
      %3632 = vmatpush1.msra.mxu0 0.0
      %3633 = vmatprep.subr.mxu0 0.0
      %3634 = vmatpush1.msra.mxu0 0.0
      %3635 = vmatprep.subr.mxu0 0.0
      %3636 = vmatpush1.msra.mxu0 0.0
      %3637 = vmatprep.subr.mxu0 0.0
      %3638 = vmatpush1.msra.mxu0 0.0
      %3639 = vmatprep.subr.mxu0 0.0
      %3640 = vmatpush1.msra.mxu0 0.0
      %3641 = vmatprep.subr.mxu0 0.0
      %3642 = vmatpush1.msra.mxu0 0.0
      %3643 = vmatprep.subr.mxu0 0.0
      %3644 = vmatpush1.msra.mxu0 0.0
      %3645 = vmatprep.subr.mxu0 0.0
      %3646 = vmatpush1.msra.mxu0 0.0
      %3647 = vmatprep.subr.mxu0 0.0
      %3648 = vmatpush1.msra.mxu0 0.0
      %3649 = vmatprep.subr.mxu0 0.0
      %3650 = vmatpush1.msra.mxu0 0.0
      %3651 = vmatprep.subr.mxu0 0.0
      %3652 = vmatpush1.msra.mxu0 0.0
      %3653 = vmatprep.mubr.f32.mxu0 0.0
      %3654 = vmatmul.mubr.f32.gmra.mrb[0].mxu0 %v3566
      %v3655 = vpop.f32.mrb[0].mxu0
      %v3656 = vadd.f32 %v3564, %v3655
      %v3657 = vpop.f32.mrb[0].mxu0
      %3658 = vmatprep.mubr.f32.mxu0 0.0
      %3659 = vmatmul.mubr.f32.gmra.mrb[0].mxu0 %v3569
      %v3660 = vpop.f32.mrb[0].mxu0
      %v3661 = vadd.f32 %v3564, %v3660
      %v3662 = vpop.f32.mrb[0].mxu0
      %3663 = vmatprep.mubr.f32.mxu0 0.0
      %3664 = vmatmul.mubr.f32.gmra.mrb[0].mxu0 %v3572
      %v3665 = vpop.f32.mrb[0].mxu0
      %v3666 = vadd.f32 %v3564, %v3665
      %v3667 = vpop.f32.mrb[0].mxu0
      %3668 = vmatprep.mubr.f32.mxu0 0.0
      %3669 = vmatmul.mubr.f32.gmra.mrb[0].mxu0 %v3575
      %v3670 = vpop.f32.mrb[0].mxu0
      %v3671 = vadd.f32 %v3564, %v3670
      %v3672 = vpop.f32.mrb[0].mxu0
      %3673 = vmatprep.mubr.f32.mxu0 0.0
      %3674 = vmatmul.mubr.f32.gmra.mrb[0].mxu0 %v3578
      %v3675 = vpop.f32.mrb[0].mxu0
      %v3676 = vadd.f32 %v3564, %v3675
      %v3677 = vpop.f32.mrb[0].mxu0
      %3678 = vmatprep.mubr.f32.mxu0 0.0
      %3679 = vmatmul.mubr.f32.gmra.mrb[0].mxu0 %v3581
      %v3680 = vpop.f32.mrb[0].mxu0
      %v3681 = vadd.f32 %v3564, %v3680
      %v3682 = vpop.f32.mrb[0].mxu0
      %3683 = vmatprep.mubr.f32.mxu0 0.0
      %3684 = vmatmul.mubr.f32.gmra.mrb[0].mxu0 %v3584
      %v3685 = vpop.f32.mrb[0].mxu0
      %v3686 = vadd.f32 %v3564, %v3685
      %v3687 = vpop.f32.mrb[0].mxu0
      %3688 = vmatprep.mubr.f32.mxu0 0.0
      %3689 = vmatmul.mubr.f32.gmra.mrb[0].mxu0 %v3587
      %v3690 = vpop.f32.mrb[0].mxu0
      %v3691 = vadd.f32 %v3564, %v3690
      %v3692 = vpop.f32.mrb[0].mxu0
      %3693 = vdwg.mxu0
      %v3694 = vadd.f32 %v2978, %v3656
      %v3695 = vadd.f32 %v2979, %v3661
      %v3696 = vadd.f32 %v2980, %v3666
      %v3697 = vadd.f32 %v2981, %v3671
      %v3698 = vadd.f32 %v2982, %v3676
      %v3699 = vadd.f32 %v2983, %v3681
      %v3700 = vadd.f32 %v2984, %v3686
      %v3701 = vadd.f32 %v2985, %v3691
      %3710 = vrot.lane.b32.xlu0 %v3656, 112
      %v3711 = vpop.permute.xlu0 %3710
      %3712 = vrot.lane.b32.xlu0 %v3661, 112
      %v3713 = vpop.permute.xlu0 %3712
      %3714 = vrot.lane.b32.xlu0 %v3666, 112
      %v3715 = vpop.permute.xlu0 %3714
      %3716 = vrot.lane.b32.xlu0 %v3671, 112
      %v3717 = vpop.permute.xlu0 %3716
      %3718 = vrot.lane.b32.xlu0 %v3676, 112
      %v3719 = vpop.permute.xlu0 %3718
      %3720 = vrot.lane.b32.xlu0 %v3681, 112
      %v3721 = vpop.permute.xlu0 %3720
      %3722 = vrot.lane.b32.xlu0 %v3686, 112
      %v3723 = vpop.permute.xlu0 %3722
      %3724 = vrot.lane.b32.xlu0 %v3691, 112
      %v3725 = vpop.permute.xlu0 %3724
      %v3734 = vadd.f32 %v3018, %v3711
      %v3735 = vadd.f32 %v3019, %v3713
      %v3736 = vadd.f32 %v3020, %v3715
      %v3737 = vadd.f32 %v3021, %v3717
      %v3738 = vadd.f32 %v3022, %v3719
      %v3739 = vadd.f32 %v3023, %v3721
      %v3740 = vadd.f32 %v3024, %v3723
      %v3741 = vadd.f32 %v3025, %v3725
      %s3742 = scalar_lea.vmem %s1, 160
      %v3743 = vld [vmem:[%s3742] sm:$0xff]
      %v3744 = vld [vmem:[%s3742 + $0x8] sm:$0xff]
      %v3745 = vld [vmem:[%s3742 + $0x13] sm:$0x1]
      %v3746 = vld [vmem:[%s3742 + $0x14] sm:$0x1]
      %v3747 = vld [vmem:[%s3742 + $0x15] sm:$0x1]
      %v3748 = vld [vmem:[%s3742 + $0x16] sm:$0x1]
      %v3749 = vld [vmem:[%s3742 + $0x17] sm:$0x1]
      %v3750 = vld [vmem:[%s3742 + $0x18] sm:$0x1]
      %v3751 = vld [vmem:[%s3742 + $0x19] sm:$0x1]
      %v3752 = vld [vmem:[%s3742 + $0x1a] sm:$0x1]
      %s3753 = scalar_lea.vmem %s2, 200
      %v3754 = vld [vmem:[%s3753] sm:$0xff]
      %v3755 = vld [vmem:[%s3753 + $0x8] sm:$0xff]
      %v3756 = vld [vmem:[%s3753 + $0x10] sm:$0xff]
      %v3757 = vld [vmem:[%s3753 + $0x18] sm:$0xff]
      %v3758 = vld [vmem:[%s3753 + $0x20] sm:$0x1]
      %v3759 = vlaneseq
      %v3760 = vshrl.u32 %v3759, 7
      %v3761 = vsub.s32 0, %v3760
      %v3762 = vrot.slane %v3745, %v3761
      %v3764 = vsel %vm198, %v3734, 0
      %v3767 = vsel %vm198, %v3735, 0
      %v3770 = vsel %vm198, %v3736, 0
      %v3773 = vsel %vm198, %v3737, 0
      %v3776 = vsel %vm198, %v3738, 0
      %v3779 = vsel %vm198, %v3739, 0
      %v3782 = vsel %vm198, %v3740, 0
      %v3785 = vsel %vm198, %v3741, 0
      %3787 = vmatprep.subr.mxu0 0.0
      %3788 = vmatpush1.msra.mxu0 %v3743
      %3789 = vmatprep.subr.mxu0 0.0
      %3790 = vmatpush1.msra.mxu0 %v3744
      %3791 = vmatprep.subr.mxu0 0.0
      %3792 = vmatpush1.msra.mxu0 0.0
      %3793 = vmatprep.subr.mxu0 0.0
      %3794 = vmatpush1.msra.mxu0 0.0
      %3795 = vmatprep.subr.mxu0 0.0
      %3796 = vmatpush1.msra.mxu0 0.0
      %3797 = vmatprep.subr.mxu0 0.0
      %3798 = vmatpush1.msra.mxu0 0.0
      %3799 = vmatprep.subr.mxu0 0.0
      %3800 = vmatpush1.msra.mxu0 0.0
      %3801 = vmatprep.subr.mxu0 0.0
      %3802 = vmatpush1.msra.mxu0 0.0
      %3803 = vmatprep.subr.mxu0 0.0
      %3804 = vmatpush1.msra.mxu0 0.0
      %3805 = vmatprep.subr.mxu0 0.0
      %3806 = vmatpush1.msra.mxu0 0.0
      %3807 = vmatprep.subr.mxu0 0.0
      %3808 = vmatpush1.msra.mxu0 0.0
      %3809 = vmatprep.subr.mxu0 0.0
      %3810 = vmatpush1.msra.mxu0 0.0
      %3811 = vmatprep.subr.mxu0 0.0
      %3812 = vmatpush1.msra.mxu0 0.0
      %3813 = vmatprep.subr.mxu0 0.0
      %3814 = vmatpush1.msra.mxu0 0.0
      %3815 = vmatprep.subr.mxu0 0.0
      %3816 = vmatpush1.msra.mxu0 0.0
      %3817 = vmatprep.subr.mxu0 0.0
      %3818 = vmatpush1.msra.mxu0 0.0
      %3819 = vmatprep.subr.mxu0 0.0
      %3820 = vmatpush1.msra.mxu0 0.0
      %3821 = vmatprep.subr.mxu0 0.0
      %3822 = vmatpush1.msra.mxu0 0.0
      %3823 = vmatprep.subr.mxu0 0.0
      %3824 = vmatpush1.msra.mxu0 0.0
      %3825 = vmatprep.subr.mxu0 0.0
      %3826 = vmatpush1.msra.mxu0 0.0
      %3827 = vmatprep.subr.mxu0 0.0
      %3828 = vmatpush1.msra.mxu0 0.0
      %3829 = vmatprep.subr.mxu0 0.0
      %3830 = vmatpush1.msra.mxu0 0.0
      %3831 = vmatprep.subr.mxu0 0.0
      %3832 = vmatpush1.msra.mxu0 0.0
      %3833 = vmatprep.subr.mxu0 0.0
      %3834 = vmatpush1.msra.mxu0 0.0
      %3835 = vmatprep.subr.mxu0 0.0
      %3836 = vmatpush1.msra.mxu0 0.0
      %3837 = vmatprep.subr.mxu0 0.0
      %3838 = vmatpush1.msra.mxu0 0.0
      %3839 = vmatprep.subr.mxu0 0.0
      %3840 = vmatpush1.msra.mxu0 0.0
      %3841 = vmatprep.subr.mxu0 0.0
      %3842 = vmatpush1.msra.mxu0 0.0
      %3843 = vmatprep.subr.mxu0 0.0
      %3844 = vmatpush1.msra.mxu0 0.0
      %3845 = vmatprep.subr.mxu0 0.0
      %3846 = vmatpush1.msra.mxu0 0.0
      %3847 = vmatprep.subr.mxu0 0.0
      %3848 = vmatpush1.msra.mxu0 0.0
      %3849 = vmatprep.subr.mxu0 0.0
      %3850 = vmatpush1.msra.mxu0 0.0
      %3851 = vmatprep.mubr.f32.mxu0 0.0
      %3852 = vmatmul.mubr.f32.gmra.mrb[0].mxu0 %v3764
      %v3853 = vpop.f32.mrb[0].mxu0
      %v3854 = vadd.f32 %v3762, %v3853
      %v3855 = vpop.f32.mrb[0].mxu0
      %3856 = vmatprep.mubr.f32.mxu0 0.0
      %3857 = vmatmul.mubr.f32.gmra.mrb[0].mxu0 %v3767
      %v3858 = vpop.f32.mrb[0].mxu0
      %v3859 = vadd.f32 %v3762, %v3858
      %v3860 = vpop.f32.mrb[0].mxu0
      %3861 = vmatprep.mubr.f32.mxu0 0.0
      %3862 = vmatmul.mubr.f32.gmra.mrb[0].mxu0 %v3770
      %v3863 = vpop.f32.mrb[0].mxu0
      %v3864 = vadd.f32 %v3762, %v3863
      %v3865 = vpop.f32.mrb[0].mxu0
      %3866 = vmatprep.mubr.f32.mxu0 0.0
      %3867 = vmatmul.mubr.f32.gmra.mrb[0].mxu0 %v3773
      %v3868 = vpop.f32.mrb[0].mxu0
      %v3869 = vadd.f32 %v3762, %v3868
      %v3870 = vpop.f32.mrb[0].mxu0
      %3871 = vmatprep.mubr.f32.mxu0 0.0
      %3872 = vmatmul.mubr.f32.gmra.mrb[0].mxu0 %v3776
      %v3873 = vpop.f32.mrb[0].mxu0
      %v3874 = vadd.f32 %v3762, %v3873
      %v3875 = vpop.f32.mrb[0].mxu0
      %3876 = vmatprep.mubr.f32.mxu0 0.0
      %3877 = vmatmul.mubr.f32.gmra.mrb[0].mxu0 %v3779
      %v3878 = vpop.f32.mrb[0].mxu0
      %v3879 = vadd.f32 %v3762, %v3878
      %v3880 = vpop.f32.mrb[0].mxu0
      %3881 = vmatprep.mubr.f32.mxu0 0.0
      %3882 = vmatmul.mubr.f32.gmra.mrb[0].mxu0 %v3782
      %v3883 = vpop.f32.mrb[0].mxu0
      %v3884 = vadd.f32 %v3762, %v3883
      %v3885 = vpop.f32.mrb[0].mxu0
      %3886 = vmatprep.mubr.f32.mxu0 0.0
      %3887 = vmatmul.mubr.f32.gmra.mrb[0].mxu0 %v3785
      %v3888 = vpop.f32.mrb[0].mxu0
      %v3889 = vadd.f32 %v3762, %v3888
      %v3890 = vpop.f32.mrb[0].mxu0
      %3891 = vdwg.mxu0
      %vm3892 = vcmp.gt.f32.partialorder %v3854, 0.0
      %vm3893 = vcmp.gt.f32.partialorder %v3859, 0.0
      %vm3894 = vcmp.gt.f32.partialorder %v3864, 0.0
      %vm3895 = vcmp.gt.f32.partialorder %v3869, 0.0
      %vm3896 = vcmp.gt.f32.partialorder %v3874, 0.0
      %vm3897 = vcmp.gt.f32.partialorder %v3879, 0.0
      %vm3898 = vcmp.gt.f32.partialorder %v3884, 0.0
      %vm3899 = vcmp.gt.f32.partialorder %v3889, 0.0
      %v3900 = vlaneseq
      %v3901 = vshrl.u32 %v3900, 7
      %v3902 = vsub.s32 0, %v3901
      %v3903 = vrot.slane %v3748, %v3902
      %v3904 = vmul.f32 %v3903, %v3854
      %v3905 = vmul.f32 %v3903, %v3859
      %v3906 = vmul.f32 %v3903, %v3864
      %v3907 = vmul.f32 %v3903, %v3869
      %v3908 = vmul.f32 %v3903, %v3874
      %v3909 = vmul.f32 %v3903, %v3879
      %v3910 = vmul.f32 %v3903, %v3884
      %v3911 = vmul.f32 %v3903, %v3889
      %v3912 = vsel %vm3892, %v3854, %v3904
      %v3913 = vsel %vm3893, %v3859, %v3905
      %v3914 = vsel %vm3894, %v3864, %v3906
      %v3915 = vsel %vm3895, %v3869, %v3907
      %v3916 = vsel %vm3896, %v3874, %v3908
      %v3917 = vsel %vm3897, %v3879, %v3909
      %v3918 = vsel %vm3898, %v3884, %v3910
      %v3919 = vsel %vm3899, %v3889, %v3911
      %v3920 = vsel %vm356, %v3912, 0.0
      %v3921 = vsel %vm356, %v3913, 0.0
      %v3922 = vadd.f32 %v3920, %v3921
      %v3923 = vsel %vm356, %v3914, 0.0
      %v3924 = vadd.f32 %v3922, %v3923
      %v3925 = vsel %vm356, %v3915, 0.0
      %v3926 = vadd.f32 %v3924, %v3925
      %v3927 = vsel %vm356, %v3916, 0.0
      %v3928 = vadd.f32 %v3926, %v3927
      %v3929 = vsel %vm356, %v3917, 0.0
      %v3930 = vadd.f32 %v3928, %v3929
      %v3931 = vsel %vm356, %v3918, 0.0
      %v3932 = vadd.f32 %v3930, %v3931
      %v3933 = vsel %vm356, %v3919, 0.0
      %v3934 = vadd.f32 %v3932, %v3933
      %3935 = vadd.xlane.f32.xlu0 %v3934
      %v3936 = vpop.xlane.xlu0 %3935
      %v3937 = vrot.slane %v3936, 4
      %v3938 = vadd.f32 %v3936, %v3937
      %v3939 = vrot.slane %v3938, 2
      %v3940 = vadd.f32 %v3938, %v3939
      %v3941 = vrot.slane %v3940, 1
      %v3942 = vadd.f32 %v3940, %v3941
      %s3943 = vtos %v3942
      %v3944 = vmul.f32 %v3912, %v3912
      %v3945 = vmul.f32 %v3913, %v3913
      %v3946 = vmul.f32 %v3914, %v3914
      %v3947 = vmul.f32 %v3915, %v3915
      %v3948 = vmul.f32 %v3916, %v3916
      %v3949 = vmul.f32 %v3917, %v3917
      %v3950 = vmul.f32 %v3918, %v3918
      %v3951 = vmul.f32 %v3919, %v3919
      %v3952 = vsel %vm356, %v3944, 0.0
      %v3953 = vsel %vm356, %v3945, 0.0
      %v3954 = vadd.f32 %v3952, %v3953
      %v3955 = vsel %vm356, %v3946, 0.0
      %v3956 = vadd.f32 %v3954, %v3955
      %v3957 = vsel %vm356, %v3947, 0.0
      %v3958 = vadd.f32 %v3956, %v3957
      %v3959 = vsel %vm356, %v3948, 0.0
      %v3960 = vadd.f32 %v3958, %v3959
      %v3961 = vsel %vm356, %v3949, 0.0
      %v3962 = vadd.f32 %v3960, %v3961
      %v3963 = vsel %vm356, %v3950, 0.0
      %v3964 = vadd.f32 %v3962, %v3963
      %v3965 = vsel %vm356, %v3951, 0.0
      %v3966 = vadd.f32 %v3964, %v3965
      %3967 = vadd.xlane.f32.xlu0 %v3966
      %v3968 = vpop.xlane.xlu0 %3967
      %v3969 = vrot.slane %v3968, 4
      %v3970 = vadd.f32 %v3968, %v3969
      %v3971 = vrot.slane %v3970, 2
      %v3972 = vadd.f32 %v3970, %v3971
      %v3973 = vrot.slane %v3972, 1
      %v3974 = vadd.f32 %v3972, %v3973
      %s3975 = vtos %v3974
      %s3976 = smul.f32 %s3943, 0.00048828125
      %s3977 = smul.f32 %s3975, 0.00048828125
      %s3978 = smul.f32 %s3976, %s3976
      %s3979 = ssub.f32 %s3977, %s3978
      %s3980 = sadd.f32 %s3979, 1e-05
      %v3981 = vstv %s3980
      %v3982 = vrsqrt.pop %v3981
      %s3983 = vtos %v3982
      %v3984 = vstv %s3976
      %v3985 = vsub.f32 %v3912, %v3984
      %v3986 = vsub.f32 %v3913, %v3984
      %v3987 = vsub.f32 %v3914, %v3984
      %v3988 = vsub.f32 %v3915, %v3984
      %v3989 = vsub.f32 %v3916, %v3984
      %v3990 = vsub.f32 %v3917, %v3984
      %v3991 = vsub.f32 %v3918, %v3984
      %v3992 = vsub.f32 %v3919, %v3984
      %v3993 = vstv %s3983
      %v3994 = vmul.f32 %v3746, %v3993
      %v3995 = vlaneseq
      %v3996 = vshrl.u32 %v3995, 7
      %v3997 = vsub.s32 0, %v3996
      %v3998 = vrot.slane %v3994, %v3997
      %v3999 = vmul.f32 %v3985, %v3998
      %v4000 = vmul.f32 %v3986, %v3998
      %v4001 = vmul.f32 %v3987, %v3998
      %v4002 = vmul.f32 %v3988, %v3998
      %v4003 = vmul.f32 %v3989, %v3998
      %v4004 = vmul.f32 %v3990, %v3998
      %v4005 = vmul.f32 %v3991, %v3998
      %v4006 = vmul.f32 %v3992, %v3998
      %v4007 = vlaneseq
      %v4008 = vshrl.u32 %v4007, 7
      %v4009 = vsub.s32 0, %v4008
      %v4010 = vrot.slane %v3747, %v4009
      %v4011 = vadd.f32 %v3999, %v4010
      %v4012 = vadd.f32 %v4000, %v4010
      %v4013 = vadd.f32 %v4001, %v4010
      %v4014 = vadd.f32 %v4002, %v4010
      %v4015 = vadd.f32 %v4003, %v4010
      %v4016 = vadd.f32 %v4004, %v4010
      %v4017 = vadd.f32 %v4005, %v4010
      %v4018 = vadd.f32 %v4006, %v4010
      %v4019 = vld [vmem:[%s3742 + $0x10] sm:$0x1]
      %v4028 = vrot.slane %v4011, 4
      %v4029 = vrot.slane %v4012, 4
      %v4030 = vsel %vm1901, %v4028, %v4029
      %v4031 = vrot.slane %v4013, 4
      %v4032 = vsel %vm1901, %v4029, %v4031
      %v4033 = vrot.slane %v4014, 4
      %v4034 = vsel %vm1901, %v4031, %v4033
      %v4035 = vrot.slane %v4015, 4
      %v4036 = vsel %vm1901, %v4033, %v4035
      %v4037 = vrot.slane %v4016, 4
      %v4038 = vsel %vm1901, %v4035, %v4037
      %v4039 = vrot.slane %v4017, 4
      %v4040 = vsel %vm1901, %v4037, %v4039
      %v4041 = vrot.slane %v4018, 4
      %v4042 = vsel %vm1901, %v4039, %v4041
      %v4051 = vsel %vm1901, 0.0, %v4028
      %v4052 = vlaneseq
      %v4053 = vshrl.u32 %v4052, 7
      %v4054 = vsub.s32 0, %v4053
      %v4055 = vrot.slane %v4019, %v4054
      %v4056 = vmul.f32 %v4051, %v4055
      %v4057 = vmul.f32 %v4030, %v4055
      %v4058 = vmul.f32 %v4032, %v4055
      %v4059 = vmul.f32 %v4034, %v4055
      %v4060 = vmul.f32 %v4036, %v4055
      %v4061 = vmul.f32 %v4038, %v4055
      %v4062 = vmul.f32 %v4040, %v4055
      %v4063 = vmul.f32 %v4042, %v4055
      %v4064 = vadd.f32 %v4056, 0.0
      %v4065 = vadd.f32 %v4057, 0.0
      %v4066 = vadd.f32 %v4058, 0.0
      %v4067 = vadd.f32 %v4059, 0.0
      %v4068 = vadd.f32 %v4060, 0.0
      %v4069 = vadd.f32 %v4061, 0.0
      %v4070 = vadd.f32 %v4062, 0.0
      %v4071 = vadd.f32 %v4063, 0.0
      %v4072 = vld [vmem:[%s3742 + $0x11] sm:$0x1]
      %v4073 = vlaneseq
      %v4074 = vshrl.u32 %v4073, 7
      %v4075 = vsub.s32 0, %v4074
      %v4076 = vrot.slane %v4072, %v4075
      %v4077 = vmul.f32 %v4011, %v4076
      %v4078 = vmul.f32 %v4012, %v4076
      %v4079 = vmul.f32 %v4013, %v4076
      %v4080 = vmul.f32 %v4014, %v4076
      %v4081 = vmul.f32 %v4015, %v4076
      %v4082 = vmul.f32 %v4016, %v4076
      %v4083 = vmul.f32 %v4017, %v4076
      %v4084 = vmul.f32 %v4018, %v4076
      %v4085 = vadd.f32 %v4064, %v4077
      %v4086 = vadd.f32 %v4065, %v4078
      %v4087 = vadd.f32 %v4066, %v4079
      %v4088 = vadd.f32 %v4067, %v4080
      %v4089 = vadd.f32 %v4068, %v4081
      %v4090 = vadd.f32 %v4069, %v4082
      %v4091 = vadd.f32 %v4070, %v4083
      %v4092 = vadd.f32 %v4071, %v4084
      %v4093 = vld [vmem:[%s3742 + $0x12] sm:$0x1]
      %v4095 = vsel %vm1901, %v4041, 0.0
      %v4096 = vlaneseq
      %v4097 = vshrl.u32 %v4096, 7
      %v4098 = vsub.s32 0, %v4097
      %v4099 = vrot.slane %v4093, %v4098
      %v4100 = vmul.f32 %v4030, %v4099
      %v4101 = vmul.f32 %v4032, %v4099
      %v4102 = vmul.f32 %v4034, %v4099
      %v4103 = vmul.f32 %v4036, %v4099
      %v4104 = vmul.f32 %v4038, %v4099
      %v4105 = vmul.f32 %v4040, %v4099
      %v4106 = vmul.f32 %v4042, %v4099
      %v4107 = vmul.f32 %v4095, %v4099
      %v4108 = vadd.f32 %v4085, %v4100
      %v4109 = vadd.f32 %v4086, %v4101
      %v4110 = vadd.f32 %v4087, %v4102
      %v4111 = vadd.f32 %v4088, %v4103
      %v4112 = vadd.f32 %v4089, %v4104
      %v4113 = vadd.f32 %v4090, %v4105
      %v4114 = vadd.f32 %v4091, %v4106
      %v4115 = vadd.f32 %v4092, %v4107
      %v4116 = vlaneseq
      %v4117 = vshrl.u32 %v4116, 7
      %v4118 = vsub.s32 0, %v4117
      %v4119 = vrot.slane %v3749, %v4118
      %v4120 = vadd.f32 %v4108, %v4119
      %v4121 = vadd.f32 %v4109, %v4119
      %v4122 = vadd.f32 %v4110, %v4119
      %v4123 = vadd.f32 %v4111, %v4119
      %v4124 = vadd.f32 %v4112, %v4119
      %v4125 = vadd.f32 %v4113, %v4119
      %v4126 = vadd.f32 %v4114, %v4119
      %v4127 = vadd.f32 %v4115, %v4119
      %vm4128 = vcmp.gt.f32.partialorder %v4120, 0.0
      %vm4129 = vcmp.gt.f32.partialorder %v4121, 0.0
      %vm4130 = vcmp.gt.f32.partialorder %v4122, 0.0
      %vm4131 = vcmp.gt.f32.partialorder %v4123, 0.0
      %vm4132 = vcmp.gt.f32.partialorder %v4124, 0.0
      %vm4133 = vcmp.gt.f32.partialorder %v4125, 0.0
      %vm4134 = vcmp.gt.f32.partialorder %v4126, 0.0
      %vm4135 = vcmp.gt.f32.partialorder %v4127, 0.0
      %v4136 = vlaneseq
      %v4137 = vshrl.u32 %v4136, 7
      %v4138 = vsub.s32 0, %v4137
      %v4139 = vrot.slane %v3752, %v4138
      %v4140 = vmul.f32 %v4139, %v4120
      %v4141 = vmul.f32 %v4139, %v4121
      %v4142 = vmul.f32 %v4139, %v4122
      %v4143 = vmul.f32 %v4139, %v4123
      %v4144 = vmul.f32 %v4139, %v4124
      %v4145 = vmul.f32 %v4139, %v4125
      %v4146 = vmul.f32 %v4139, %v4126
      %v4147 = vmul.f32 %v4139, %v4127
      %v4148 = vsel %vm4128, %v4120, %v4140
      %v4149 = vsel %vm4129, %v4121, %v4141
      %v4150 = vsel %vm4130, %v4122, %v4142
      %v4151 = vsel %vm4131, %v4123, %v4143
      %v4152 = vsel %vm4132, %v4124, %v4144
      %v4153 = vsel %vm4133, %v4125, %v4145
      %v4154 = vsel %vm4134, %v4126, %v4146
      %v4155 = vsel %vm4135, %v4127, %v4147
      %v4156 = vsel %vm356, %v4148, 0.0
      %v4157 = vsel %vm356, %v4149, 0.0
      %v4158 = vadd.f32 %v4156, %v4157
      %v4159 = vsel %vm356, %v4150, 0.0
      %v4160 = vadd.f32 %v4158, %v4159
      %v4161 = vsel %vm356, %v4151, 0.0
      %v4162 = vadd.f32 %v4160, %v4161
      %v4163 = vsel %vm356, %v4152, 0.0
      %v4164 = vadd.f32 %v4162, %v4163
      %v4165 = vsel %vm356, %v4153, 0.0
      %v4166 = vadd.f32 %v4164, %v4165
      %v4167 = vsel %vm356, %v4154, 0.0
      %v4168 = vadd.f32 %v4166, %v4167
      %v4169 = vsel %vm356, %v4155, 0.0
      %v4170 = vadd.f32 %v4168, %v4169
      %4171 = vadd.xlane.f32.xlu0 %v4170
      %v4172 = vpop.xlane.xlu0 %4171
      %v4173 = vrot.slane %v4172, 4
      %v4174 = vadd.f32 %v4172, %v4173
      %v4175 = vrot.slane %v4174, 2
      %v4176 = vadd.f32 %v4174, %v4175
      %v4177 = vrot.slane %v4176, 1
      %v4178 = vadd.f32 %v4176, %v4177
      %s4179 = vtos %v4178
      %v4180 = vmul.f32 %v4148, %v4148
      %v4181 = vmul.f32 %v4149, %v4149
      %v4182 = vmul.f32 %v4150, %v4150
      %v4183 = vmul.f32 %v4151, %v4151
      %v4184 = vmul.f32 %v4152, %v4152
      %v4185 = vmul.f32 %v4153, %v4153
      %v4186 = vmul.f32 %v4154, %v4154
      %v4187 = vmul.f32 %v4155, %v4155
      %v4188 = vsel %vm356, %v4180, 0.0
      %v4189 = vsel %vm356, %v4181, 0.0
      %v4190 = vadd.f32 %v4188, %v4189
      %v4191 = vsel %vm356, %v4182, 0.0
      %v4192 = vadd.f32 %v4190, %v4191
      %v4193 = vsel %vm356, %v4183, 0.0
      %v4194 = vadd.f32 %v4192, %v4193
      %v4195 = vsel %vm356, %v4184, 0.0
      %v4196 = vadd.f32 %v4194, %v4195
      %v4197 = vsel %vm356, %v4185, 0.0
      %v4198 = vadd.f32 %v4196, %v4197
      %v4199 = vsel %vm356, %v4186, 0.0
      %v4200 = vadd.f32 %v4198, %v4199
      %v4201 = vsel %vm356, %v4187, 0.0
      %v4202 = vadd.f32 %v4200, %v4201
      %4203 = vadd.xlane.f32.xlu0 %v4202
      %v4204 = vpop.xlane.xlu0 %4203
      %v4205 = vrot.slane %v4204, 4
      %v4206 = vadd.f32 %v4204, %v4205
      %v4207 = vrot.slane %v4206, 2
      %v4208 = vadd.f32 %v4206, %v4207
      %v4209 = vrot.slane %v4208, 1
      %v4210 = vadd.f32 %v4208, %v4209
      %s4211 = vtos %v4210
      %s4212 = smul.f32 %s4179, 0.00048828125
      %s4213 = smul.f32 %s4211, 0.00048828125
      %s4214 = smul.f32 %s4212, %s4212
      %s4215 = ssub.f32 %s4213, %s4214
      %s4216 = sadd.f32 %s4215, 1e-05
      %v4217 = vstv %s4216
      %v4218 = vrsqrt.pop %v4217
      %s4219 = vtos %v4218
      %v4220 = vstv %s4212
      %v4221 = vsub.f32 %v4148, %v4220
      %v4222 = vsub.f32 %v4149, %v4220
      %v4223 = vsub.f32 %v4150, %v4220
      %v4224 = vsub.f32 %v4151, %v4220
      %v4225 = vsub.f32 %v4152, %v4220
      %v4226 = vsub.f32 %v4153, %v4220
      %v4227 = vsub.f32 %v4154, %v4220
      %v4228 = vsub.f32 %v4155, %v4220
      %v4229 = vstv %s4219
      %v4230 = vmul.f32 %v3750, %v4229
      %v4231 = vlaneseq
      %v4232 = vshrl.u32 %v4231, 7
      %v4233 = vsub.s32 0, %v4232
      %v4234 = vrot.slane %v4230, %v4233
      %v4235 = vmul.f32 %v4221, %v4234
      %v4236 = vmul.f32 %v4222, %v4234
      %v4237 = vmul.f32 %v4223, %v4234
      %v4238 = vmul.f32 %v4224, %v4234
      %v4239 = vmul.f32 %v4225, %v4234
      %v4240 = vmul.f32 %v4226, %v4234
      %v4241 = vmul.f32 %v4227, %v4234
      %v4242 = vmul.f32 %v4228, %v4234
      %v4243 = vlaneseq
      %v4244 = vshrl.u32 %v4243, 7
      %v4245 = vsub.s32 0, %v4244
      %v4246 = vrot.slane %v3751, %v4245
      %v4247 = vadd.f32 %v4235, %v4246
      %v4248 = vadd.f32 %v4236, %v4246
      %v4249 = vadd.f32 %v4237, %v4246
      %v4250 = vadd.f32 %v4238, %v4246
      %v4251 = vadd.f32 %v4239, %v4246
      %v4252 = vadd.f32 %v4240, %v4246
      %v4253 = vadd.f32 %v4241, %v4246
      %v4254 = vadd.f32 %v4242, %v4246
      %v4255 = vlaneseq
      %v4256 = vshrl.u32 %v4255, 7
      %v4257 = vsub.s32 0, %v4256
      %v4258 = vrot.slane %v3758, %v4257
      %v4260 = vsel %vm356, %v4247, 0
      %v4263 = vsel %vm356, %v4248, 0
      %v4266 = vsel %vm356, %v4249, 0
      %v4269 = vsel %vm356, %v4250, 0
      %v4272 = vsel %vm356, %v4251, 0
      %v4275 = vsel %vm356, %v4252, 0
      %v4278 = vsel %vm356, %v4253, 0
      %v4281 = vsel %vm356, %v4254, 0
      %4283 = vmatprep.subr.mxu0 0.0
      %4284 = vmatpush1.msra.mxu0 %v3754
      %4285 = vmatprep.subr.mxu0 0.0
      %4286 = vmatpush1.msra.mxu0 %v3755
      %4287 = vmatprep.subr.mxu0 0.0
      %4288 = vmatpush1.msra.mxu0 %v3756
      %4289 = vmatprep.subr.mxu0 0.0
      %4290 = vmatpush1.msra.mxu0 %v3757
      %4291 = vmatprep.subr.mxu0 0.0
      %4292 = vmatpush1.msra.mxu0 0.0
      %4293 = vmatprep.subr.mxu0 0.0
      %4294 = vmatpush1.msra.mxu0 0.0
      %4295 = vmatprep.subr.mxu0 0.0
      %4296 = vmatpush1.msra.mxu0 0.0
      %4297 = vmatprep.subr.mxu0 0.0
      %4298 = vmatpush1.msra.mxu0 0.0
      %4299 = vmatprep.subr.mxu0 0.0
      %4300 = vmatpush1.msra.mxu0 0.0
      %4301 = vmatprep.subr.mxu0 0.0
      %4302 = vmatpush1.msra.mxu0 0.0
      %4303 = vmatprep.subr.mxu0 0.0
      %4304 = vmatpush1.msra.mxu0 0.0
      %4305 = vmatprep.subr.mxu0 0.0
      %4306 = vmatpush1.msra.mxu0 0.0
      %4307 = vmatprep.subr.mxu0 0.0
      %4308 = vmatpush1.msra.mxu0 0.0
      %4309 = vmatprep.subr.mxu0 0.0
      %4310 = vmatpush1.msra.mxu0 0.0
      %4311 = vmatprep.subr.mxu0 0.0
      %4312 = vmatpush1.msra.mxu0 0.0
      %4313 = vmatprep.subr.mxu0 0.0
      %4314 = vmatpush1.msra.mxu0 0.0
      %4315 = vmatprep.subr.mxu0 0.0
      %4316 = vmatpush1.msra.mxu0 0.0
      %4317 = vmatprep.subr.mxu0 0.0
      %4318 = vmatpush1.msra.mxu0 0.0
      %4319 = vmatprep.subr.mxu0 0.0
      %4320 = vmatpush1.msra.mxu0 0.0
      %4321 = vmatprep.subr.mxu0 0.0
      %4322 = vmatpush1.msra.mxu0 0.0
      %4323 = vmatprep.subr.mxu0 0.0
      %4324 = vmatpush1.msra.mxu0 0.0
      %4325 = vmatprep.subr.mxu0 0.0
      %4326 = vmatpush1.msra.mxu0 0.0
      %4327 = vmatprep.subr.mxu0 0.0
      %4328 = vmatpush1.msra.mxu0 0.0
      %4329 = vmatprep.subr.mxu0 0.0
      %4330 = vmatpush1.msra.mxu0 0.0
      %4331 = vmatprep.subr.mxu0 0.0
      %4332 = vmatpush1.msra.mxu0 0.0
      %4333 = vmatprep.subr.mxu0 0.0
      %4334 = vmatpush1.msra.mxu0 0.0
      %4335 = vmatprep.subr.mxu0 0.0
      %4336 = vmatpush1.msra.mxu0 0.0
      %4337 = vmatprep.subr.mxu0 0.0
      %4338 = vmatpush1.msra.mxu0 0.0
      %4339 = vmatprep.subr.mxu0 0.0
      %4340 = vmatpush1.msra.mxu0 0.0
      %4341 = vmatprep.subr.mxu0 0.0
      %4342 = vmatpush1.msra.mxu0 0.0
      %4343 = vmatprep.subr.mxu0 0.0
      %4344 = vmatpush1.msra.mxu0 0.0
      %4345 = vmatprep.subr.mxu0 0.0
      %4346 = vmatpush1.msra.mxu0 0.0
      %4347 = vmatprep.mubr.f32.mxu0 0.0
      %4348 = vmatmul.mubr.f32.gmra.mrb[0].mxu0 %v4260
      %v4349 = vpop.f32.mrb[0].mxu0
      %v4350 = vadd.f32 %v4258, %v4349
      %v4351 = vpop.f32.mrb[0].mxu0
      %4352 = vmatprep.mubr.f32.mxu0 0.0
      %4353 = vmatmul.mubr.f32.gmra.mrb[0].mxu0 %v4263
      %v4354 = vpop.f32.mrb[0].mxu0
      %v4355 = vadd.f32 %v4258, %v4354
      %v4356 = vpop.f32.mrb[0].mxu0
      %4357 = vmatprep.mubr.f32.mxu0 0.0
      %4358 = vmatmul.mubr.f32.gmra.mrb[0].mxu0 %v4266
      %v4359 = vpop.f32.mrb[0].mxu0
      %v4360 = vadd.f32 %v4258, %v4359
      %v4361 = vpop.f32.mrb[0].mxu0
      %4362 = vmatprep.mubr.f32.mxu0 0.0
      %4363 = vmatmul.mubr.f32.gmra.mrb[0].mxu0 %v4269
      %v4364 = vpop.f32.mrb[0].mxu0
      %v4365 = vadd.f32 %v4258, %v4364
      %v4366 = vpop.f32.mrb[0].mxu0
      %4367 = vmatprep.mubr.f32.mxu0 0.0
      %4368 = vmatmul.mubr.f32.gmra.mrb[0].mxu0 %v4272
      %v4369 = vpop.f32.mrb[0].mxu0
      %v4370 = vadd.f32 %v4258, %v4369
      %v4371 = vpop.f32.mrb[0].mxu0
      %4372 = vmatprep.mubr.f32.mxu0 0.0
      %4373 = vmatmul.mubr.f32.gmra.mrb[0].mxu0 %v4275
      %v4374 = vpop.f32.mrb[0].mxu0
      %v4375 = vadd.f32 %v4258, %v4374
      %v4376 = vpop.f32.mrb[0].mxu0
      %4377 = vmatprep.mubr.f32.mxu0 0.0
      %4378 = vmatmul.mubr.f32.gmra.mrb[0].mxu0 %v4278
      %v4379 = vpop.f32.mrb[0].mxu0
      %v4380 = vadd.f32 %v4258, %v4379
      %v4381 = vpop.f32.mrb[0].mxu0
      %4382 = vmatprep.mubr.f32.mxu0 0.0
      %4383 = vmatmul.mubr.f32.gmra.mrb[0].mxu0 %v4281
      %v4384 = vpop.f32.mrb[0].mxu0
      %v4385 = vadd.f32 %v4258, %v4384
      %v4386 = vpop.f32.mrb[0].mxu0
      %4387 = vdwg.mxu0
      %v4388 = vadd.f32 %v3694, %v4350
      %v4389 = vadd.f32 %v3695, %v4355
      %v4390 = vadd.f32 %v3696, %v4360
      %v4391 = vadd.f32 %v3697, %v4365
      %v4392 = vadd.f32 %v3698, %v4370
      %v4393 = vadd.f32 %v3699, %v4375
      %v4394 = vadd.f32 %v3700, %v4380
      %v4395 = vadd.f32 %v3701, %v4385
      %4396 = vst.msk [vmem:[%s170] sm:$0xff] %vm198, %v4388
      %4397 = vst.msk [vmem:[%s170 + $0x8] sm:$0xff] %vm198, %v4389
      %4398 = vst.msk [vmem:[%s170 + $0x10] sm:$0xff] %vm198, %v4390
      %4399 = vst.msk [vmem:[%s170 + $0x18] sm:$0xff] %vm198, %v4391
      %4400 = vst.msk [vmem:[%s170 + $0x20] sm:$0xff] %vm198, %v4392
      %4401 = vst.msk [vmem:[%s170 + $0x28] sm:$0xff] %vm198, %v4393
      %4402 = vst.msk [vmem:[%s170 + $0x30] sm:$0xff] %vm198, %v4394
      %4403 = vst.msk [vmem:[%s170 + $0x38] sm:$0xff] %vm198, %v4395
      %p4404 = scmp.lt.s32.totalorder %s14, 1
      %s4405 = scalar_select %p4404, %s14, 1
      %s4406 = smul.addr %s4405, 8
      %s4407 = smul.addr %s4406, 8
      %s4408 = scalar_lea.vmem %s3, %s4407
      // Predicated region
      $region33: #{separation_forward.1} parent=31 // pred_check
        %p4409 = pneg %p100
      $region34: #{separation_forward.1} parent=31 // pred_check_branch
        %4411 = sbr.rel (%p4409) target = $region36
      $region35: #{separation_forward.1} parent=31 // pred_region
        _
      $region36: #{separation_forward.1} parent=31 // pred_fallthru
        _
    $region32: #{separation_forward.1} parent=5 // pred_fallthru
      _
    %p4412 = scmp.le.s32.totalorder 2, %s9
    // Predicated region
    $region37: #{separation_forward.1} parent=5 // pred_check
      %p4413 = pneg %p4412
    $region38: #{separation_forward.1} parent=5 // pred_check_branch
      %4415 = sbr.rel (%p4413) target = $region40
    $region39: #{separation_forward.1} parent=5 // pred_region
      %s4416 = ssub.s32 %s9, 2
      // Predicated region
      $region41: #{separation_forward.1} parent=39 // pred_check
        %p4417 = pneg %p106
      $region42: #{separation_forward.1} parent=39 // pred_check_branch
        %4419 = sbr.rel (%p4417) target = $region44
      $region43: #{separation_forward.1} parent=39 // pred_region
        %p4420 = scmp.lt.s32.totalorder %s15, 1
        %s4421 = scalar_select %p4420, %s15, 1
        %s4422 = smul.addr %s4421, 8
        %s4423 = smul.addr %s4422, 8
        %s4424 = scalar_lea.vmem %s3, %s4423
      $region44: #{separation_forward.1} parent=39 // pred_fallthru
        _
    $region40: #{separation_forward.1} parent=5 // pred_fallthru
      _
  $region6: #{separation_forward.1} parent=0 // loop_footer
    %s13 = sadd.s32 1, %s9
  $region7: #{separation_forward.1} parent=0 // loop_footer_branch
    %8 = sbr.rel target = $region3
  $region8: #{separation_forward.1} parent=0 // loop_exit
    _

</llo_original>
